<compile_context>
chip_gen: v5e
topology: v5e:2x2
jax: 0.10.0
libtpu: 0.0.40
codegen_flags: <defaults>
</compile_context>

<pallas_src>
import functools

import jax
import jax.numpy as jnp
from jax.experimental import pallas as pl
from jax.experimental.pallas import tpu as pltpu

BN_EPS = 1e-5
COUT = 128
DILATIONS = (1, 2, 4, 8)


# ---------------------------------------------------------------------------
# In-kernel building blocks
# ---------------------------------------------------------------------------
def _conv_taps(h, w_ref, dilation):
    """Dilated k=3 'same' conv as ONE stacked MXU matmul + output-side shifts.

    h:     (Bt, T, Cin) f32 activations for this grid block.
    w_ref: (Cin, 3*COUT) bf16 stacked weight  [tap(t-d) | tap(t) | tap(t+d)].
    Returns (Bt, T, COUT) f32.
    """
    bt, t_len, cin = h.shape
    d = dilation
    w = w_ref[...]                                            # bf16
    z = jnp.dot(h.astype(jnp.bfloat16).reshape(bt * t_len, cin), w,
                preferred_element_type=jnp.float32)
    z = z.reshape(bt, t_len, 3 * COUT)

    # Time-align the three tap outputs with XLU rolls + edge masks (the circular
    # wrap-around positions are masked to zero, reproducing conv zero padding).
    t_idx = jax.lax.broadcasted_iota(jnp.int32, (1, t_len, 1), 1)
    left = pltpu.roll(z[:, :, 0:COUT], shift=d % t_len, axis=1)        # -> z0[t-d]
    left = jnp.where(t_idx >= d, left, 0.0)
    mid = z[:, :, COUT:2 * COUT]                                        # z1[t]
    right = pltpu.roll(z[:, :, 2 * COUT:3 * COUT],
                       shift=(-d) % t_len, axis=1)                      # -> z2[t+d]
    right = jnp.where(t_idx < t_len - d, right, 0.0)
    return left + mid + right


def _write_partial_stats(y, stats_ref, real_b, block_b):
    """Write this block's per-channel sum / sum-of-squares (padded rows masked).

    y: (Bt, T, COUT) f32.  stats_ref: (1, 2, COUT) f32 partial-stats block.
    """
    bt, t_len, c = y.shape
    start = pl.program_id(0) * block_b
    row = jax.lax.broadcasted_iota(jnp.int32, (bt, 1, 1), 0)
    ym = jnp.where(row + start < real_b, y, 0.0)
    y2 = ym.reshape(bt * t_len, c)
    # TODO(synk): Chan-style per-block (count, mean, M2) combine would be more
    #             robust than sum/sumsq for very large B*T.
    stats_ref[:, 0:1, :] = jnp.sum(y2, axis=0, keepdims=True).reshape(1, 1, c)
    stats_ref[:, 1:2, :] = jnp.sum(y2 * y2, axis=0, keepdims=True).reshape(1, 1, c)


def _bn_scale_shift(stats_ref, gamma_ref, beta_ref, count):
    """Fold training-mode BatchNorm into a single per-channel affine."""
    s = stats_ref[...]                                  # (2, COUT) = [sum; sumsq]
    inv_n = 1.0 / count
    mu = s[0:1, :] * inv_n
    var = jnp.maximum(s[1:2, :] * inv_n - mu * mu, 0.0)   # clamp vs f32 cancellation
    scale = gamma_ref[...] * jax.lax.rsqrt(var + BN_EPS)
    shift = beta_ref[...] - mu * scale
    return scale, shift


# ---------------------------------------------------------------------------
# Kernels
# ---------------------------------------------------------------------------
def _first_conv_kernel(x_ref, w_ref, y_ref, stats_ref, *, dilation, real_b, block_b):
    """Layer 1: conv on the raw input + this block's partial channel stats."""
    y = _conv_taps(x_ref[...].astype(jnp.float32), w_ref, dilation)
    y_ref[...] = y.astype(y_ref.dtype)                       # bf16 store
    _write_partial_stats(y, stats_ref, real_b, block_b)


def _mid_conv_kernel(yprev_ref, stats_in_ref, gamma_ref, beta_ref, w_ref,
                     y_ref, stats_ref, *, dilation, count, real_b, block_b):
    """Layers 2-4: fused BN(prev layer) + ReLU, then this layer's conv + stats."""
    scale, shift = _bn_scale_shift(stats_in_ref, gamma_ref, beta_ref, count)
    h = jnp.maximum(yprev_ref[...].astype(jnp.float32) * scale[None] + shift[None],
                    0.0)
    y = _conv_taps(h, w_ref, dilation)
    y_ref[...] = y.astype(y_ref.dtype)                       # bf16 store
    _write_partial_stats(y, stats_ref, real_b, block_b)


def _bn_relu_kernel(y_ref, stats_ref, gamma_ref, beta_ref, o_ref, *, count):
    """Final BN + ReLU of layer 4 (f32 output)."""
    scale, shift = _bn_scale_shift(stats_ref, gamma_ref, beta_ref, count)
    o_ref[...] = jnp.maximum(
        y_ref[...].astype(jnp.float32) * scale[None] + shift[None], 0.0)


# ---------------------------------------------------------------------------
# Tiling / VMEM budgeting
# ---------------------------------------------------------------------------
def _vmem_budget():
    """Per-generation block budget and compiler vmem limit."""
    try:
        cap = pltpu.get_tpu_info().vmem_capacity_bytes
    except Exception:  # pragma: no cover - conservative fallback
        cap = 64 << 20
    budget = max(8 << 20, cap // 3)          # ~42 MiB (v5e/v6e), ~21 MiB (v7x)
    vmem_limit = max(32 << 20, (3 * cap) // 4)   # 96 MiB (v5e/v6e), 48 MiB (v7x)
    return budget, vmem_limit


def _pick_block_b(batch, t_len, feat, budget_bytes):
    """Largest batch block whose per-grid-step working set fits the budget.

    Per (row, t, channel) bytes (whole-T blocks):
      double-buffered:  y_prev in (bf16) + y out (bf16)            -> 2*(2+2) = 8
      single-buffered temps: h f32 + h bf16 + z(3C) f32
                             + 2 rolled f32 copies + y f32         -> 4+2+12+8+4 = 30
    """
    per_row = t_len * COUT * 38 + t_len * feat * 4 * 2   # + layer-1 f32 input block
    fit = max(1, budget_bytes // per_row)
    fit = min(fit, batch)
    # TODO(synk): if a single batch row exceeds the budget (very long T), tile T
    #             with a <=8-step dilation halo instead of relying on vmem_limit.
    nblk = pl.cdiv(batch, fit)
    if batch >= 2:
        nblk = max(nblk, 2)   # >=2 blocks so the "parallel" axis can use both v7x TCs
    return pl.cdiv(batch, nblk)


# ---------------------------------------------------------------------------
# Wrapper
# ---------------------------------------------------------------------------
def tcn_part(batch_data, params, block_b=None):
    """TCN_Part forward.  batch_data: (B, T, F) f32  ->  (B, T, 128) f32."""
    b, t_len, feat = batch_data.shape
    count = b * t_len                         # real elements per channel for BN
    budget, vmem_limit = _vmem_budget()
    if block_b is None:
        block_b = _pick_block_b(b, t_len, feat, budget)
    block_b = max(1, min(int(block_b), b))
    nblk = pl.cdiv(b, block_b)
    b_pad = nblk * block_b

    x = batch_data
    if b_pad != b:
        x = jnp.pad(x, ((0, b_pad - b), (0, 0), (0, 0)))   # zero rows, masked in stats

    act_spec = pl.BlockSpec((block_b, t_len, COUT), lambda i: (i, 0, 0))
    pstats_spec = pl.BlockSpec((1, 2, COUT), lambda i: (i, 0, 0))
    stats_spec = pl.BlockSpec((2, COUT), lambda i: (0, 0))
    vec_spec = pl.BlockSpec((1, COUT), lambda i: (0, 0))
    w_spec = pl.BlockSpec((COUT, 3 * COUT), lambda i: (0, 0))

    act_shape = jax.ShapeDtypeStruct((b_pad, t_len, COUT), jnp.bfloat16)
    pstats_shape = jax.ShapeDtypeStruct((nblk, 2, COUT), jnp.float32)

    cparams = pltpu.CompilerParams(dimension_semantics=("parallel",),
                                   vmem_limit_bytes=vmem_limit)

    # --- Layer 1: raw input (Cin = feature_number), no preceding BN/ReLU ---------
    y, pstats = pl.pallas_call(
        functools.partial(_first_conv_kernel, dilation=DILATIONS[0],
                          real_b=b, block_b=block_b),
        grid=(nblk,),
        in_specs=[pl.BlockSpec((block_b, t_len, feat), lambda i: (i, 0, 0)),
                  pl.BlockSpec((feat, 3 * COUT), lambda i: (0, 0))],
        out_specs=[act_spec, pstats_spec],
        out_shape=[act_shape, pstats_shape],
        compiler_params=cparams,
    )(x, params[0]["w_st"])
    stats = jnp.sum(pstats, axis=0)                         # (2, COUT) f32, tiny

    # --- Layers 2..4: BN+ReLU of layer i-1 fused with the conv of layer i --------
    for li in range(1, 4):
        y, pstats = pl.pallas_call(
            functools.partial(_mid_conv_kernel, dilation=DILATIONS[li],
                              count=count, real_b=b, block_b=block_b),
            grid=(nblk,),
            in_specs=[act_spec, stats_spec, vec_spec, vec_spec, w_spec],
            out_specs=[act_spec, pstats_spec],
            out_shape=[act_shape, pstats_shape],
            input_output_aliases={0: 0},     # reuse the (B,T,128) bf16 HBM buffer
            compiler_params=cparams,
        )(y, stats, params[li - 1]["gamma"], params[li - 1]["beta"],
          params[li]["w_st"])
        stats = jnp.sum(pstats, axis=0)

    # --- Final BN + ReLU of layer 4 ----------------------------------------------
    out = pl.pallas_call(
        functools.partial(_bn_relu_kernel, count=count),
        grid=(nblk,),
        in_specs=[act_spec, stats_spec, vec_spec, vec_spec],
        out_specs=pl.BlockSpec((block_b, t_len, COUT), lambda i: (i, 0, 0)),
        out_shape=jax.ShapeDtypeStruct((b_pad, t_len, COUT), jnp.float32),
        compiler_params=cparams,
    )(y, stats, params[3]["gamma"], params[3]["beta"])
    return out[:b] if b_pad != b else out


# ---------------------------------------------------------------------------
# Parameter init (torch-style) and a pure-JAX f32 reference for validation.
# ---------------------------------------------------------------------------
def init_tcn_part_params(key, feature_number):
    """Returns (raw, packed):
      raw:    per-layer dicts w (COUT, Cin, 3), b (COUT,), gamma, beta (COUT,)
              — used only by the reference; the conv bias is folded out in kernels.
      packed: per-layer dicts w_st (Cin, 3*COUT) bf16, gamma/beta (1, COUT) f32.
    """
    raw, packed = [], []
    cin = feature_number
    for k in jax.random.split(key, 4):
        kw, kb, kg, kbe = jax.random.split(k, 4)
        bound = 1.0 / (cin * 3) ** 0.5
        w = jax.random.uniform(kw, (COUT, cin, 3), jnp.float32, -bound, bound)
        bias = jax.random.uniform(kb, (COUT,), jnp.float32, -bound, bound)
        # BN affine randomized (torch inits to ones/zeros) so the check exercises it.
        gamma = 1.0 + 0.1 * jax.random.normal(kg, (COUT,), jnp.float32)
        beta = 0.1 * jax.random.normal(kbe, (COUT,), jnp.float32)
        raw.append(dict(w=w, b=bias, gamma=gamma, beta=beta))
        w_st = jnp.concatenate([w[:, :, 0].T, w[:, :, 1].T, w[:, :, 2].T], axis=1)
        packed.append(dict(w_st=w_st.astype(jnp.bfloat16),
                           gamma=gamma.reshape(1, COUT),
                           beta=beta.reshape(1, COUT)))
        cin = COUT
    return raw, packed


def tcn_part_reference(batch_data, raw_params):
    """Pure-JAX f32 reference of the PyTorch forward (training-mode BN, with bias)."""
    b, t_len, _ = batch_data.shape
    hp = jax.lax.Precision.HIGHEST
    h = batch_data
    for p, d in zip(raw_params, DILATIONS):
        w, bias = p["w"], p["b"]
        cin = h.shape[-1]
        pad = jnp.zeros((b, d, cin), h.dtype)
        h_l = jnp.concatenate([pad, h], axis=1)[:, :t_len]   # x[t-d]
        h_r = jnp.concatenate([h, pad], axis=1)[:, d:]       # x[t+d]
        y = (jnp.einsum("btc,oc->bto", h_l, w[:, :, 0], precision=hp)
             + jnp.einsum("btc,oc->bto", h, w[:, :, 1], precision=hp)
             + jnp.einsum("btc,oc->bto", h_r, w[:, :, 2], precision=hp) + bias)
        mu = jnp.mean(y, axis=(0, 1))
        var = jnp.mean((y - mu) ** 2, axis=(0, 1))
        h = jnp.maximum((y - mu) * jax.lax.rsqrt(var + BN_EPS) * p["gamma"]
                        + p["beta"], 0.0)
    return h


if __name__ == "__main__":
    key = jax.random.PRNGKey(0)
    kp, kd = jax.random.split(key)

    B, T, F = 4, 16, 8
    raw_params, packed_params = init_tcn_part_params(kp, feature_number=F)
    batch_data = jax.random.normal(kd, (B, T, F), jnp.float32)

    ref = tcn_part_reference(batch_data, raw_params)

    # Auto block picking (>=2 grid blocks so the "parallel" axis is exercised).
    out_auto = jax.block_until_ready(jax.jit(tcn_part)(batch_data, packed_params))
    # Explicit non-divisor block size: exercises batch padding + stats masking.
    out_rag = jax.block_until_ready(
        jax.jit(functools.partial(tcn_part, block_b=3))(batch_data, packed_params))

    assert out_auto.shape == (B, T, COUT)
    assert out_rag.shape == (B, T, COUT)
    err_auto = float(jnp.max(jnp.abs(out_auto - ref)))
    err_rag = float(jnp.max(jnp.abs(out_rag - ref)))
    assert err_auto < 0.15, f"auto-block mismatch vs reference: {err_auto}"
    assert err_rag < 0.15, f"ragged-block mismatch vs reference: {err_rag}"
    print("KERNEL_OK")
</pallas_src>

<mosaic_0001>
module attributes {stable_mosaic.version = 11 : i64} {
  func.func @_mid_conv_kernel(%arg0: i32, %arg1: memref<2x16x128xbf16, #tpu.memory_space<vmem>>, %arg2: memref<2x128xf32, #tpu.memory_space<vmem>>, %arg3: memref<1x128xf32, #tpu.memory_space<vmem>>, %arg4: memref<1x128xf32, #tpu.memory_space<vmem>>, %arg5: memref<128x384xbf16, #tpu.memory_space<vmem>>, %arg6: memref<2x16x128xbf16, #tpu.memory_space<vmem>>, %arg7: memref<1x2x128xf32, #tpu.memory_space<vmem>>) attributes {dimension_semantics = [#tpu.dimension_semantics<parallel>], iteration_bounds = array<i64: 2>, scalar_prefetch = 0 : i64, scratch_operands = 0 : i64, tpu.core_type = #tpu.core_type<tc>, window_params = [{transform_indices = @transform_0, window_bounds = array<i64: 2, 16, 128>}, {pipeline_mode = #tpu.pipeline_mode<synchronous>, transform_indices = @transform_1, window_bounds = array<i64: 2, 128>}, {pipeline_mode = #tpu.pipeline_mode<synchronous>, transform_indices = @transform_2, window_bounds = array<i64: 1, 128>}, {pipeline_mode = #tpu.pipeline_mode<synchronous>, transform_indices = @transform_3, window_bounds = array<i64: 1, 128>}, {pipeline_mode = #tpu.pipeline_mode<synchronous>, transform_indices = @transform_4, window_bounds = array<i64: 128, 384>}, {transform_indices = @transform_5, window_bounds = array<i64: 2, 16, 128>}, {transform_indices = @transform_6, window_bounds = array<i64: 1, 2, 128>}]} {
    %c0 = arith.constant 0 : index
    %c0_0 = arith.constant 0 : index
    %0 = vector.load %arg2[%c0, %c0_0] : memref<2x128xf32, #tpu.memory_space<vmem>>, vector<2x128xf32>
    %1 = vector.extract_strided_slice %0 {offsets = [0, 0], sizes = [1, 128], strides = [1, 1]} : vector<2x128xf32> to vector<1x128xf32>
    %cst = arith.constant 1.562500e-02 : f32
    %2 = vector.broadcast %cst : f32 to vector<1x128xf32>
    %3 = arith.mulf %1, %2 : vector<1x128xf32>
    %4 = vector.extract_strided_slice %0 {offsets = [1, 0], sizes = [1, 128], strides = [1, 1]} : vector<2x128xf32> to vector<1x128xf32>
    %cst_1 = arith.constant 1.562500e-02 : f32
    %5 = vector.broadcast %cst_1 : f32 to vector<1x128xf32>
    %6 = arith.mulf %4, %5 : vector<1x128xf32>
    %7 = arith.mulf %3, %3 : vector<1x128xf32>
    %8 = arith.subf %6, %7 : vector<1x128xf32>
    %cst_2 = arith.constant 0.000000e+00 : f32
    %9 = vector.broadcast %cst_2 : f32 to vector<1x128xf32>
    %10 = arith.maximumf %8, %9 : vector<1x128xf32>
    %c0_3 = arith.constant 0 : index
    %c0_4 = arith.constant 0 : index
    %11 = vector.load %arg3[%c0_3, %c0_4] : memref<1x128xf32, #tpu.memory_space<vmem>>, vector<1x128xf32>
    %cst_5 = arith.constant 9.99999974E-6 : f32
    %12 = vector.broadcast %cst_5 : f32 to vector<1x128xf32>
    %13 = arith.addf %10, %12 : vector<1x128xf32>
    %14 = math.rsqrt %13 : vector<1x128xf32>
    %15 = arith.mulf %11, %14 : vector<1x128xf32>
    %c0_6 = arith.constant 0 : index
    %c0_7 = arith.constant 0 : index
    %16 = vector.load %arg4[%c0_6, %c0_7] : memref<1x128xf32, #tpu.memory_space<vmem>>, vector<1x128xf32>
    %17 = arith.mulf %3, %15 : vector<1x128xf32>
    %18 = arith.subf %16, %17 : vector<1x128xf32>
    %c0_8 = arith.constant 0 : index
    %c0_9 = arith.constant 0 : index
    %c0_10 = arith.constant 0 : index
    %19 = vector.load %arg1[%c0_8, %c0_9, %c0_10] : memref<2x16x128xbf16, #tpu.memory_space<vmem>>, vector<2x16x128xbf16>
    %20 = arith.extf %19 : vector<2x16x128xbf16> to vector<2x16x128xf32>
    %21 = vector.shape_cast %15 : vector<1x128xf32> to vector<1x1x128xf32>
    %22 = vector.broadcast %21 : vector<1x1x128xf32> to vector<2x16x128xf32>
    %23 = arith.mulf %20, %22 : vector<2x16x128xf32>
    %24 = vector.shape_cast %18 : vector<1x128xf32> to vector<1x1x128xf32>
    %25 = vector.broadcast %24 : vector<1x1x128xf32> to vector<2x16x128xf32>
    %26 = arith.addf %23, %25 : vector<2x16x128xf32>
    %cst_11 = arith.constant 0.000000e+00 : f32
    %27 = vector.broadcast %cst_11 : f32 to vector<2x16x128xf32>
    %28 = arith.maximumf %26, %27 : vector<2x16x128xf32>
    %c0_12 = arith.constant 0 : index
    %c0_13 = arith.constant 0 : index
    %29 = vector.load %arg5[%c0_12, %c0_13] : memref<128x384xbf16, #tpu.memory_space<vmem>>, vector<128x384xbf16>
    %30 = arith.truncf %28 : vector<2x16x128xf32> to vector<2x16x128xbf16>
    %31 = vector.shape_cast %30 : vector<2x16x128xbf16> to vector<32x128xbf16>
    %cst_14 = arith.constant dense<0.000000e+00> : vector<32x384xf32>
    %32 = tpu.matmul %31, %29, %cst_14 {dimension_numbers = #tpu.dot_dimension_numbers<[1], [0], [0], [1], [0, 0, 1, 1], [], []>} : vector<32x128xbf16>, vector<128x384xbf16>, vector<32x384xf32> -> vector<32x384xf32>
    %33 = vector.shape_cast %32 : vector<32x384xf32> to vector<2x16x384xf32>
    %34 = tpu.iota {dimensions = array<i32: 1>} : vector<1x16x1xi32>
    %35 = vector.extract_strided_slice %33 {offsets = [0, 0, 0], sizes = [2, 16, 128], strides = [1, 1, 1]} : vector<2x16x384xf32> to vector<2x16x128xf32>
    %c2_i32 = arith.constant 2 : i32
    %36 = tpu.dynamic_rotate %35 by %c2_i32 dim 1 : vector<2x16x128xf32>, i32 -> vector<2x16x128xf32>
    %c2_i32_15 = arith.constant 2 : i32
    %37 = vector.broadcast %c2_i32_15 : i32 to vector<1x16x1xi32>
    %38 = arith.cmpi sge, %34, %37 : vector<1x16x1xi32>
    %cst_16 = arith.constant 0.000000e+00 : f32
    %39 = vector.shape_cast %38 : vector<1x16x1xi1> to vector<1x16x1xi1>
    %40 = vector.broadcast %39 : vector<1x16x1xi1> to vector<2x16x128xi1>
    %41 = vector.broadcast %cst_16 : f32 to vector<2x16x128xf32>
    %42 = arith.select %40, %36, %41 : vector<2x16x128xi1>, vector<2x16x128xf32>
    %43 = vector.extract_strided_slice %33 {offsets = [0, 0, 128], sizes = [2, 16, 128], strides = [1, 1, 1]} : vector<2x16x384xf32> to vector<2x16x128xf32>
    %44 = vector.extract_strided_slice %33 {offsets = [0, 0, 256], sizes = [2, 16, 128], strides = [1, 1, 1]} : vector<2x16x384xf32> to vector<2x16x128xf32>
    %c14_i32 = arith.constant 14 : i32
    %45 = tpu.dynamic_rotate %44 by %c14_i32 dim 1 : vector<2x16x128xf32>, i32 -> vector<2x16x128xf32>
    %c14_i32_17 = arith.constant 14 : i32
    %46 = vector.broadcast %c14_i32_17 : i32 to vector<1x16x1xi32>
    %47 = arith.cmpi slt, %34, %46 : vector<1x16x1xi32>
    %cst_18 = arith.constant 0.000000e+00 : f32
    %48 = vector.shape_cast %47 : vector<1x16x1xi1> to vector<1x16x1xi1>
    %49 = vector.broadcast %48 : vector<1x16x1xi1> to vector<2x16x128xi1>
    %50 = vector.broadcast %cst_18 : f32 to vector<2x16x128xf32>
    %51 = arith.select %49, %45, %50 : vector<2x16x128xi1>, vector<2x16x128xf32>
    %52 = arith.addf %42, %43 : vector<2x16x128xf32>
    %53 = arith.addf %52, %51 : vector<2x16x128xf32>
    %54 = arith.truncf %53 : vector<2x16x128xf32> to vector<2x16x128xbf16>
    %c0_19 = arith.constant 0 : index
    %c0_20 = arith.constant 0 : index
    %c0_21 = arith.constant 0 : index
    %55 = vector.load %arg6[%c0_19, %c0_20, %c0_21] : memref<2x16x128xbf16, #tpu.memory_space<vmem>>, vector<2x16x128xbf16>
    tpu.vector_store %arg6[%c0_19, %c0_20, %c0_21], %54 {strides = array<i32>} : memref<2x16x128xbf16, #tpu.memory_space<vmem>>, vector<2x16x128xbf16>,
    %c2_i32_22 = arith.constant 2 : i32
    %56 = arith.muli %arg0, %c2_i32_22 : i32
    %57 = tpu.iota {dimensions = array<i32: 0>} : vector<2x1x1xi32>
    %58 = vector.broadcast %56 : i32 to vector<2x1x1xi32>
    %59 = arith.addi %57, %58 : vector<2x1x1xi32>
    %c4_i32 = arith.constant 4 : i32
    %60 = vector.broadcast %c4_i32 : i32 to vector<2x1x1xi32>
    %61 = arith.cmpi slt, %59, %60 : vector<2x1x1xi32>
    %cst_23 = arith.constant 0.000000e+00 : f32
    %62 = vector.shape_cast %61 : vector<2x1x1xi1> to vector<2x1x1xi1>
    %63 = vector.broadcast %62 : vector<2x1x1xi1> to vector<2x16x128xi1>
    %64 = vector.broadcast %cst_23 : f32 to vector<2x16x128xf32>
    %65 = arith.select %63, %53, %64 : vector<2x16x128xi1>, vector<2x16x128xf32>
    %66 = vector.shape_cast %65 : vector<2x16x128xf32> to vector<32x128xf32>
    %cst_24 = arith.constant dense<0.000000e+00> : vector<128xf32>
    %67 = vector.multi_reduction <add>, %66, %cst_24 [0] : vector<32x128xf32> to vector<128xf32>
    %68 = vector.shape_cast %67 : vector<128xf32> to vector<1x128xf32>
    %69 = vector.shape_cast %68 : vector<1x128xf32> to vector<1x1x128xf32>
    %c0_25 = arith.constant 0 : index
    %c0_26 = arith.constant 0 : index
    %c0_27 = arith.constant 0 : index
    %70 = vector.load %arg7[%c0_25, %c0_26, %c0_27] : memref<1x2x128xf32, #tpu.memory_space<vmem>>, vector<1x1x128xf32>
    tpu.vector_store %arg7[%c0_25, %c0_26, %c0_27], %69 {strides = array<i32>} : memref<1x2x128xf32, #tpu.memory_space<vmem>>, vector<1x1x128xf32>,
    %71 = arith.mulf %66, %66 : vector<32x128xf32>
    %cst_28 = arith.constant dense<0.000000e+00> : vector<128xf32>
    %72 = vector.multi_reduction <add>, %71, %cst_28 [0] : vector<32x128xf32> to vector<128xf32>
    %73 = vector.shape_cast %72 : vector<128xf32> to vector<1x128xf32>
    %74 = vector.shape_cast %73 : vector<1x128xf32> to vector<1x1x128xf32>
    %c0_29 = arith.constant 0 : index
    %c1 = arith.constant 1 : index
    %c0_30 = arith.constant 0 : index
    %75 = vector.load %arg7[%c0_29, %c1, %c0_30] : memref<1x2x128xf32, #tpu.memory_space<vmem>>, vector<1x1x128xf32>
    tpu.vector_store %arg7[%c0_29, %c1, %c0_30], %74 {strides = array<i32>} : memref<1x2x128xf32, #tpu.memory_space<vmem>>, vector<1x1x128xf32>,
    return
  }
  func.func @transform_0(%arg0: i32) -> (i32, i32, i32) {
    %c0_i32 = arith.constant 0 : i32
    %c0_i32_0 = arith.constant 0 : i32
    %c0_i32_1 = arith.constant 0 : i32
    return %arg0, %c0_i32, %c0_i32_0 : i32, i32, i32
  }
  func.func @transform_1(%arg0: i32) -> (i32, i32) {
    %c0_i32 = arith.constant 0 : i32
    %c0_i32_0 = arith.constant 0 : i32
    %c0_i32_1 = arith.constant 0 : i32
    return %c0_i32, %c0_i32_0 : i32, i32
  }
  func.func @transform_2(%arg0: i32) -> (i32, i32) {
    %c0_i32 = arith.constant 0 : i32
    %c0_i32_0 = arith.constant 0 : i32
    %c0_i32_1 = arith.constant 0 : i32
    return %c0_i32, %c0_i32_0 : i32, i32
  }
  func.func @transform_3(%arg0: i32) -> (i32, i32) {
    %c0_i32 = arith.constant 0 : i32
    %c0_i32_0 = arith.constant 0 : i32
    %c0_i32_1 = arith.constant 0 : i32
    return %c0_i32, %c0_i32_0 : i32, i32
  }
  func.func @transform_4(%arg0: i32) -> (i32, i32) {
    %c0_i32 = arith.constant 0 : i32
    %c0_i32_0 = arith.constant 0 : i32
    %c0_i32_1 = arith.constant 0 : i32
    return %c0_i32, %c0_i32_0 : i32, i32
  }
  func.func @transform_5(%arg0: i32) -> (i32, i32, i32) {
    %c0_i32 = arith.constant 0 : i32
    %c0_i32_0 = arith.constant 0 : i32
    %c0_i32_1 = arith.constant 0 : i32
    return %arg0, %c0_i32, %c0_i32_0 : i32, i32, i32
  }
  func.func @transform_6(%arg0: i32) -> (i32, i32, i32) {
    %c0_i32 = arith.constant 0 : i32
    %c0_i32_0 = arith.constant 0 : i32
    %c0_i32_1 = arith.constant 0 : i32
    return %arg0, %c0_i32, %c0_i32_0 : i32, i32, i32
  }
}

module attributes {stable_mosaic.version = 11 : i64} {
  func.func @_first_conv_kernel(%arg0: i32, %arg1: memref<2x16x8xf32, #tpu.memory_space<vmem>>, %arg2: memref<8x384xbf16, #tpu.memory_space<vmem>>, %arg3: memref<2x16x128xbf16, #tpu.memory_space<vmem>>, %arg4: memref<1x2x128xf32, #tpu.memory_space<vmem>>) attributes {dimension_semantics = [#tpu.dimension_semantics<parallel>], iteration_bounds = array<i64: 2>, scalar_prefetch = 0 : i64, scratch_operands = 0 : i64, tpu.core_type = #tpu.core_type<tc>, window_params = [{transform_indices = @transform_0, window_bounds = array<i64: 2, 16, 8>}, {pipeline_mode = #tpu.pipeline_mode<synchronous>, transform_indices = @transform_1, window_bounds = array<i64: 8, 384>}, {transform_indices = @transform_2, window_bounds = array<i64: 2, 16, 128>}, {transform_indices = @transform_3, window_bounds = array<i64: 1, 2, 128>}]} {
    %c0 = arith.constant 0 : index
    %c0_0 = arith.constant 0 : index
    %c0_1 = arith.constant 0 : index
    %0 = vector.load %arg1[%c0, %c0_0, %c0_1] : memref<2x16x8xf32, #tpu.memory_space<vmem>>, vector<2x16x8xf32>
    %c0_2 = arith.constant 0 : index
    %c0_3 = arith.constant 0 : index
    %1 = vector.load %arg2[%c0_2, %c0_3] : memref<8x384xbf16, #tpu.memory_space<vmem>>, vector<8x384xbf16>
    %2 = arith.truncf %0 : vector<2x16x8xf32> to vector<2x16x8xbf16>
    %3 = vector.shape_cast %2 : vector<2x16x8xbf16> to vector<32x8xbf16>
    %cst = arith.constant dense<0.000000e+00> : vector<32x384xf32>
    %4 = tpu.matmul %3, %1, %cst {dimension_numbers = #tpu.dot_dimension_numbers<[1], [0], [0], [1], [0, 0, 1, 1], [], []>} : vector<32x8xbf16>, vector<8x384xbf16>, vector<32x384xf32> -> vector<32x384xf32>
    %5 = vector.shape_cast %4 : vector<32x384xf32> to vector<2x16x384xf32>
    %6 = tpu.iota {dimensions = array<i32: 1>} : vector<1x16x1xi32>
    %7 = vector.extract_strided_slice %5 {offsets = [0, 0, 0], sizes = [2, 16, 128], strides = [1, 1, 1]} : vector<2x16x384xf32> to vector<2x16x128xf32>
    %c1_i32 = arith.constant 1 : i32
    %8 = tpu.dynamic_rotate %7 by %c1_i32 dim 1 : vector<2x16x128xf32>, i32 -> vector<2x16x128xf32>
    %c1_i32_4 = arith.constant 1 : i32
    %9 = vector.broadcast %c1_i32_4 : i32 to vector<1x16x1xi32>
    %10 = arith.cmpi sge, %6, %9 : vector<1x16x1xi32>
    %cst_5 = arith.constant 0.000000e+00 : f32
    %11 = vector.shape_cast %10 : vector<1x16x1xi1> to vector<1x16x1xi1>
    %12 = vector.broadcast %11 : vector<1x16x1xi1> to vector<2x16x128xi1>
    %13 = vector.broadcast %cst_5 : f32 to vector<2x16x128xf32>
    %14 = arith.select %12, %8, %13 : vector<2x16x128xi1>, vector<2x16x128xf32>
    %15 = vector.extract_strided_slice %5 {offsets = [0, 0, 128], sizes = [2, 16, 128], strides = [1, 1, 1]} : vector<2x16x384xf32> to vector<2x16x128xf32>
    %16 = vector.extract_strided_slice %5 {offsets = [0, 0, 256], sizes = [2, 16, 128], strides = [1, 1, 1]} : vector<2x16x384xf32> to vector<2x16x128xf32>
    %c15_i32 = arith.constant 15 : i32
    %17 = tpu.dynamic_rotate %16 by %c15_i32 dim 1 : vector<2x16x128xf32>, i32 -> vector<2x16x128xf32>
    %c15_i32_6 = arith.constant 15 : i32
    %18 = vector.broadcast %c15_i32_6 : i32 to vector<1x16x1xi32>
    %19 = arith.cmpi slt, %6, %18 : vector<1x16x1xi32>
    %cst_7 = arith.constant 0.000000e+00 : f32
    %20 = vector.shape_cast %19 : vector<1x16x1xi1> to vector<1x16x1xi1>
    %21 = vector.broadcast %20 : vector<1x16x1xi1> to vector<2x16x128xi1>
    %22 = vector.broadcast %cst_7 : f32 to vector<2x16x128xf32>
    %23 = arith.select %21, %17, %22 : vector<2x16x128xi1>, vector<2x16x128xf32>
    %24 = arith.addf %14, %15 : vector<2x16x128xf32>
    %25 = arith.addf %24, %23 : vector<2x16x128xf32>
    %26 = arith.truncf %25 : vector<2x16x128xf32> to vector<2x16x128xbf16>
    %c0_8 = arith.constant 0 : index
    %c0_9 = arith.constant 0 : index
    %c0_10 = arith.constant 0 : index
    %27 = vector.load %arg3[%c0_8, %c0_9, %c0_10] : memref<2x16x128xbf16, #tpu.memory_space<vmem>>, vector<2x16x128xbf16>
    tpu.vector_store %arg3[%c0_8, %c0_9, %c0_10], %26 {strides = array<i32>} : memref<2x16x128xbf16, #tpu.memory_space<vmem>>, vector<2x16x128xbf16>,
    %c2_i32 = arith.constant 2 : i32
    %28 = arith.muli %arg0, %c2_i32 : i32
    %29 = tpu.iota {dimensions = array<i32: 0>} : vector<2x1x1xi32>
    %30 = vector.broadcast %28 : i32 to vector<2x1x1xi32>
    %31 = arith.addi %29, %30 : vector<2x1x1xi32>
    %c4_i32 = arith.constant 4 : i32
    %32 = vector.broadcast %c4_i32 : i32 to vector<2x1x1xi32>
    %33 = arith.cmpi slt, %31, %32 : vector<2x1x1xi32>
    %cst_11 = arith.constant 0.000000e+00 : f32
    %34 = vector.shape_cast %33 : vector<2x1x1xi1> to vector<2x1x1xi1>
    %35 = vector.broadcast %34 : vector<2x1x1xi1> to vector<2x16x128xi1>
    %36 = vector.broadcast %cst_11 : f32 to vector<2x16x128xf32>
    %37 = arith.select %35, %25, %36 : vector<2x16x128xi1>, vector<2x16x128xf32>
    %38 = vector.shape_cast %37 : vector<2x16x128xf32> to vector<32x128xf32>
    %cst_12 = arith.constant dense<0.000000e+00> : vector<128xf32>
    %39 = vector.multi_reduction <add>, %38, %cst_12 [0] : vector<32x128xf32> to vector<128xf32>
    %40 = vector.shape_cast %39 : vector<128xf32> to vector<1x128xf32>
    %41 = vector.shape_cast %40 : vector<1x128xf32> to vector<1x1x128xf32>
    %c0_13 = arith.constant 0 : index
    %c0_14 = arith.constant 0 : index
    %c0_15 = arith.constant 0 : index
    %42 = vector.load %arg4[%c0_13, %c0_14, %c0_15] : memref<1x2x128xf32, #tpu.memory_space<vmem>>, vector<1x1x128xf32>
    tpu.vector_store %arg4[%c0_13, %c0_14, %c0_15], %41 {strides = array<i32>} : memref<1x2x128xf32, #tpu.memory_space<vmem>>, vector<1x1x128xf32>,
    %43 = arith.mulf %38, %38 : vector<32x128xf32>
    %cst_16 = arith.constant dense<0.000000e+00> : vector<128xf32>
    %44 = vector.multi_reduction <add>, %43, %cst_16 [0] : vector<32x128xf32> to vector<128xf32>
    %45 = vector.shape_cast %44 : vector<128xf32> to vector<1x128xf32>
    %46 = vector.shape_cast %45 : vector<1x128xf32> to vector<1x1x128xf32>
    %c0_17 = arith.constant 0 : index
    %c1 = arith.constant 1 : index
    %c0_18 = arith.constant 0 : index
    %47 = vector.load %arg4[%c0_17, %c1, %c0_18] : memref<1x2x128xf32, #tpu.memory_space<vmem>>, vector<1x1x128xf32>
    tpu.vector_store %arg4[%c0_17, %c1, %c0_18], %46 {strides = array<i32>} : memref<1x2x128xf32, #tpu.memory_space<vmem>>, vector<1x1x128xf32>,
    return
  }
  func.func @transform_0(%arg0: i32) -> (i32, i32, i32) {
    %c0_i32 = arith.constant 0 : i32
    %c0_i32_0 = arith.constant 0 : i32
    %c0_i32_1 = arith.constant 0 : i32
    return %arg0, %c0_i32, %c0_i32_0 : i32, i32, i32
  }
  func.func @transform_1(%arg0: i32) -> (i32, i32) {
    %c0_i32 = arith.constant 0 : i32
    %c0_i32_0 = arith.constant 0 : i32
    %c0_i32_1 = arith.constant 0 : i32
    return %c0_i32, %c0_i32_0 : i32, i32
  }
  func.func @transform_2(%arg0: i32) -> (i32, i32, i32) {
    %c0_i32 = arith.constant 0 : i32
    %c0_i32_0 = arith.constant 0 : i32
    %c0_i32_1 = arith.constant 0 : i32
    return %arg0, %c0_i32, %c0_i32_0 : i32, i32, i32
  }
  func.func @transform_3(%arg0: i32) -> (i32, i32, i32) {
    %c0_i32 = arith.constant 0 : i32
    %c0_i32_0 = arith.constant 0 : i32
    %c0_i32_1 = arith.constant 0 : i32
    return %arg0, %c0_i32, %c0_i32_0 : i32, i32, i32
  }
}

module attributes {stable_mosaic.version = 11 : i64} {
  func.func @_mid_conv_kernel(%arg0: i32, %arg1: memref<2x16x128xbf16, #tpu.memory_space<vmem>>, %arg2: memref<2x128xf32, #tpu.memory_space<vmem>>, %arg3: memref<1x128xf32, #tpu.memory_space<vmem>>, %arg4: memref<1x128xf32, #tpu.memory_space<vmem>>, %arg5: memref<128x384xbf16, #tpu.memory_space<vmem>>, %arg6: memref<2x16x128xbf16, #tpu.memory_space<vmem>>, %arg7: memref<1x2x128xf32, #tpu.memory_space<vmem>>) attributes {dimension_semantics = [#tpu.dimension_semantics<parallel>], iteration_bounds = array<i64: 2>, scalar_prefetch = 0 : i64, scratch_operands = 0 : i64, tpu.core_type = #tpu.core_type<tc>, window_params = [{transform_indices = @transform_0, window_bounds = array<i64: 2, 16, 128>}, {pipeline_mode = #tpu.pipeline_mode<synchronous>, transform_indices = @transform_1, window_bounds = array<i64: 2, 128>}, {pipeline_mode = #tpu.pipeline_mode<synchronous>, transform_indices = @transform_2, window_bounds = array<i64: 1, 128>}, {pipeline_mode = #tpu.pipeline_mode<synchronous>, transform_indices = @transform_3, window_bounds = array<i64: 1, 128>}, {pipeline_mode = #tpu.pipeline_mode<synchronous>, transform_indices = @transform_4, window_bounds = array<i64: 128, 384>}, {transform_indices = @transform_5, window_bounds = array<i64: 2, 16, 128>}, {transform_indices = @transform_6, window_bounds = array<i64: 1, 2, 128>}]} {
    %c0 = arith.constant 0 : index
    %c0_0 = arith.constant 0 : index
    %0 = vector.load %arg2[%c0, %c0_0] : memref<2x128xf32, #tpu.memory_space<vmem>>, vector<2x128xf32>
    %1 = vector.extract_strided_slice %0 {offsets = [0, 0], sizes = [1, 128], strides = [1, 1]} : vector<2x128xf32> to vector<1x128xf32>
    %cst = arith.constant 1.562500e-02 : f32
    %2 = vector.broadcast %cst : f32 to vector<1x128xf32>
    %3 = arith.mulf %1, %2 : vector<1x128xf32>
    %4 = vector.extract_strided_slice %0 {offsets = [1, 0], sizes = [1, 128], strides = [1, 1]} : vector<2x128xf32> to vector<1x128xf32>
    %cst_1 = arith.constant 1.562500e-02 : f32
    %5 = vector.broadcast %cst_1 : f32 to vector<1x128xf32>
    %6 = arith.mulf %4, %5 : vector<1x128xf32>
    %7 = arith.mulf %3, %3 : vector<1x128xf32>
    %8 = arith.subf %6, %7 : vector<1x128xf32>
    %cst_2 = arith.constant 0.000000e+00 : f32
    %9 = vector.broadcast %cst_2 : f32 to vector<1x128xf32>
    %10 = arith.maximumf %8, %9 : vector<1x128xf32>
    %c0_3 = arith.constant 0 : index
    %c0_4 = arith.constant 0 : index
    %11 = vector.load %arg3[%c0_3, %c0_4] : memref<1x128xf32, #tpu.memory_space<vmem>>, vector<1x128xf32>
    %cst_5 = arith.constant 9.99999974E-6 : f32
    %12 = vector.broadcast %cst_5 : f32 to vector<1x128xf32>
    %13 = arith.addf %10, %12 : vector<1x128xf32>
    %14 = math.rsqrt %13 : vector<1x128xf32>
    %15 = arith.mulf %11, %14 : vector<1x128xf32>
    %c0_6 = arith.constant 0 : index
    %c0_7 = arith.constant 0 : index
    %16 = vector.load %arg4[%c0_6, %c0_7] : memref<1x128xf32, #tpu.memory_space<vmem>>, vector<1x128xf32>
    %17 = arith.mulf %3, %15 : vector<1x128xf32>
    %18 = arith.subf %16, %17 : vector<1x128xf32>
    %c0_8 = arith.constant 0 : index
    %c0_9 = arith.constant 0 : index
    %c0_10 = arith.constant 0 : index
    %19 = vector.load %arg1[%c0_8, %c0_9, %c0_10] : memref<2x16x128xbf16, #tpu.memory_space<vmem>>, vector<2x16x128xbf16>
    %20 = arith.extf %19 : vector<2x16x128xbf16> to vector<2x16x128xf32>
    %21 = vector.shape_cast %15 : vector<1x128xf32> to vector<1x1x128xf32>
    %22 = vector.broadcast %21 : vector<1x1x128xf32> to vector<2x16x128xf32>
    %23 = arith.mulf %20, %22 : vector<2x16x128xf32>
    %24 = vector.shape_cast %18 : vector<1x128xf32> to vector<1x1x128xf32>
    %25 = vector.broadcast %24 : vector<1x1x128xf32> to vector<2x16x128xf32>
    %26 = arith.addf %23, %25 : vector<2x16x128xf32>
    %cst_11 = arith.constant 0.000000e+00 : f32
    %27 = vector.broadcast %cst_11 : f32 to vector<2x16x128xf32>
    %28 = arith.maximumf %26, %27 : vector<2x16x128xf32>
    %c0_12 = arith.constant 0 : index
    %c0_13 = arith.constant 0 : index
    %29 = vector.load %arg5[%c0_12, %c0_13] : memref<128x384xbf16, #tpu.memory_space<vmem>>, vector<128x384xbf16>
    %30 = arith.truncf %28 : vector<2x16x128xf32> to vector<2x16x128xbf16>
    %31 = vector.shape_cast %30 : vector<2x16x128xbf16> to vector<32x128xbf16>
    %cst_14 = arith.constant dense<0.000000e+00> : vector<32x384xf32>
    %32 = tpu.matmul %31, %29, %cst_14 {dimension_numbers = #tpu.dot_dimension_numbers<[1], [0], [0], [1], [0, 0, 1, 1], [], []>} : vector<32x128xbf16>, vector<128x384xbf16>, vector<32x384xf32> -> vector<32x384xf32>
    %33 = vector.shape_cast %32 : vector<32x384xf32> to vector<2x16x384xf32>
    %34 = tpu.iota {dimensions = array<i32: 1>} : vector<1x16x1xi32>
    %35 = vector.extract_strided_slice %33 {offsets = [0, 0, 0], sizes = [2, 16, 128], strides = [1, 1, 1]} : vector<2x16x384xf32> to vector<2x16x128xf32>
    %c4_i32 = arith.constant 4 : i32
    %36 = tpu.dynamic_rotate %35 by %c4_i32 dim 1 : vector<2x16x128xf32>, i32 -> vector<2x16x128xf32>
    %c4_i32_15 = arith.constant 4 : i32
    %37 = vector.broadcast %c4_i32_15 : i32 to vector<1x16x1xi32>
    %38 = arith.cmpi sge, %34, %37 : vector<1x16x1xi32>
    %cst_16 = arith.constant 0.000000e+00 : f32
    %39 = vector.shape_cast %38 : vector<1x16x1xi1> to vector<1x16x1xi1>
    %40 = vector.broadcast %39 : vector<1x16x1xi1> to vector<2x16x128xi1>
    %41 = vector.broadcast %cst_16 : f32 to vector<2x16x128xf32>
    %42 = arith.select %40, %36, %41 : vector<2x16x128xi1>, vector<2x16x128xf32>
    %43 = vector.extract_strided_slice %33 {offsets = [0, 0, 128], sizes = [2, 16, 128], strides = [1, 1, 1]} : vector<2x16x384xf32> to vector<2x16x128xf32>
    %44 = vector.extract_strided_slice %33 {offsets = [0, 0, 256], sizes = [2, 16, 128], strides = [1, 1, 1]} : vector<2x16x384xf32> to vector<2x16x128xf32>
    %c12_i32 = arith.constant 12 : i32
    %45 = tpu.dynamic_rotate %44 by %c12_i32 dim 1 : vector<2x16x128xf32>, i32 -> vector<2x16x128xf32>
    %c12_i32_17 = arith.constant 12 : i32
    %46 = vector.broadcast %c12_i32_17 : i32 to vector<1x16x1xi32>
    %47 = arith.cmpi slt, %34, %46 : vector<1x16x1xi32>
    %cst_18 = arith.constant 0.000000e+00 : f32
    %48 = vector.shape_cast %47 : vector<1x16x1xi1> to vector<1x16x1xi1>
    %49 = vector.broadcast %48 : vector<1x16x1xi1> to vector<2x16x128xi1>
    %50 = vector.broadcast %cst_18 : f32 to vector<2x16x128xf32>
    %51 = arith.select %49, %45, %50 : vector<2x16x128xi1>, vector<2x16x128xf32>
    %52 = arith.addf %42, %43 : vector<2x16x128xf32>
    %53 = arith.addf %52, %51 : vector<2x16x128xf32>
    %54 = arith.truncf %53 : vector<2x16x128xf32> to vector<2x16x128xbf16>
    %c0_19 = arith.constant 0 : index
    %c0_20 = arith.constant 0 : index
    %c0_21 = arith.constant 0 : index
    %55 = vector.load %arg6[%c0_19, %c0_20, %c0_21] : memref<2x16x128xbf16, #tpu.memory_space<vmem>>, vector<2x16x128xbf16>
    tpu.vector_store %arg6[%c0_19, %c0_20, %c0_21], %54 {strides = array<i32>} : memref<2x16x128xbf16, #tpu.memory_space<vmem>>, vector<2x16x128xbf16>,
    %c2_i32 = arith.constant 2 : i32
    %56 = arith.muli %arg0, %c2_i32 : i32
    %57 = tpu.iota {dimensions = array<i32: 0>} : vector<2x1x1xi32>
    %58 = vector.broadcast %56 : i32 to vector<2x1x1xi32>
    %59 = arith.addi %57, %58 : vector<2x1x1xi32>
    %c4_i32_22 = arith.constant 4 : i32
    %60 = vector.broadcast %c4_i32_22 : i32 to vector<2x1x1xi32>
    %61 = arith.cmpi slt, %59, %60 : vector<2x1x1xi32>
    %cst_23 = arith.constant 0.000000e+00 : f32
    %62 = vector.shape_cast %61 : vector<2x1x1xi1> to vector<2x1x1xi1>
    %63 = vector.broadcast %62 : vector<2x1x1xi1> to vector<2x16x128xi1>
    %64 = vector.broadcast %cst_23 : f32 to vector<2x16x128xf32>
    %65 = arith.select %63, %53, %64 : vector<2x16x128xi1>, vector<2x16x128xf32>
    %66 = vector.shape_cast %65 : vector<2x16x128xf32> to vector<32x128xf32>
    %cst_24 = arith.constant dense<0.000000e+00> : vector<128xf32>
    %67 = vector.multi_reduction <add>, %66, %cst_24 [0] : vector<32x128xf32> to vector<128xf32>
    %68 = vector.shape_cast %67 : vector<128xf32> to vector<1x128xf32>
    %69 = vector.shape_cast %68 : vector<1x128xf32> to vector<1x1x128xf32>
    %c0_25 = arith.constant 0 : index
    %c0_26 = arith.constant 0 : index
    %c0_27 = arith.constant 0 : index
    %70 = vector.load %arg7[%c0_25, %c0_26, %c0_27] : memref<1x2x128xf32, #tpu.memory_space<vmem>>, vector<1x1x128xf32>
    tpu.vector_store %arg7[%c0_25, %c0_26, %c0_27], %69 {strides = array<i32>} : memref<1x2x128xf32, #tpu.memory_space<vmem>>, vector<1x1x128xf32>,
    %71 = arith.mulf %66, %66 : vector<32x128xf32>
    %cst_28 = arith.constant dense<0.000000e+00> : vector<128xf32>
    %72 = vector.multi_reduction <add>, %71, %cst_28 [0] : vector<32x128xf32> to vector<128xf32>
    %73 = vector.shape_cast %72 : vector<128xf32> to vector<1x128xf32>
    %74 = vector.shape_cast %73 : vector<1x128xf32> to vector<1x1x128xf32>
    %c0_29 = arith.constant 0 : index
    %c1 = arith.constant 1 : index
    %c0_30 = arith.constant 0 : index
    %75 = vector.load %arg7[%c0_29, %c1, %c0_30] : memref<1x2x128xf32, #tpu.memory_space<vmem>>, vector<1x1x128xf32>
    tpu.vector_store %arg7[%c0_29, %c1, %c0_30], %74 {strides = array<i32>} : memref<1x2x128xf32, #tpu.memory_space<vmem>>, vector<1x1x128xf32>,
    return
  }
  func.func @transform_0(%arg0: i32) -> (i32, i32, i32) {
    %c0_i32 = arith.constant 0 : i32
    %c0_i32_0 = arith.constant 0 : i32
    %c0_i32_1 = arith.constant 0 : i32
    return %arg0, %c0_i32, %c0_i32_0 : i32, i32, i32
  }
  func.func @transform_1(%arg0: i32) -> (i32, i32) {
    %c0_i32 = arith.constant 0 : i32
    %c0_i32_0 = arith.constant 0 : i32
    %c0_i32_1 = arith.constant 0 : i32
    return %c0_i32, %c0_i32_0 : i32, i32
  }
  func.func @transform_2(%arg0: i32) -> (i32, i32) {
    %c0_i32 = arith.constant 0 : i32
    %c0_i32_0 = arith.constant 0 : i32
    %c0_i32_1 = arith.constant 0 : i32
    return %c0_i32, %c0_i32_0 : i32, i32
  }
  func.func @transform_3(%arg0: i32) -> (i32, i32) {
    %c0_i32 = arith.constant 0 : i32
    %c0_i32_0 = arith.constant 0 : i32
    %c0_i32_1 = arith.constant 0 : i32
    return %c0_i32, %c0_i32_0 : i32, i32
  }
  func.func @transform_4(%arg0: i32) -> (i32, i32) {
    %c0_i32 = arith.constant 0 : i32
    %c0_i32_0 = arith.constant 0 : i32
    %c0_i32_1 = arith.constant 0 : i32
    return %c0_i32, %c0_i32_0 : i32, i32
  }
  func.func @transform_5(%arg0: i32) -> (i32, i32, i32) {
    %c0_i32 = arith.constant 0 : i32
    %c0_i32_0 = arith.constant 0 : i32
    %c0_i32_1 = arith.constant 0 : i32
    return %arg0, %c0_i32, %c0_i32_0 : i32, i32, i32
  }
  func.func @transform_6(%arg0: i32) -> (i32, i32, i32) {
    %c0_i32 = arith.constant 0 : i32
    %c0_i32_0 = arith.constant 0 : i32
    %c0_i32_1 = arith.constant 0 : i32
    return %arg0, %c0_i32, %c0_i32_0 : i32, i32, i32
  }
}

module attributes {stable_mosaic.version = 11 : i64} {
  func.func @_mid_conv_kernel(%arg0: i32, %arg1: memref<2x16x128xbf16, #tpu.memory_space<vmem>>, %arg2: memref<2x128xf32, #tpu.memory_space<vmem>>, %arg3: memref<1x128xf32, #tpu.memory_space<vmem>>, %arg4: memref<1x128xf32, #tpu.memory_space<vmem>>, %arg5: memref<128x384xbf16, #tpu.memory_space<vmem>>, %arg6: memref<2x16x128xbf16, #tpu.memory_space<vmem>>, %arg7: memref<1x2x128xf32, #tpu.memory_space<vmem>>) attributes {dimension_semantics = [#tpu.dimension_semantics<parallel>], iteration_bounds = array<i64: 2>, scalar_prefetch = 0 : i64, scratch_operands = 0 : i64, tpu.core_type = #tpu.core_type<tc>, window_params = [{transform_indices = @transform_0, window_bounds = array<i64: 2, 16, 128>}, {pipeline_mode = #tpu.pipeline_mode<synchronous>, transform_indices = @transform_1, window_bounds = array<i64: 2, 128>}, {pipeline_mode = #tpu.pipeline_mode<synchronous>, transform_indices = @transform_2, window_bounds = array<i64: 1, 128>}, {pipeline_mode = #tpu.pipeline_mode<synchronous>, transform_indices = @transform_3, window_bounds = array<i64: 1, 128>}, {pipeline_mode = #tpu.pipeline_mode<synchronous>, transform_indices = @transform_4, window_bounds = array<i64: 128, 384>}, {transform_indices = @transform_5, window_bounds = array<i64: 2, 16, 128>}, {transform_indices = @transform_6, window_bounds = array<i64: 1, 2, 128>}]} {
    %c0 = arith.constant 0 : index
    %c0_0 = arith.constant 0 : index
    %0 = vector.load %arg2[%c0, %c0_0] : memref<2x128xf32, #tpu.memory_space<vmem>>, vector<2x128xf32>
    %1 = vector.extract_strided_slice %0 {offsets = [0, 0], sizes = [1, 128], strides = [1, 1]} : vector<2x128xf32> to vector<1x128xf32>
    %cst = arith.constant 1.562500e-02 : f32
    %2 = vector.broadcast %cst : f32 to vector<1x128xf32>
    %3 = arith.mulf %1, %2 : vector<1x128xf32>
    %4 = vector.extract_strided_slice %0 {offsets = [1, 0], sizes = [1, 128], strides = [1, 1]} : vector<2x128xf32> to vector<1x128xf32>
    %cst_1 = arith.constant 1.562500e-02 : f32
    %5 = vector.broadcast %cst_1 : f32 to vector<1x128xf32>
    %6 = arith.mulf %4, %5 : vector<1x128xf32>
    %7 = arith.mulf %3, %3 : vector<1x128xf32>
    %8 = arith.subf %6, %7 : vector<1x128xf32>
    %cst_2 = arith.constant 0.000000e+00 : f32
    %9 = vector.broadcast %cst_2 : f32 to vector<1x128xf32>
    %10 = arith.maximumf %8, %9 : vector<1x128xf32>
    %c0_3 = arith.constant 0 : index
    %c0_4 = arith.constant 0 : index
    %11 = vector.load %arg3[%c0_3, %c0_4] : memref<1x128xf32, #tpu.memory_space<vmem>>, vector<1x128xf32>
    %cst_5 = arith.constant 9.99999974E-6 : f32
    %12 = vector.broadcast %cst_5 : f32 to vector<1x128xf32>
    %13 = arith.addf %10, %12 : vector<1x128xf32>
    %14 = math.rsqrt %13 : vector<1x128xf32>
    %15 = arith.mulf %11, %14 : vector<1x128xf32>
    %c0_6 = arith.constant 0 : index
    %c0_7 = arith.constant 0 : index
    %16 = vector.load %arg4[%c0_6, %c0_7] : memref<1x128xf32, #tpu.memory_space<vmem>>, vector<1x128xf32>
    %17 = arith.mulf %3, %15 : vector<1x128xf32>
    %18 = arith.subf %16, %17 : vector<1x128xf32>
    %c0_8 = arith.constant 0 : index
    %c0_9 = arith.constant 0 : index
    %c0_10 = arith.constant 0 : index
    %19 = vector.load %arg1[%c0_8, %c0_9, %c0_10] : memref<2x16x128xbf16, #tpu.memory_space<vmem>>, vector<2x16x128xbf16>
    %20 = arith.extf %19 : vector<2x16x128xbf16> to vector<2x16x128xf32>
    %21 = vector.shape_cast %15 : vector<1x128xf32> to vector<1x1x128xf32>
    %22 = vector.broadcast %21 : vector<1x1x128xf32> to vector<2x16x128xf32>
    %23 = arith.mulf %20, %22 : vector<2x16x128xf32>
    %24 = vector.shape_cast %18 : vector<1x128xf32> to vector<1x1x128xf32>
    %25 = vector.broadcast %24 : vector<1x1x128xf32> to vector<2x16x128xf32>
    %26 = arith.addf %23, %25 : vector<2x16x128xf32>
    %cst_11 = arith.constant 0.000000e+00 : f32
    %27 = vector.broadcast %cst_11 : f32 to vector<2x16x128xf32>
    %28 = arith.maximumf %26, %27 : vector<2x16x128xf32>
    %c0_12 = arith.constant 0 : index
    %c0_13 = arith.constant 0 : index
    %29 = vector.load %arg5[%c0_12, %c0_13] : memref<128x384xbf16, #tpu.memory_space<vmem>>, vector<128x384xbf16>
    %30 = arith.truncf %28 : vector<2x16x128xf32> to vector<2x16x128xbf16>
    %31 = vector.shape_cast %30 : vector<2x16x128xbf16> to vector<32x128xbf16>
    %cst_14 = arith.constant dense<0.000000e+00> : vector<32x384xf32>
    %32 = tpu.matmul %31, %29, %cst_14 {dimension_numbers = #tpu.dot_dimension_numbers<[1], [0], [0], [1], [0, 0, 1, 1], [], []>} : vector<32x128xbf16>, vector<128x384xbf16>, vector<32x384xf32> -> vector<32x384xf32>
    %33 = vector.shape_cast %32 : vector<32x384xf32> to vector<2x16x384xf32>
    %34 = tpu.iota {dimensions = array<i32: 1>} : vector<1x16x1xi32>
    %35 = vector.extract_strided_slice %33 {offsets = [0, 0, 0], sizes = [2, 16, 128], strides = [1, 1, 1]} : vector<2x16x384xf32> to vector<2x16x128xf32>
    %c8_i32 = arith.constant 8 : i32
    %36 = tpu.dynamic_rotate %35 by %c8_i32 dim 1 : vector<2x16x128xf32>, i32 -> vector<2x16x128xf32>
    %c8_i32_15 = arith.constant 8 : i32
    %37 = vector.broadcast %c8_i32_15 : i32 to vector<1x16x1xi32>
    %38 = arith.cmpi sge, %34, %37 : vector<1x16x1xi32>
    %cst_16 = arith.constant 0.000000e+00 : f32
    %39 = vector.shape_cast %38 : vector<1x16x1xi1> to vector<1x16x1xi1>
    %40 = vector.broadcast %39 : vector<1x16x1xi1> to vector<2x16x128xi1>
    %41 = vector.broadcast %cst_16 : f32 to vector<2x16x128xf32>
    %42 = arith.select %40, %36, %41 : vector<2x16x128xi1>, vector<2x16x128xf32>
    %43 = vector.extract_strided_slice %33 {offsets = [0, 0, 128], sizes = [2, 16, 128], strides = [1, 1, 1]} : vector<2x16x384xf32> to vector<2x16x128xf32>
    %44 = vector.extract_strided_slice %33 {offsets = [0, 0, 256], sizes = [2, 16, 128], strides = [1, 1, 1]} : vector<2x16x384xf32> to vector<2x16x128xf32>
    %c8_i32_17 = arith.constant 8 : i32
    %45 = tpu.dynamic_rotate %44 by %c8_i32_17 dim 1 : vector<2x16x128xf32>, i32 -> vector<2x16x128xf32>
    %c8_i32_18 = arith.constant 8 : i32
    %46 = vector.broadcast %c8_i32_18 : i32 to vector<1x16x1xi32>
    %47 = arith.cmpi slt, %34, %46 : vector<1x16x1xi32>
    %cst_19 = arith.constant 0.000000e+00 : f32
    %48 = vector.shape_cast %47 : vector<1x16x1xi1> to vector<1x16x1xi1>
    %49 = vector.broadcast %48 : vector<1x16x1xi1> to vector<2x16x128xi1>
    %50 = vector.broadcast %cst_19 : f32 to vector<2x16x128xf32>
    %51 = arith.select %49, %45, %50 : vector<2x16x128xi1>, vector<2x16x128xf32>
    %52 = arith.addf %42, %43 : vector<2x16x128xf32>
    %53 = arith.addf %52, %51 : vector<2x16x128xf32>
    %54 = arith.truncf %53 : vector<2x16x128xf32> to vector<2x16x128xbf16>
    %c0_20 = arith.constant 0 : index
    %c0_21 = arith.constant 0 : index
    %c0_22 = arith.constant 0 : index
    %55 = vector.load %arg6[%c0_20, %c0_21, %c0_22] : memref<2x16x128xbf16, #tpu.memory_space<vmem>>, vector<2x16x128xbf16>
    tpu.vector_store %arg6[%c0_20, %c0_21, %c0_22], %54 {strides = array<i32>} : memref<2x16x128xbf16, #tpu.memory_space<vmem>>, vector<2x16x128xbf16>,
    %c2_i32 = arith.constant 2 : i32
    %56 = arith.muli %arg0, %c2_i32 : i32
    %57 = tpu.iota {dimensions = array<i32: 0>} : vector<2x1x1xi32>
    %58 = vector.broadcast %56 : i32 to vector<2x1x1xi32>
    %59 = arith.addi %57, %58 : vector<2x1x1xi32>
    %c4_i32 = arith.constant 4 : i32
    %60 = vector.broadcast %c4_i32 : i32 to vector<2x1x1xi32>
    %61 = arith.cmpi slt, %59, %60 : vector<2x1x1xi32>
    %cst_23 = arith.constant 0.000000e+00 : f32
    %62 = vector.shape_cast %61 : vector<2x1x1xi1> to vector<2x1x1xi1>
    %63 = vector.broadcast %62 : vector<2x1x1xi1> to vector<2x16x128xi1>
    %64 = vector.broadcast %cst_23 : f32 to vector<2x16x128xf32>
    %65 = arith.select %63, %53, %64 : vector<2x16x128xi1>, vector<2x16x128xf32>
    %66 = vector.shape_cast %65 : vector<2x16x128xf32> to vector<32x128xf32>
    %cst_24 = arith.constant dense<0.000000e+00> : vector<128xf32>
    %67 = vector.multi_reduction <add>, %66, %cst_24 [0] : vector<32x128xf32> to vector<128xf32>
    %68 = vector.shape_cast %67 : vector<128xf32> to vector<1x128xf32>
    %69 = vector.shape_cast %68 : vector<1x128xf32> to vector<1x1x128xf32>
    %c0_25 = arith.constant 0 : index
    %c0_26 = arith.constant 0 : index
    %c0_27 = arith.constant 0 : index
    %70 = vector.load %arg7[%c0_25, %c0_26, %c0_27] : memref<1x2x128xf32, #tpu.memory_space<vmem>>, vector<1x1x128xf32>
    tpu.vector_store %arg7[%c0_25, %c0_26, %c0_27], %69 {strides = array<i32>} : memref<1x2x128xf32, #tpu.memory_space<vmem>>, vector<1x1x128xf32>,
    %71 = arith.mulf %66, %66 : vector<32x128xf32>
    %cst_28 = arith.constant dense<0.000000e+00> : vector<128xf32>
    %72 = vector.multi_reduction <add>, %71, %cst_28 [0] : vector<32x128xf32> to vector<128xf32>
    %73 = vector.shape_cast %72 : vector<128xf32> to vector<1x128xf32>
    %74 = vector.shape_cast %73 : vector<1x128xf32> to vector<1x1x128xf32>
    %c0_29 = arith.constant 0 : index
    %c1 = arith.constant 1 : index
    %c0_30 = arith.constant 0 : index
    %75 = vector.load %arg7[%c0_29, %c1, %c0_30] : memref<1x2x128xf32, #tpu.memory_space<vmem>>, vector<1x1x128xf32>
    tpu.vector_store %arg7[%c0_29, %c1, %c0_30], %74 {strides = array<i32>} : memref<1x2x128xf32, #tpu.memory_space<vmem>>, vector<1x1x128xf32>,
    return
  }
  func.func @transform_0(%arg0: i32) -> (i32, i32, i32) {
    %c0_i32 = arith.constant 0 : i32
    %c0_i32_0 = arith.constant 0 : i32
    %c0_i32_1 = arith.constant 0 : i32
    return %arg0, %c0_i32, %c0_i32_0 : i32, i32, i32
  }
  func.func @transform_1(%arg0: i32) -> (i32, i32) {
    %c0_i32 = arith.constant 0 : i32
    %c0_i32_0 = arith.constant 0 : i32
    %c0_i32_1 = arith.constant 0 : i32
    return %c0_i32, %c0_i32_0 : i32, i32
  }
  func.func @transform_2(%arg0: i32) -> (i32, i32) {
    %c0_i32 = arith.constant 0 : i32
    %c0_i32_0 = arith.constant 0 : i32
    %c0_i32_1 = arith.constant 0 : i32
    return %c0_i32, %c0_i32_0 : i32, i32
  }
  func.func @transform_3(%arg0: i32) -> (i32, i32) {
    %c0_i32 = arith.constant 0 : i32
    %c0_i32_0 = arith.constant 0 : i32
    %c0_i32_1 = arith.constant 0 : i32
    return %c0_i32, %c0_i32_0 : i32, i32
  }
  func.func @transform_4(%arg0: i32) -> (i32, i32) {
    %c0_i32 = arith.constant 0 : i32
    %c0_i32_0 = arith.constant 0 : i32
    %c0_i32_1 = arith.constant 0 : i32
    return %c0_i32, %c0_i32_0 : i32, i32
  }
  func.func @transform_5(%arg0: i32) -> (i32, i32, i32) {
    %c0_i32 = arith.constant 0 : i32
    %c0_i32_0 = arith.constant 0 : i32
    %c0_i32_1 = arith.constant 0 : i32
    return %arg0, %c0_i32, %c0_i32_0 : i32, i32, i32
  }
  func.func @transform_6(%arg0: i32) -> (i32, i32, i32) {
    %c0_i32 = arith.constant 0 : i32
    %c0_i32_0 = arith.constant 0 : i32
    %c0_i32_1 = arith.constant 0 : i32
    return %arg0, %c0_i32, %c0_i32_0 : i32, i32, i32
  }
}

module attributes {stable_mosaic.version = 11 : i64} {
  func.func @_bn_relu_kernel(%arg0: i32, %arg1: memref<2x16x128xbf16, #tpu.memory_space<vmem>>, %arg2: memref<2x128xf32, #tpu.memory_space<vmem>>, %arg3: memref<1x128xf32, #tpu.memory_space<vmem>>, %arg4: memref<1x128xf32, #tpu.memory_space<vmem>>, %arg5: memref<2x16x128xf32, #tpu.memory_space<vmem>>) attributes {dimension_semantics = [#tpu.dimension_semantics<parallel>], iteration_bounds = array<i64: 2>, scalar_prefetch = 0 : i64, scratch_operands = 0 : i64, tpu.core_type = #tpu.core_type<tc>, window_params = [{transform_indices = @transform_0, window_bounds = array<i64: 2, 16, 128>}, {pipeline_mode = #tpu.pipeline_mode<synchronous>, transform_indices = @transform_1, window_bounds = array<i64: 2, 128>}, {pipeline_mode = #tpu.pipeline_mode<synchronous>, transform_indices = @transform_2, window_bounds = array<i64: 1, 128>}, {pipeline_mode = #tpu.pipeline_mode<synchronous>, transform_indices = @transform_3, window_bounds = array<i64: 1, 128>}, {transform_indices = @transform_4, window_bounds = array<i64: 2, 16, 128>}]} {
    %c0 = arith.constant 0 : index
    %c0_0 = arith.constant 0 : index
    %0 = vector.load %arg2[%c0, %c0_0] : memref<2x128xf32, #tpu.memory_space<vmem>>, vector<2x128xf32>
    %1 = vector.extract_strided_slice %0 {offsets = [0, 0], sizes = [1, 128], strides = [1, 1]} : vector<2x128xf32> to vector<1x128xf32>
    %cst = arith.constant 1.562500e-02 : f32
    %2 = vector.broadcast %cst : f32 to vector<1x128xf32>
    %3 = arith.mulf %1, %2 : vector<1x128xf32>
    %4 = vector.extract_strided_slice %0 {offsets = [1, 0], sizes = [1, 128], strides = [1, 1]} : vector<2x128xf32> to vector<1x128xf32>
    %cst_1 = arith.constant 1.562500e-02 : f32
    %5 = vector.broadcast %cst_1 : f32 to vector<1x128xf32>
    %6 = arith.mulf %4, %5 : vector<1x128xf32>
    %7 = arith.mulf %3, %3 : vector<1x128xf32>
    %8 = arith.subf %6, %7 : vector<1x128xf32>
    %cst_2 = arith.constant 0.000000e+00 : f32
    %9 = vector.broadcast %cst_2 : f32 to vector<1x128xf32>
    %10 = arith.maximumf %8, %9 : vector<1x128xf32>
    %c0_3 = arith.constant 0 : index
    %c0_4 = arith.constant 0 : index
    %11 = vector.load %arg3[%c0_3, %c0_4] : memref<1x128xf32, #tpu.memory_space<vmem>>, vector<1x128xf32>
    %cst_5 = arith.constant 9.99999974E-6 : f32
    %12 = vector.broadcast %cst_5 : f32 to vector<1x128xf32>
    %13 = arith.addf %10, %12 : vector<1x128xf32>
    %14 = math.rsqrt %13 : vector<1x128xf32>
    %15 = arith.mulf %11, %14 : vector<1x128xf32>
    %c0_6 = arith.constant 0 : index
    %c0_7 = arith.constant 0 : index
    %16 = vector.load %arg4[%c0_6, %c0_7] : memref<1x128xf32, #tpu.memory_space<vmem>>, vector<1x128xf32>
    %17 = arith.mulf %3, %15 : vector<1x128xf32>
    %18 = arith.subf %16, %17 : vector<1x128xf32>
    %c0_8 = arith.constant 0 : index
    %c0_9 = arith.constant 0 : index
    %c0_10 = arith.constant 0 : index
    %19 = vector.load %arg1[%c0_8, %c0_9, %c0_10] : memref<2x16x128xbf16, #tpu.memory_space<vmem>>, vector<2x16x128xbf16>
    %20 = arith.extf %19 : vector<2x16x128xbf16> to vector<2x16x128xf32>
    %21 = vector.shape_cast %15 : vector<1x128xf32> to vector<1x1x128xf32>
    %22 = vector.broadcast %21 : vector<1x1x128xf32> to vector<2x16x128xf32>
    %23 = arith.mulf %20, %22 : vector<2x16x128xf32>
    %24 = vector.shape_cast %18 : vector<1x128xf32> to vector<1x1x128xf32>
    %25 = vector.broadcast %24 : vector<1x1x128xf32> to vector<2x16x128xf32>
    %26 = arith.addf %23, %25 : vector<2x16x128xf32>
    %cst_11 = arith.constant 0.000000e+00 : f32
    %27 = vector.broadcast %cst_11 : f32 to vector<2x16x128xf32>
    %28 = arith.maximumf %26, %27 : vector<2x16x128xf32>
    %c0_12 = arith.constant 0 : index
    %c0_13 = arith.constant 0 : index
    %c0_14 = arith.constant 0 : index
    %29 = vector.load %arg5[%c0_12, %c0_13, %c0_14] : memref<2x16x128xf32, #tpu.memory_space<vmem>>, vector<2x16x128xf32>
    tpu.vector_store %arg5[%c0_12, %c0_13, %c0_14], %28 {strides = array<i32>} : memref<2x16x128xf32, #tpu.memory_space<vmem>>, vector<2x16x128xf32>,
    return
  }
  func.func @transform_0(%arg0: i32) -> (i32, i32, i32) {
    %c0_i32 = arith.constant 0 : i32
    %c0_i32_0 = arith.constant 0 : i32
    %c0_i32_1 = arith.constant 0 : i32
    return %arg0, %c0_i32, %c0_i32_0 : i32, i32, i32
  }
  func.func @transform_1(%arg0: i32) -> (i32, i32) {
    %c0_i32 = arith.constant 0 : i32
    %c0_i32_0 = arith.constant 0 : i32
    %c0_i32_1 = arith.constant 0 : i32
    return %c0_i32, %c0_i32_0 : i32, i32
  }
  func.func @transform_2(%arg0: i32) -> (i32, i32) {
    %c0_i32 = arith.constant 0 : i32
    %c0_i32_0 = arith.constant 0 : i32
    %c0_i32_1 = arith.constant 0 : i32
    return %c0_i32, %c0_i32_0 : i32, i32
  }
  func.func @transform_3(%arg0: i32) -> (i32, i32) {
    %c0_i32 = arith.constant 0 : i32
    %c0_i32_0 = arith.constant 0 : i32
    %c0_i32_1 = arith.constant 0 : i32
    return %c0_i32, %c0_i32_0 : i32, i32
  }
  func.func @transform_4(%arg0: i32) -> (i32, i32, i32) {
    %c0_i32 = arith.constant 0 : i32
    %c0_i32_0 = arith.constant 0 : i32
    %c0_i32_1 = arith.constant 0 : i32
    return %arg0, %c0_i32, %c0_i32_0 : i32, i32, i32
  }
}

</mosaic_0001>

<llo_original>
// kernel: tcn_part.5
$region0: #{tcn_part.5}
  #allocation0 [shape = 'u32[]', space=smem, size = 0x4, offset = 0x4, fixed_abs, tag = 'smem constant byte address 0x4 - core index']
  #allocation1 [shape = 'u32[72,128]{1,0:T(1,128)}', space=vmem, size = 0x9000, scoped, tag = 'internal scratch']
  %s0 = inlined_call_operand.vmem [shape: f32[4,16,8], index: 0, kind: input, shape index: {}]
  %s1 = inlined_call_operand.vmem [shape: bf16[8,384], index: 1, kind: input, shape index: {}]
  %s2 = inlined_call_operand.vmem [shape: bf16[4,16,128], index: 2, kind: output, shape index: {0}]
  %s3 = inlined_call_operand.vmem [shape: f32[2,2,128], index: 3, kind: output, shape index: {1}]
  %4 = xla_tuple %s2, %s3
  %s5 = sld [smem:[#allocation0]]
  $region49: #{tcn_part.5} parent=0
    _
  %s7 = ssub.s32 1, %s5
  %s8 = scalar_select 0, %s7, %s5
  loop: start=0, step=1, limit=4
  $region2: #{tcn_part.5} parent=0 // loop_pre_header
    _
  $region3: #{tcn_part.5} parent=0 // loop_header
    %s10 = sphi 0, %s14
    %p11 = scmp.ge.s32.totalorder %s10, 4
    %s20 = sphi 0, %s22
    %s23 = sphi 0, %s20
    %s24 = sphi 0, %s23
    %s40 = sphi 0, %s24
    %s44 = sphi 0, %s44
    %s46 = sphi 0, %s44
    %s47 = sphi 0, %s46
    %s61 = sphi 0, %s47
    %s67 = sphi 0, %s69
    %s70 = sphi 0, %s67
    %s71 = sphi 0, %s70
    %s87 = sphi 0, %s71
    %s93 = sphi 0, %s95
    %s96 = sphi 0, %s93
    %s97 = sphi 0, %s96
    %s113 = sphi 0, %s97
  $region4: #{tcn_part.5} parent=0 // loop_header_branch
    %13 = sbr.rel (%p11) target = $region8
  $region5: #{tcn_part.5} parent=0 // loop_body
    %s15 = ssub.s32 %s10, 1
    %s16 = ssub.s32 %s10, 2
    %s17 = sadd.s32 %s10, 1
    %s18 = ssub.s32 %s10, %s17
    %p19 = scmp.eq.s32.totalorder %s18, 0
    %s21 = sadd.s32 %s20, 1
    %s22 = scalar_select %p19, %s20, %s21
    %p25 = pneg %p19
    %p26 = scmp.eq.s32.totalorder %s10, 1
    %p27 = por %p25, %p26
    %p28 = scmp.ne.s32.totalorder %s20, %s23
    %p29 = scmp.eq.s32.totalorder %s10, 0
    %p30 = por %p28, %p29
    %p31 = scmp.ne.s32.totalorder %s20, %s23
    %p32 = scmp.eq.s32.totalorder %s15, 1
    %p33 = por %p31, %p32
    %p34 = scmp.ne.s32.totalorder %s23, %s24
    %p35 = scmp.eq.s32.totalorder %s15, 0
    %p36 = por %p34, %p35
    %p37 = scmp.ne.s32.totalorder %s23, %s24
    %p38 = scmp.eq.s32.totalorder %s16, 1
    %p39 = por %p37, %p38
    %p41 = scmp.ne.s32.totalorder %s24, %s40
    %p42 = scmp.eq.s32.totalorder %s16, 0
    %p43 = por %p41, %p42
    %s45 = sadd.s32 %s44, 1
    %p48 = scmp.eq.s32.totalorder %s10, 1
    %p49 = scmp.ne.s32.totalorder %s44, %s46
    %p50 = scmp.eq.s32.totalorder %s10, 0
    %p51 = por %p49, %p50
    %p52 = scmp.ne.s32.totalorder %s44, %s46
    %p53 = scmp.eq.s32.totalorder %s15, 1
    %p54 = por %p52, %p53
    %p55 = scmp.ne.s32.totalorder %s46, %s47
    %p56 = scmp.eq.s32.totalorder %s15, 0
    %p57 = por %p55, %p56
    %p58 = scmp.ne.s32.totalorder %s46, %s47
    %p59 = scmp.eq.s32.totalorder %s16, 1
    %p60 = por %p58, %p59
    %p62 = scmp.ne.s32.totalorder %s47, %s61
    %p63 = scmp.eq.s32.totalorder %s16, 0
    %p64 = por %p62, %p63
    %s65 = ssub.s32 %s10, %s17
    %p66 = scmp.eq.s32.totalorder %s65, 0
    %s68 = sadd.s32 %s67, 1
    %s69 = scalar_select %p66, %s67, %s68
    %p72 = pneg %p66
    %p73 = scmp.eq.s32.totalorder %s10, 1
    %p74 = por %p72, %p73
    %p75 = scmp.ne.s32.totalorder %s67, %s70
    %p76 = scmp.eq.s32.totalorder %s10, 0
    %p77 = por %p75, %p76
    %p78 = scmp.ne.s32.totalorder %s67, %s70
    %p79 = scmp.eq.s32.totalorder %s15, 1
    %p80 = por %p78, %p79
    %p81 = scmp.ne.s32.totalorder %s70, %s71
    %p82 = scmp.eq.s32.totalorder %s15, 0
    %p83 = por %p81, %p82
    %p84 = scmp.ne.s32.totalorder %s70, %s71
    %p85 = scmp.eq.s32.totalorder %s16, 1
    %p86 = por %p84, %p85
    %p88 = scmp.ne.s32.totalorder %s71, %s87
    %p89 = scmp.eq.s32.totalorder %s16, 0
    %p90 = por %p88, %p89
    %s91 = ssub.s32 %s10, %s17
    %p92 = scmp.eq.s32.totalorder %s91, 0
    %s94 = sadd.s32 %s93, 1
    %s95 = scalar_select %p92, %s93, %s94
    %p98 = pneg %p92
    %p99 = scmp.eq.s32.totalorder %s10, 1
    %p100 = por %p98, %p99
    %p101 = scmp.ne.s32.totalorder %s93, %s96
    %p102 = scmp.eq.s32.totalorder %s10, 0
    %p103 = por %p101, %p102
    %p104 = scmp.ne.s32.totalorder %s93, %s96
    %p105 = scmp.eq.s32.totalorder %s15, 1
    %p106 = por %p104, %p105
    %p107 = scmp.ne.s32.totalorder %s96, %s97
    %p108 = scmp.eq.s32.totalorder %s15, 0
    %p109 = por %p107, %p108
    %p110 = scmp.ne.s32.totalorder %s96, %s97
    %p111 = scmp.eq.s32.totalorder %s16, 1
    %p112 = por %p110, %p111
    %p114 = scmp.ne.s32.totalorder %s97, %s113
    %p115 = scmp.eq.s32.totalorder %s16, 0
    %p116 = por %p114, %p115
    %p117 = scmp.le.s32.totalorder 1, %s10
    %p118 = scmp.lt.s32.totalorder %s10, 3
    %p119 = pnand %p117, %p118
    %p120 = pneg %p119
    // Predicated region
    $region9: #{tcn_part.5} parent=5 // pred_check
      _
    $region10: #{tcn_part.5} parent=5 // pred_check_branch
      %122 = sbr.rel (%p119) target = $region12
    $region11: #{tcn_part.5} parent=5 // pred_region
      %s123 = ssub.s32 %s10, 1
      // Predicated region
      $region13: #{tcn_part.5} parent=11 // pred_check
        %p124 = pneg %p57
      $region14: #{tcn_part.5} parent=11 // pred_check_branch
        %126 = sbr.rel (%p124) target = $region16
      $region15: #{tcn_part.5} parent=11 // pred_region
        _
      $region16: #{tcn_part.5} parent=11 // pred_fallthru
        _
    $region12: #{tcn_part.5} parent=5 // pred_fallthru
      _
    %p127 = scmp.lt.s32.totalorder %s10, 2
    // Predicated region
    $region17: #{tcn_part.5} parent=5 // pred_check
      %p128 = pneg %p127
    $region18: #{tcn_part.5} parent=5 // pred_check_branch
      %130 = sbr.rel (%p128) target = $region20
    $region19: #{tcn_part.5} parent=5 // pred_region
      // Predicated region
      $region21: #{tcn_part.5} parent=19 // pred_check
        %p131 = pneg %p30
      $region22: #{tcn_part.5} parent=19 // pred_check_branch
        %133 = sbr.rel (%p131) target = $region24
      $region23: #{tcn_part.5} parent=19 // pred_region
        %s134 = smul.u32 2, %s10
        %p135 = scmp.lt.s32.totalorder %s134, 3
        %s136 = scalar_select %p135, %s134, 3
        %s137 = smul.addr %s136, 2
        %s138 = smul.addr %s137, 8
        %s139 = scalar_lea.vmem %s0, %s138
        %s140 = smul.u32 2, %s10
      $region24: #{tcn_part.5} parent=19 // pred_fallthru
        _
    $region20: #{tcn_part.5} parent=5 // pred_fallthru
      _
    %p141 = scmp.le.s32.totalorder 1, %s10
    %p142 = scmp.lt.s32.totalorder %s10, 3
    %p143 = pnand %p141, %p142
    %p144 = pneg %p143
    // Predicated region
    $region25: #{tcn_part.5} parent=5 // pred_check
      _
    $region26: #{tcn_part.5} parent=5 // pred_check_branch
      %146 = sbr.rel (%p143) target = $region28
    $region27: #{tcn_part.5} parent=5 // pred_region
      %s147 = ssub.s32 %s10, 1
      %s148 = smul.u32 2, %s15
      %p149 = scmp.lt.s32.totalorder %s148, 3
      %s150 = scalar_select %p149, %s148, 3
      %s151 = smul.addr %s150, 2
      %s152 = smul.addr %s151, 8
      %s153 = scalar_lea.vmem %s0, %s152
      %p154 = pneg %p36
      %p155 = pneg %p33
      %p156 = pneg %p57
      %p157 = pneg %p54
      %p158 = pneg %p83
      %p159 = pneg %p80
      %s160 = smul.u32 2, %s15
      %p161 = scmp.lt.s32.totalorder %s160, 3
      %s162 = scalar_select %p161, %s160, 3
      %s163 = smul.addr %s162, 2
      %s164 = smul.addr %s163, 4
      %s165 = scalar_lea.vmem %s2, %s164
      %p166 = pneg %p109
      %p167 = pneg %p106
      %p168 = scmp.lt.s32.totalorder %s15, 1
      %s169 = scalar_select %p168, %s15, 1
      %s170 = smul.addr %s169, 2
      %s171 = scalar_lea.vmem %s3, %s170
      %s172 = smul.u32 2, %s15
      %p173 = scmp.lt.s32.totalorder %s172, 3
      %s174 = scalar_select %p173, %s172, 3
      %s175 = smul.addr %s174, 2
      %s176 = smul.addr %s175, 8
      %s177 = scalar_lea.vmem %s0, %s176
      %s178 = smul.u32 2, %s15
      %s179 = smul.u32 2, %s15
      %p180 = scmp.lt.s32.totalorder %s179, 3
      %s181 = scalar_select %p180, %s179, 3
      %s182 = smul.addr %s181, 2
      %s183 = smul.addr %s182, 4
      %s184 = scalar_lea.vmem %s2, %s183
      %s185 = smul.u32 2, %s15
      %p186 = scmp.lt.s32.totalorder %s15, 1
      %s187 = scalar_select %p186, %s15, 1
      %s188 = smul.addr %s187, 2
      %s189 = scalar_lea.vmem %s3, %s188
      %v191 = vld [vmem:[%s177] sm:$0xff]
      %v192 = vld [vmem:[%s177 + $0x8] sm:$0xff]
      %v193 = vld [vmem:[%s177 + $0x10] sm:$0xff]
      %v194 = vld [vmem:[%s177 + $0x18] sm:$0xff]
      %v195 = vld [vmem:[%s1] sm:$0xff]
      %v196 = vld [vmem:[%s1 + $0x8] sm:$0xf]
      %v197 = vpack.c.bf16 %v191, %v191
      %v198 = vpack.c.bf16 %v192, %v192
      %v199 = vpack.c.bf16 %v193, %v193
      %v200 = vpack.c.bf16 %v194, %v194
      %v205 = vunpack.c.l.b16 %v197
      %v206 = vunpack.c.l.b16 %v198
      %v207 = vunpack.c.l.b16 %v199
      %v208 = vunpack.c.l.b16 %v200
      %v209 = vpack.c.b16 %v206, %v205
      %v210 = vpack.c.b16 %v208, %v207
      %v213 = vunpack.c.l.b16 %v195
      %v214 = vunpack.c.h.b16 %v195
      %v215 = vunpack.c.l.b16 %v196
      %v216 = vpack.c.b16 %v213, %v213
      %v217 = vpack.c.b16 %v214, %v214
      %v218 = vpack.c.b16 %v215, %v215
      %vm219 = vcmask 64512
      %v221 = vsel %vm219, %v209, 0
      %v224 = vsel %vm219, %v210, 0
      %vm226 = vcmask 1043456
      %v228 = vsel %vm226, %v216, 0
      %v231 = vsel %vm226, %v217, 0
      %v234 = vsel %vm226, %v218, 0
      %236 = vmatpush.bf16.msra.mxu0 0
      %237 = vmatpush.bf16.msra.mxu0 0
      %238 = vmatpush.bf16.msra.mxu0 0
      %239 = vmatpush.bf16.msra.mxu0 0
      %240 = vmatpush.bf16.msra.mxu0 0
      %241 = vmatpush.bf16.msra.mxu0 0
      %242 = vmatpush.bf16.msra.mxu0 0
      %243 = vmatpush.bf16.msra.mxu0 %v228
      %244 = vmatmul.bf16.gmra.mxu0 %v221
      %v245 = vpop.f32.mrf.mxu0
      %v246 = vadd.f32 0.0, %v245
      %v247 = vpop.f32.mrf.mxu0
      %v248 = vadd.f32 0.0, %v247
      %249 = vmatmul.bf16.gmra.mxu0 %v224
      %v250 = vpop.f32.mrf.mxu0
      %v251 = vadd.f32 0.0, %v250
      %v252 = vpop.f32.mrf.mxu0
      %v253 = vadd.f32 0.0, %v252
      %254 = vdwg.mxu0
      %255 = vmatpush.bf16.msra.mxu0 0
      %256 = vmatpush.bf16.msra.mxu0 0
      %257 = vmatpush.bf16.msra.mxu0 0
      %258 = vmatpush.bf16.msra.mxu0 0
      %259 = vmatpush.bf16.msra.mxu0 0
      %260 = vmatpush.bf16.msra.mxu0 0
      %261 = vmatpush.bf16.msra.mxu0 0
      %262 = vmatpush.bf16.msra.mxu0 %v231
      %263 = vmatmul.bf16.gmra.mxu0 %v221
      %v264 = vpop.f32.mrf.mxu0
      %v265 = vadd.f32 0.0, %v264
      %v266 = vpop.f32.mrf.mxu0
      %v267 = vadd.f32 0.0, %v266
      %268 = vmatmul.bf16.gmra.mxu0 %v224
      %v269 = vpop.f32.mrf.mxu0
      %v270 = vadd.f32 0.0, %v269
      %v271 = vpop.f32.mrf.mxu0
      %v272 = vadd.f32 0.0, %v271
      %273 = vdwg.mxu0
      %274 = vmatpush.bf16.msra.mxu0 0
      %275 = vmatpush.bf16.msra.mxu0 0
      %276 = vmatpush.bf16.msra.mxu0 0
      %277 = vmatpush.bf16.msra.mxu0 0
      %278 = vmatpush.bf16.msra.mxu0 0
      %279 = vmatpush.bf16.msra.mxu0 0
      %280 = vmatpush.bf16.msra.mxu0 0
      %281 = vmatpush.bf16.msra.mxu0 %v234
      %282 = vmatmul.bf16.gmra.mxu0 %v221
      %v283 = vpop.f32.mrf.mxu0
      %v284 = vadd.f32 0.0, %v283
      %v285 = vpop.f32.mrf.mxu0
      %v286 = vadd.f32 0.0, %v285
      %287 = vmatmul.bf16.gmra.mxu0 %v224
      %v288 = vpop.f32.mrf.mxu0
      %v289 = vadd.f32 0.0, %v288
      %v290 = vpop.f32.mrf.mxu0
      %v291 = vadd.f32 0.0, %v290
      %292 = vdwg.mxu0
      %v293 = vlaneseq
      %v294 = vshrl.u32 %v293, 7
      %v295 = vadd.s32 %v294, 8
      %v296 = vrot.slane %v246, 7
      %v297 = vrot.slane %v251, 7
      %v298 = vrot.slane %v248, 7
      %v299 = vrot.slane %v253, 7
      %vm300 = vcmp.lt.s32.totalorder %v294, 1
      %v301 = vsel %vm300, %v296, %v298
      %v302 = vsel %vm300, %v297, %v299
      %v303 = vsel %vm300, %v298, %v296
      %v304 = vsel %vm300, %v299, %v297
      %vm305 = vcmp.ge.s32.totalorder %v294, 1
      %vm306 = vcmp.ge.s32.totalorder %v295, 1
      %v307 = vsel %vm305, 1, 0
      %v308 = vsel %vm306, 1, 0
      %vm309 = vcmp.eq.s32.totalorder %v307, 1
      %vm310 = vcmp.eq.s32.totalorder %v308, 1
      %v311 = vsel %vm309, %v303, 0.0
      %v312 = vsel %vm310, %v301, 0.0
      %v313 = vsel %vm309, %v304, 0.0
      %v314 = vsel %vm310, %v302, 0.0
      %v315 = vrot.slane %v284, 1
      %v316 = vrot.slane %v289, 1
      %v317 = vrot.slane %v286, 1
      %v318 = vrot.slane %v291, 1
      %vm319 = vcmp.lt.s32.totalorder %v294, 7
      %v320 = vsel %vm319, %v315, %v317
      %v321 = vsel %vm319, %v316, %v318
      %v322 = vsel %vm319, %v317, %v315
      %v323 = vsel %vm319, %v318, %v316
      %vm324 = vcmp.lt.s32.totalorder %v294, 15
      %vm325 = vcmp.lt.s32.totalorder %v295, 15
      %v326 = vsel %vm324, 1, 0
      %v327 = vsel %vm325, 1, 0
      %vm328 = vcmp.eq.s32.totalorder %v326, 1
      %vm329 = vcmp.eq.s32.totalorder %v327, 1
      %v330 = vsel %vm328, %v320, 0.0
      %v331 = vsel %vm329, %v322, 0.0
      %v332 = vsel %vm328, %v321, 0.0
      %v333 = vsel %vm329, %v323, 0.0
      %v334 = vadd.f32 %v311, %v265
      %v335 = vadd.f32 %v312, %v267
      %v336 = vadd.f32 %v313, %v270
      %v337 = vadd.f32 %v314, %v272
      %v338 = vadd.f32 %v334, %v330
      %v339 = vadd.f32 %v335, %v331
      %v340 = vadd.f32 %v336, %v332
      %v341 = vadd.f32 %v337, %v333
      %v342 = vpack.c.bf16 %v338, %v338
      %v343 = vpack.c.bf16 %v339, %v339
      %v344 = vpack.c.bf16 %v340, %v340
      %v345 = vpack.c.bf16 %v341, %v341
      %346 = vst [vmem:[%s184] sm:$0xf] %v342
      %347 = vst [vmem:[%s184 + $0x4] sm:$0xf] %v343
      %348 = vst [vmem:[%s184 + $0x8] sm:$0xf] %v344
      %349 = vst [vmem:[%s184 + $0xc] sm:$0xf] %v345
      %s350 = smul.u32 %s15, 2
      %v351 = vstv %s350
      %v352 = vadd.s32 %v351, 1
      %vm353 = vcmp.lt.s32.totalorder %v351, 4
      %vm354 = vcmp.lt.s32.totalorder %v352, 4
      %v355 = vsel %vm353, 1, 0
      %v356 = vsel %vm354, 1, 0
      %vm357 = vcmp.eq.s32.totalorder %v355, 1
      %vm358 = vcmp.eq.s32.totalorder %v356, 1
      %v359 = vsel %vm357, %v338, 0.0
      %v360 = vsel %vm357, %v339, 0.0
      %v361 = vsel %vm358, %v340, 0.0
      %v362 = vsel %vm358, %v341, 0.0
      %v363 = vadd.f32 %v359, %v360
      %v364 = vadd.f32 %v363, %v361
      %v365 = vadd.f32 %v364, %v362
      %v366 = vrot.slane %v365, 4
      %v367 = vadd.f32 %v365, %v366
      %v368 = vrot.slane %v367, 2
      %v369 = vadd.f32 %v367, %v368
      %v370 = vrot.slane %v369, 1
      %v371 = vadd.f32 %v369, %v370
      %372 = vst [vmem:[%s189] sm:$0x1] %v371
      %v373 = vmul.f32 %v359, %v359
      %v374 = vmul.f32 %v360, %v360
      %v375 = vmul.f32 %v361, %v361
      %v376 = vmul.f32 %v362, %v362
      %v377 = vadd.f32 %v373, %v374
      %v378 = vadd.f32 %v377, %v375
      %v379 = vadd.f32 %v378, %v376
      %v380 = vrot.slane %v379, 4
      %v381 = vadd.f32 %v379, %v380
      %v382 = vrot.slane %v381, 2
      %v383 = vadd.f32 %v381, %v382
      %v384 = vrot.slane %v383, 1
      %v385 = vadd.f32 %v383, %v384
      %386 = vst [vmem:[%s189 + $0x1] sm:$0x1] %v385
      %s387 = smul.u32 2, %s15
      %p388 = scmp.lt.s32.totalorder %s387, 3
      %s389 = scalar_select %p388, %s387, 3
      %s390 = smul.addr %s389, 2
      %s391 = smul.addr %s390, 4
      %s392 = scalar_lea.vmem %s2, %s391
      %p393 = scmp.lt.s32.totalorder %s15, 1
      %s394 = scalar_select %p393, %s15, 1
      %s395 = smul.addr %s394, 2
      %s396 = scalar_lea.vmem %s3, %s395
      // Predicated region
      $region29: #{tcn_part.5} parent=27 // pred_check
        %p397 = pneg %p80
      $region30: #{tcn_part.5} parent=27 // pred_check_branch
        %399 = sbr.rel (%p397) target = $region32
      $region31: #{tcn_part.5} parent=27 // pred_region
        %s400 = smul.u32 2, %s15
      $region32: #{tcn_part.5} parent=27 // pred_fallthru
        _
      // Predicated region
      $region33: #{tcn_part.5} parent=27 // pred_check
        %p401 = pneg %p106
      $region34: #{tcn_part.5} parent=27 // pred_check_branch
        %403 = sbr.rel (%p401) target = $region36
      $region35: #{tcn_part.5} parent=27 // pred_region
        _
      $region36: #{tcn_part.5} parent=27 // pred_fallthru
        _
    $region28: #{tcn_part.5} parent=5 // pred_fallthru
      _
    %p404 = scmp.le.s32.totalorder 2, %s10
    // Predicated region
    $region37: #{tcn_part.5} parent=5 // pred_check
      %p405 = pneg %p404
    $region38: #{tcn_part.5} parent=5 // pred_check_branch
      %407 = sbr.rel (%p405) target = $region40
    $region39: #{tcn_part.5} parent=5 // pred_region
      %s408 = ssub.s32 %s10, 2
      // Predicated region
      $region41: #{tcn_part.5} parent=39 // pred_check
        %p409 = pneg %p86
      $region42: #{tcn_part.5} parent=39 // pred_check_branch
        %411 = sbr.rel (%p409) target = $region44
      $region43: #{tcn_part.5} parent=39 // pred_region
        %s412 = smul.u32 2, %s16
        %p413 = scmp.lt.s32.totalorder %s412, 3
        %s414 = scalar_select %p413, %s412, 3
        %s415 = smul.addr %s414, 2
        %s416 = smul.addr %s415, 4
        %s417 = scalar_lea.vmem %s2, %s416
      $region44: #{tcn_part.5} parent=39 // pred_fallthru
        _
      // Predicated region
      $region45: #{tcn_part.5} parent=39 // pred_check
        %p418 = pneg %p112
      $region46: #{tcn_part.5} parent=39 // pred_check_branch
        %420 = sbr.rel (%p418) target = $region48
      $region47: #{tcn_part.5} parent=39 // pred_region
        %p421 = scmp.lt.s32.totalorder %s16, 1
        %s422 = scalar_select %p421, %s16, 1
        %s423 = smul.addr %s422, 2
        %s424 = scalar_lea.vmem %s3, %s423
      $region48: #{tcn_part.5} parent=39 // pred_fallthru
        _
    $region40: #{tcn_part.5} parent=5 // pred_fallthru
      _
  $region6: #{tcn_part.5} parent=0 // loop_footer
    %s14 = sadd.s32 1, %s10
  $region7: #{tcn_part.5} parent=0 // loop_footer_branch
    %9 = sbr.rel target = $region3
  $region8: #{tcn_part.5} parent=0 // loop_exit
    _

// kernel: tcn_part.6
$region0: #{tcn_part.6}
  #allocation0 [shape = 'u32[]', space=smem, size = 0x4, offset = 0x4, fixed_abs, tag = 'smem constant byte address 0x4 - core index']
  #allocation1 [shape = 'u32[72,128]{1,0:T(1,128)}', space=vmem, size = 0x9000, scoped, tag = 'internal scratch']
  %s0 = inlined_call_operand.vmem [shape: bf16[4,16,128], index: 0, kind: input, shape index: {}, may-alias: {0,5}]
  %s1 = inlined_call_operand.vmem [shape: f32[2,128], index: 1, kind: input, shape index: {}]
  %s2 = inlined_call_operand.vmem [shape: f32[1,128], index: 2, kind: input, shape index: {}]
  %s3 = inlined_call_operand.vmem [shape: f32[1,128], index: 3, kind: input, shape index: {}]
  %s4 = inlined_call_operand.hbm [shape: bf16[128,384], index: 4, kind: input, shape index: {}]
  %s5 = inlined_call_operand.vmem [shape: bf16[4,16,128], index: 5, kind: output, shape index: {0}, may-alias: {0,5}]
  %s6 = inlined_call_operand.vmem [shape: f32[2,2,128], index: 6, kind: output, shape index: {1}]
  %7 = xla_tuple %s5, %s6
  %s8 = sld [smem:[#allocation0]]
  $region65: #{tcn_part.6} parent=0
    _
  %s10 = ssub.s32 1, %s8
  %s11 = scalar_select 0, %s10, %s8
  $region1: #{tcn_part.6} parent=0
    #allocation2 [shape = 'u8[98304]{0}', space=vmem, size = 0x18000, scoped, tag = 'input window, operand 4, single buffered']
    #allocation3 [shape = 's32[2]{0}', space=sflag, size = 0x8, scoped, tag = 'scoped memory for tcn_part.6']
    %12 = vsyncpa [#allocation3], 0
    loop: start=0, step=1, limit=4
    $region2: #{tcn_part.6} parent=1 // loop_pre_header
      _
    $region3: #{tcn_part.6} parent=1 // loop_header
      %s14 = sphi 0, %s18
      %p15 = scmp.ge.s32.totalorder %s14, 4
      %s24 = sphi 0, %s26
      %s27 = sphi 0, %s24
      %s28 = sphi 0, %s27
      %s44 = sphi 0, %s28
      %s48 = sphi 0, %s48
      %s50 = sphi 0, %s48
      %s51 = sphi 0, %s50
      %s65 = sphi 0, %s51
      %s69 = sphi 0, %s69
      %s71 = sphi 0, %s69
      %s72 = sphi 0, %s71
      %s86 = sphi 0, %s72
      %s90 = sphi 0, %s90
      %s92 = sphi 0, %s90
      %s93 = sphi 0, %s92
      %s107 = sphi 0, %s93
      %s111 = sphi 0, %s111
      %s113 = sphi 0, %s111
      %s114 = sphi 0, %s113
      %s128 = sphi 0, %s114
      %s134 = sphi 0, %s136
      %s137 = sphi 0, %s134
      %s138 = sphi 0, %s137
      %s154 = sphi 0, %s138
      %s160 = sphi 0, %s162
      %s163 = sphi 0, %s160
      %s164 = sphi 0, %s163
      %s180 = sphi 0, %s164
    $region4: #{tcn_part.6} parent=1 // loop_header_branch
      %17 = sbr.rel (%p15) target = $region8
    $region5: #{tcn_part.6} parent=1 // loop_body
      %s19 = ssub.s32 %s14, 1
      %s20 = ssub.s32 %s14, 2
      %s21 = sadd.s32 %s14, 1
      %s22 = ssub.s32 %s14, %s21
      %p23 = scmp.eq.s32.totalorder %s22, 0
      %s25 = sadd.s32 %s24, 1
      %s26 = scalar_select %p23, %s24, %s25
      %p29 = pneg %p23
      %p30 = scmp.eq.s32.totalorder %s14, 1
      %p31 = por %p29, %p30
      %p32 = scmp.ne.s32.totalorder %s24, %s27
      %p33 = scmp.eq.s32.totalorder %s14, 0
      %p34 = por %p32, %p33
      %p35 = scmp.ne.s32.totalorder %s24, %s27
      %p36 = scmp.eq.s32.totalorder %s19, 1
      %p37 = por %p35, %p36
      %p38 = scmp.ne.s32.totalorder %s27, %s28
      %p39 = scmp.eq.s32.totalorder %s19, 0
      %p40 = por %p38, %p39
      %p41 = scmp.ne.s32.totalorder %s27, %s28
      %p42 = scmp.eq.s32.totalorder %s20, 1
      %p43 = por %p41, %p42
      %p45 = scmp.ne.s32.totalorder %s28, %s44
      %p46 = scmp.eq.s32.totalorder %s20, 0
      %p47 = por %p45, %p46
      %s49 = sadd.s32 %s48, 1
      %p52 = scmp.eq.s32.totalorder %s14, 1
      %p53 = scmp.ne.s32.totalorder %s48, %s50
      %p54 = scmp.eq.s32.totalorder %s14, 0
      %p55 = por %p53, %p54
      %p56 = scmp.ne.s32.totalorder %s48, %s50
      %p57 = scmp.eq.s32.totalorder %s19, 1
      %p58 = por %p56, %p57
      %p59 = scmp.ne.s32.totalorder %s50, %s51
      %p60 = scmp.eq.s32.totalorder %s19, 0
      %p61 = por %p59, %p60
      %p62 = scmp.ne.s32.totalorder %s50, %s51
      %p63 = scmp.eq.s32.totalorder %s20, 1
      %p64 = por %p62, %p63
      %p66 = scmp.ne.s32.totalorder %s51, %s65
      %p67 = scmp.eq.s32.totalorder %s20, 0
      %p68 = por %p66, %p67
      %s70 = sadd.s32 %s69, 1
      %p73 = scmp.eq.s32.totalorder %s14, 1
      %p74 = scmp.ne.s32.totalorder %s69, %s71
      %p75 = scmp.eq.s32.totalorder %s14, 0
      %p76 = por %p74, %p75
      %p77 = scmp.ne.s32.totalorder %s69, %s71
      %p78 = scmp.eq.s32.totalorder %s19, 1
      %p79 = por %p77, %p78
      %p80 = scmp.ne.s32.totalorder %s71, %s72
      %p81 = scmp.eq.s32.totalorder %s19, 0
      %p82 = por %p80, %p81
      %p83 = scmp.ne.s32.totalorder %s71, %s72
      %p84 = scmp.eq.s32.totalorder %s20, 1
      %p85 = por %p83, %p84
      %p87 = scmp.ne.s32.totalorder %s72, %s86
      %p88 = scmp.eq.s32.totalorder %s20, 0
      %p89 = por %p87, %p88
      %s91 = sadd.s32 %s90, 1
      %p94 = scmp.eq.s32.totalorder %s14, 1
      %p95 = scmp.ne.s32.totalorder %s90, %s92
      %p96 = scmp.eq.s32.totalorder %s14, 0
      %p97 = por %p95, %p96
      %p98 = scmp.ne.s32.totalorder %s90, %s92
      %p99 = scmp.eq.s32.totalorder %s19, 1
      %p100 = por %p98, %p99
      %p101 = scmp.ne.s32.totalorder %s92, %s93
      %p102 = scmp.eq.s32.totalorder %s19, 0
      %p103 = por %p101, %p102
      %p104 = scmp.ne.s32.totalorder %s92, %s93
      %p105 = scmp.eq.s32.totalorder %s20, 1
      %p106 = por %p104, %p105
      %p108 = scmp.ne.s32.totalorder %s93, %s107
      %p109 = scmp.eq.s32.totalorder %s20, 0
      %p110 = por %p108, %p109
      %s112 = sadd.s32 %s111, 1
      %p115 = scmp.eq.s32.totalorder %s14, 1
      %p116 = scmp.ne.s32.totalorder %s111, %s113
      %p117 = scmp.eq.s32.totalorder %s14, 0
      %p118 = por %p116, %p117
      %p119 = scmp.ne.s32.totalorder %s111, %s113
      %p120 = scmp.eq.s32.totalorder %s19, 1
      %p121 = por %p119, %p120
      %p122 = scmp.ne.s32.totalorder %s113, %s114
      %p123 = scmp.eq.s32.totalorder %s19, 0
      %p124 = por %p122, %p123
      %p125 = scmp.ne.s32.totalorder %s113, %s114
      %p126 = scmp.eq.s32.totalorder %s20, 1
      %p127 = por %p125, %p126
      %p129 = scmp.ne.s32.totalorder %s114, %s128
      %p130 = scmp.eq.s32.totalorder %s20, 0
      %p131 = por %p129, %p130
      %s132 = ssub.s32 %s14, %s21
      %p133 = scmp.eq.s32.totalorder %s132, 0
      %s135 = sadd.s32 %s134, 1
      %s136 = scalar_select %p133, %s134, %s135
      %p139 = pneg %p133
      %p140 = scmp.eq.s32.totalorder %s14, 1
      %p141 = por %p139, %p140
      %p142 = scmp.ne.s32.totalorder %s134, %s137
      %p143 = scmp.eq.s32.totalorder %s14, 0
      %p144 = por %p142, %p143
      %p145 = scmp.ne.s32.totalorder %s134, %s137
      %p146 = scmp.eq.s32.totalorder %s19, 1
      %p147 = por %p145, %p146
      %p148 = scmp.ne.s32.totalorder %s137, %s138
      %p149 = scmp.eq.s32.totalorder %s19, 0
      %p150 = por %p148, %p149
      %p151 = scmp.ne.s32.totalorder %s137, %s138
      %p152 = scmp.eq.s32.totalorder %s20, 1
      %p153 = por %p151, %p152
      %p155 = scmp.ne.s32.totalorder %s138, %s154
      %p156 = scmp.eq.s32.totalorder %s20, 0
      %p157 = por %p155, %p156
      %s158 = ssub.s32 %s14, %s21
      %p159 = scmp.eq.s32.totalorder %s158, 0
      %s161 = sadd.s32 %s160, 1
      %s162 = scalar_select %p159, %s160, %s161
      %p165 = pneg %p159
      %p166 = scmp.eq.s32.totalorder %s14, 1
      %p167 = por %p165, %p166
      %p168 = scmp.ne.s32.totalorder %s160, %s163
      %p169 = scmp.eq.s32.totalorder %s14, 0
      %p170 = por %p168, %p169
      %p171 = scmp.ne.s32.totalorder %s160, %s163
      %p172 = scmp.eq.s32.totalorder %s19, 1
      %p173 = por %p171, %p172
      %p174 = scmp.ne.s32.totalorder %s163, %s164
      %p175 = scmp.eq.s32.totalorder %s19, 0
      %p176 = por %p174, %p175
      %p177 = scmp.ne.s32.totalorder %s163, %s164
      %p178 = scmp.eq.s32.totalorder %s20, 1
      %p179 = por %p177, %p178
      %p181 = scmp.ne.s32.totalorder %s164, %s180
      %p182 = scmp.eq.s32.totalorder %s20, 0
      %p183 = por %p181, %p182
      %p184 = scmp.le.s32.totalorder 1, %s14
      %p185 = scmp.lt.s32.totalorder %s14, 3
      %p186 = pnand %p184, %p185
      %p187 = pneg %p186
      // Predicated region
      $region9: #{tcn_part.6} parent=5 // pred_check
        _
      $region10: #{tcn_part.6} parent=5 // pred_check_branch
        %189 = sbr.rel (%p186) target = $region12
      $region11: #{tcn_part.6} parent=5 // pred_region
        %s190 = ssub.s32 %s14, 1
        // Predicated region
        $region13: #{tcn_part.6} parent=11 // pred_check
          %p191 = pneg %p61
        $region14: #{tcn_part.6} parent=11 // pred_check_branch
          %193 = sbr.rel (%p191) target = $region16
        $region15: #{tcn_part.6} parent=11 // pred_region
          _
        $region16: #{tcn_part.6} parent=11 // pred_fallthru
          _
        // Predicated region
        $region17: #{tcn_part.6} parent=11 // pred_check
          %p194 = pneg %p82
        $region18: #{tcn_part.6} parent=11 // pred_check_branch
          %196 = sbr.rel (%p194) target = $region20
        $region19: #{tcn_part.6} parent=11 // pred_region
          _
        $region20: #{tcn_part.6} parent=11 // pred_fallthru
          _
        // Predicated region
        $region21: #{tcn_part.6} parent=11 // pred_check
          %p197 = pneg %p103
        $region22: #{tcn_part.6} parent=11 // pred_check_branch
          %199 = sbr.rel (%p197) target = $region24
        $region23: #{tcn_part.6} parent=11 // pred_region
          _
        $region24: #{tcn_part.6} parent=11 // pred_fallthru
          _
        // Predicated region
        $region25: #{tcn_part.6} parent=11 // pred_check
          %p200 = pneg %p124
        $region26: #{tcn_part.6} parent=11 // pred_check_branch
          %202 = sbr.rel (%p200) target = $region28
        $region27: #{tcn_part.6} parent=11 // pred_region
          %204 = vsyncadd [#allocation3], 0
          %s205 = sshll.u32 %s4, 4
          %s206 = int_to_ptr.hbm [resolvable:$true] %s205
          %s207 = sshll.u32 [#allocation2], 4
          %s208 = int_to_ptr.vmem [resolvable:$true] %s207
          %213 = dma.hbm_to_vmem [thread:$0]  %s206, 3072, %s208, [#allocation3], 192, 192, 12
        $region28: #{tcn_part.6} parent=11 // pred_fallthru
          _
      $region12: #{tcn_part.6} parent=5 // pred_fallthru
        _
      %p214 = scmp.lt.s32.totalorder %s14, 2
      // Predicated region
      $region29: #{tcn_part.6} parent=5 // pred_check
        %p215 = pneg %p214
      $region30: #{tcn_part.6} parent=5 // pred_check_branch
        %217 = sbr.rel (%p215) target = $region32
      $region31: #{tcn_part.6} parent=5 // pred_region
        // Predicated region
        $region33: #{tcn_part.6} parent=31 // pred_check
          %p218 = pneg %p34
        $region34: #{tcn_part.6} parent=31 // pred_check_branch
          %220 = sbr.rel (%p218) target = $region36
        $region35: #{tcn_part.6} parent=31 // pred_region
          %s221 = smul.u32 2, %s14
          %p222 = scmp.lt.s32.totalorder %s221, 3
          %s223 = scalar_select %p222, %s221, 3
          %s224 = smul.addr %s223, 2
          %s225 = smul.addr %s224, 4
          %s226 = scalar_lea.vmem %s0, %s225
          %s227 = smul.u32 2, %s14
        $region36: #{tcn_part.6} parent=31 // pred_fallthru
          _
      $region32: #{tcn_part.6} parent=5 // pred_fallthru
        _
      %p228 = scmp.le.s32.totalorder 1, %s14
      %p229 = scmp.lt.s32.totalorder %s14, 3
      %p230 = pnand %p228, %p229
      %p231 = pneg %p230
      // Predicated region
      $region37: #{tcn_part.6} parent=5 // pred_check
        _
      $region38: #{tcn_part.6} parent=5 // pred_check_branch
        %233 = sbr.rel (%p230) target = $region40
      $region39: #{tcn_part.6} parent=5 // pred_region
        %s234 = ssub.s32 %s14, 1
        // Predicated region
        $region41: #{tcn_part.6} parent=39 // pred_check
          %p235 = pneg %p124
        $region42: #{tcn_part.6} parent=39 // pred_check_branch
          %237 = sbr.rel (%p235) target = $region44
        $region43: #{tcn_part.6} parent=39 // pred_region
          %239 = dma.done [#allocation3], 3072
        $region44: #{tcn_part.6} parent=39 // pred_fallthru
          _
        %s240 = smul.u32 2, %s19
        %p241 = scmp.lt.s32.totalorder %s240, 3
        %s242 = scalar_select %p241, %s240, 3
        %s243 = smul.addr %s242, 2
        %s244 = smul.addr %s243, 4
        %s245 = scalar_lea.vmem %s0, %s244
        %p246 = pneg %p40
        %p247 = pneg %p37
        %p248 = pneg %p61
        %p249 = pneg %p58
        %p250 = pneg %p82
        %p251 = pneg %p79
        %p252 = pneg %p103
        %p253 = pneg %p100
        %p254 = pneg %p124
        %p255 = pneg %p121
        %p256 = pneg %p150
        %p257 = pneg %p147
        %s258 = smul.u32 2, %s19
        %p259 = scmp.lt.s32.totalorder %s258, 3
        %s260 = scalar_select %p259, %s258, 3
        %s261 = smul.addr %s260, 2
        %s262 = smul.addr %s261, 4
        %s263 = scalar_lea.vmem %s5, %s262
        %p264 = pneg %p176
        %p265 = pneg %p173
        %p266 = scmp.lt.s32.totalorder %s19, 1
        %s267 = scalar_select %p266, %s19, 1
        %s268 = smul.addr %s267, 2
        %s269 = scalar_lea.vmem %s6, %s268
        %s270 = smul.u32 2, %s19
        %p271 = scmp.lt.s32.totalorder %s270, 3
        %s272 = scalar_select %p271, %s270, 3
        %s273 = smul.addr %s272, 2
        %s274 = smul.addr %s273, 4
        %s275 = scalar_lea.vmem %s0, %s274
        %s276 = smul.u32 2, %s19
        %s277 = smul.u32 2, %s19
        %p278 = scmp.lt.s32.totalorder %s277, 3
        %s279 = scalar_select %p278, %s277, 3
        %s280 = smul.addr %s279, 2
        %s281 = smul.addr %s280, 4
        %s282 = scalar_lea.vmem %s5, %s281
        %s283 = smul.u32 2, %s19
        %p284 = scmp.lt.s32.totalorder %s19, 1
        %s285 = scalar_select %p284, %s19, 1
        %s286 = smul.addr %s285, 2
        %s287 = scalar_lea.vmem %s6, %s286
        %v288 = vld [vmem:[%s1] sm:$0x3]
        %v289 = vmul.f32 %v288, 0.015625
        %v290 = vmul.f32 %v289, %v289
        %v292 = vrot.slane %v290, 7
        %v294 = vsub.f32 %v289, %v292
        %v295 = vmax.f32 %v294, 0.0
        %v296 = vld [vmem:[%s2] sm:$0x1]
        %v297 = vadd.f32 %v295, 1e-05
        %v298 = vrsqrt.pop %v297
        %v299 = vmul.f32 %v298, %v297
        %v300 = vmul.f32 %v299, %v298
        %v301 = vmul.f32 0.5, %v300
        %v302 = vsub.f32 1.5, %v301
        %v303 = vmul.f32 %v298, %v302
        %vm304 = vweird.f32 %v297
        %vm305 = vweird.f32 %v298
        %vm306 = vmor %vm304, %vm305
        %v307 = vsel %vm306, %v298, %v303
        %309 = vst [vmem:[#allocation1] sm:$0xff] %v307
        %s310 = scalar_lea.vmem [#allocation1], 1
        %v311 = vld [vmem:[%s310] ss:$9 sm:$0xff]
        %v313 = vmul.f32 %v296, %v311
        %v314 = vld [vmem:[%s3] sm:$0x1]
        %v315 = vmul.f32 %v289, %v313
        %v316 = vsub.f32 %v314, %v315
        %v317 = vld [vmem:[%s275] sm:$0xf]
        %v318 = vld [vmem:[%s275 + $0x4] sm:$0xf]
        %v319 = vld [vmem:[%s275 + $0x8] sm:$0xf]
        %v320 = vld [vmem:[%s275 + $0xc] sm:$0xf]
        %v321 = vunpack.c.l.bf16 %v317
        %v322 = vunpack.c.l.bf16 %v318
        %v323 = vunpack.c.l.bf16 %v319
        %v324 = vunpack.c.l.bf16 %v320
        %v326 = vperm.slane %v313, 0
        %v328 = vmul.f32 %v321, %v326
        %v329 = vmul.f32 %v322, %v326
        %v330 = vmul.f32 %v323, %v326
        %v331 = vmul.f32 %v324, %v326
        %v333 = vperm.slane %v316, 0
        %v335 = vadd.f32 %v328, %v333
        %v336 = vadd.f32 %v329, %v333
        %v337 = vadd.f32 %v330, %v333
        %v338 = vadd.f32 %v331, %v333
        %v339 = vmax.f32 %v335, 0.0
        %v340 = vmax.f32 %v336, 0.0
        %v341 = vmax.f32 %v337, 0.0
        %v342 = vmax.f32 %v338, 0.0
        %v343 = vld [vmem:[#allocation2] sm:$0xff]
        %v344 = vld [vmem:[#allocation2 + $0x8] sm:$0xf]
        %v345 = vld [vmem:[#allocation2 + $0xc] sm:$0xff]
        %v346 = vld [vmem:[#allocation2 + $0x14] sm:$0xf]
        %v347 = vld [vmem:[#allocation2 + $0x18] sm:$0xff]
        %v348 = vld [vmem:[#allocation2 + $0x20] sm:$0xf]
        %v349 = vld [vmem:[#allocation2 + $0x24] sm:$0xff]
        %v350 = vld [vmem:[#allocation2 + $0x2c] sm:$0xf]
        %v351 = vld [vmem:[#allocation2 + $0x30] sm:$0xff]
        %v352 = vld [vmem:[#allocation2 + $0x38] sm:$0xf]
        %v353 = vld [vmem:[#allocation2 + $0x3c] sm:$0xff]
        %v354 = vld [vmem:[#allocation2 + $0x44] sm:$0xf]
        %v355 = vld [vmem:[#allocation2 + $0x48] sm:$0xff]
        %v356 = vld [vmem:[#allocation2 + $0x50] sm:$0xf]
        %v357 = vld [vmem:[#allocation2 + $0x54] sm:$0xff]
        %v358 = vld [vmem:[#allocation2 + $0x5c] sm:$0xf]
        %v359 = vld [vmem:[#allocation2 + $0x60] sm:$0xff]
        %v360 = vld [vmem:[#allocation2 + $0x68] sm:$0xf]
        %v361 = vld [vmem:[#allocation2 + $0x6c] sm:$0xff]
        %v362 = vld [vmem:[#allocation2 + $0x74] sm:$0xf]
        %v363 = vld [vmem:[#allocation2 + $0x78] sm:$0xff]
        %v364 = vld [vmem:[#allocation2 + $0x80] sm:$0xf]
        %v365 = vld [vmem:[#allocation2 + $0x84] sm:$0xff]
        %v366 = vld [vmem:[#allocation2 + $0x8c] sm:$0xf]
        %v367 = vld [vmem:[#allocation2 + $0x90] sm:$0xff]
        %v368 = vld [vmem:[#allocation2 + $0x98] sm:$0xf]
        %v369 = vld [vmem:[#allocation2 + $0x9c] sm:$0xff]
        %v370 = vld [vmem:[#allocation2 + $0xa4] sm:$0xf]
        %v371 = vld [vmem:[#allocation2 + $0xa8] sm:$0xff]
        %v372 = vld [vmem:[#allocation2 + $0xb0] sm:$0xf]
        %v373 = vld [vmem:[#allocation2 + $0xb4] sm:$0xff]
        %v374 = vld [vmem:[#allocation2 + $0xbc] sm:$0xf]
        %v375 = vpack.c.bf16 %v339, %v339
        %v376 = vpack.c.bf16 %v340, %v340
        %v377 = vpack.c.bf16 %v341, %v341
        %v378 = vpack.c.bf16 %v342, %v342
        %v383 = vunpack.c.l.b16 %v375
        %v384 = vunpack.c.l.b16 %v376
        %v385 = vunpack.c.l.b16 %v377
        %v386 = vunpack.c.l.b16 %v378
        %v387 = vpack.c.b16 %v384, %v383
        %v388 = vpack.c.b16 %v386, %v385
        %v423 = vunpack.c.l.b16 %v343
        %v424 = vunpack.c.h.b16 %v343
        %v425 = vunpack.c.l.b16 %v344
        %v426 = vunpack.c.l.b16 %v345
        %v427 = vunpack.c.h.b16 %v345
        %v428 = vunpack.c.l.b16 %v346
        %v429 = vunpack.c.l.b16 %v347
        %v430 = vunpack.c.h.b16 %v347
        %v431 = vunpack.c.l.b16 %v348
        %v432 = vunpack.c.l.b16 %v349
        %v433 = vunpack.c.h.b16 %v349
        %v434 = vunpack.c.l.b16 %v350
        %v435 = vunpack.c.l.b16 %v351
        %v436 = vunpack.c.h.b16 %v351
        %v437 = vunpack.c.l.b16 %v352
        %v438 = vunpack.c.l.b16 %v353
        %v439 = vunpack.c.h.b16 %v353
        %v440 = vunpack.c.l.b16 %v354
        %v441 = vunpack.c.l.b16 %v355
        %v442 = vunpack.c.h.b16 %v355
        %v443 = vunpack.c.l.b16 %v356
        %v444 = vunpack.c.l.b16 %v357
        %v445 = vunpack.c.h.b16 %v357
        %v446 = vunpack.c.l.b16 %v358
        %v447 = vunpack.c.l.b16 %v359
        %v448 = vunpack.c.h.b16 %v359
        %v449 = vunpack.c.l.b16 %v360
        %v450 = vunpack.c.l.b16 %v361
        %v451 = vunpack.c.h.b16 %v361
        %v452 = vunpack.c.l.b16 %v362
        %v453 = vunpack.c.l.b16 %v363
        %v454 = vunpack.c.h.b16 %v363
        %v455 = vunpack.c.l.b16 %v364
        %v456 = vunpack.c.l.b16 %v365
        %v457 = vunpack.c.h.b16 %v365
        %v458 = vunpack.c.l.b16 %v366
        %v459 = vunpack.c.l.b16 %v367
        %v460 = vunpack.c.h.b16 %v367
        %v461 = vunpack.c.l.b16 %v368
        %v462 = vunpack.c.l.b16 %v369
        %v463 = vunpack.c.h.b16 %v369
        %v464 = vunpack.c.l.b16 %v370
        %v465 = vunpack.c.l.b16 %v371
        %v466 = vunpack.c.h.b16 %v371
        %v467 = vunpack.c.l.b16 %v372
        %v468 = vunpack.c.l.b16 %v373
        %v469 = vunpack.c.h.b16 %v373
        %v470 = vunpack.c.l.b16 %v374
        %v471 = vpack.c.b16 %v426, %v423
        %v472 = vpack.c.b16 %v427, %v424
        %v473 = vpack.c.b16 %v428, %v425
        %v474 = vpack.c.b16 %v432, %v429
        %v475 = vpack.c.b16 %v433, %v430
        %v476 = vpack.c.b16 %v434, %v431
        %v477 = vpack.c.b16 %v438, %v435
        %v478 = vpack.c.b16 %v439, %v436
        %v479 = vpack.c.b16 %v440, %v437
        %v480 = vpack.c.b16 %v444, %v441
        %v481 = vpack.c.b16 %v445, %v442
        %v482 = vpack.c.b16 %v446, %v443
        %v483 = vpack.c.b16 %v450, %v447
        %v484 = vpack.c.b16 %v451, %v448
        %v485 = vpack.c.b16 %v452, %v449
        %v486 = vpack.c.b16 %v456, %v453
        %v487 = vpack.c.b16 %v457, %v454
        %v488 = vpack.c.b16 %v458, %v455
        %v489 = vpack.c.b16 %v462, %v459
        %v490 = vpack.c.b16 %v463, %v460
        %v491 = vpack.c.b16 %v464, %v461
        %v492 = vpack.c.b16 %v468, %v465
        %v493 = vpack.c.b16 %v469, %v466
        %v494 = vpack.c.b16 %v470, %v467
        %519 = vmatpush.bf16.msra.mxu0 %v492
        %520 = vmatpush.bf16.msra.mxu0 %v489
        %521 = vmatpush.bf16.msra.mxu0 %v486
        %522 = vmatpush.bf16.msra.mxu0 %v483
        %523 = vmatpush.bf16.msra.mxu0 %v480
        %524 = vmatpush.bf16.msra.mxu0 %v477
        %525 = vmatpush.bf16.msra.mxu0 %v474
        %526 = vmatpush.bf16.msra.mxu0 %v471
        %527 = vmatmul.bf16.gmra.mxu0 %v387
        %v528 = vpop.f32.mrf.mxu0
        %v529 = vadd.f32 0.0, %v528
        %v530 = vpop.f32.mrf.mxu0
        %v531 = vadd.f32 0.0, %v530
        %532 = vmatmul.bf16.gmra.mxu0 %v388
        %v533 = vpop.f32.mrf.mxu0
        %v534 = vadd.f32 0.0, %v533
        %v535 = vpop.f32.mrf.mxu0
        %v536 = vadd.f32 0.0, %v535
        %537 = vdwg.mxu0
        %538 = vmatpush.bf16.msra.mxu0 %v493
        %539 = vmatpush.bf16.msra.mxu0 %v490
        %540 = vmatpush.bf16.msra.mxu0 %v487
        %541 = vmatpush.bf16.msra.mxu0 %v484
        %542 = vmatpush.bf16.msra.mxu0 %v481
        %543 = vmatpush.bf16.msra.mxu0 %v478
        %544 = vmatpush.bf16.msra.mxu0 %v475
        %545 = vmatpush.bf16.msra.mxu0 %v472
        %546 = vmatmul.bf16.gmra.mxu0 %v387
        %v547 = vpop.f32.mrf.mxu0
        %v548 = vadd.f32 0.0, %v547
        %v549 = vpop.f32.mrf.mxu0
        %v550 = vadd.f32 0.0, %v549
        %551 = vmatmul.bf16.gmra.mxu0 %v388
        %v552 = vpop.f32.mrf.mxu0
        %v553 = vadd.f32 0.0, %v552
        %v554 = vpop.f32.mrf.mxu0
        %v555 = vadd.f32 0.0, %v554
        %556 = vdwg.mxu0
        %557 = vmatpush.bf16.msra.mxu0 %v494
        %558 = vmatpush.bf16.msra.mxu0 %v491
        %559 = vmatpush.bf16.msra.mxu0 %v488
        %560 = vmatpush.bf16.msra.mxu0 %v485
        %561 = vmatpush.bf16.msra.mxu0 %v482
        %562 = vmatpush.bf16.msra.mxu0 %v479
        %563 = vmatpush.bf16.msra.mxu0 %v476
        %564 = vmatpush.bf16.msra.mxu0 %v473
        %565 = vmatmul.bf16.gmra.mxu0 %v387
        %v566 = vpop.f32.mrf.mxu0
        %v567 = vadd.f32 0.0, %v566
        %v568 = vpop.f32.mrf.mxu0
        %v569 = vadd.f32 0.0, %v568
        %570 = vmatmul.bf16.gmra.mxu0 %v388
        %v571 = vpop.f32.mrf.mxu0
        %v572 = vadd.f32 0.0, %v571
        %v573 = vpop.f32.mrf.mxu0
        %v574 = vadd.f32 0.0, %v573
        %575 = vdwg.mxu0
        %v576 = vlaneseq
        %v577 = vshrl.u32 %v576, 7
        %v578 = vadd.s32 %v577, 8
        %v579 = vrot.slane %v529, 6
        %v580 = vrot.slane %v534, 6
        %v581 = vrot.slane %v531, 6
        %v582 = vrot.slane %v536, 6
        %vm583 = vcmp.lt.s32.totalorder %v577, 2
        %v584 = vsel %vm583, %v579, %v581
        %v585 = vsel %vm583, %v580, %v582
        %v586 = vsel %vm583, %v581, %v579
        %v587 = vsel %vm583, %v582, %v580
        %vm588 = vcmp.ge.s32.totalorder %v577, 2
        %vm589 = vcmp.ge.s32.totalorder %v578, 2
        %v590 = vsel %vm588, 1, 0
        %v591 = vsel %vm589, 1, 0
        %vm592 = vcmp.eq.s32.totalorder %v590, 1
        %vm593 = vcmp.eq.s32.totalorder %v591, 1
        %v594 = vsel %vm592, %v586, 0.0
        %v595 = vsel %vm593, %v584, 0.0
        %v596 = vsel %vm592, %v587, 0.0
        %v597 = vsel %vm593, %v585, 0.0
        %v598 = vrot.slane %v567, 2
        %v599 = vrot.slane %v572, 2
        %v600 = vrot.slane %v569, 2
        %v601 = vrot.slane %v574, 2
        %vm602 = vcmp.lt.s32.totalorder %v577, 6
        %v603 = vsel %vm602, %v598, %v600
        %v604 = vsel %vm602, %v599, %v601
        %v605 = vsel %vm602, %v600, %v598
        %v606 = vsel %vm602, %v601, %v599
        %vm607 = vcmp.lt.s32.totalorder %v577, 14
        %vm608 = vcmp.lt.s32.totalorder %v578, 14
        %v609 = vsel %vm607, 1, 0
        %v610 = vsel %vm608, 1, 0
        %vm611 = vcmp.eq.s32.totalorder %v609, 1
        %vm612 = vcmp.eq.s32.totalorder %v610, 1
        %v613 = vsel %vm611, %v603, 0.0
        %v614 = vsel %vm612, %v605, 0.0
        %v615 = vsel %vm611, %v604, 0.0
        %v616 = vsel %vm612, %v606, 0.0
        %v617 = vadd.f32 %v594, %v548
        %v618 = vadd.f32 %v595, %v550
        %v619 = vadd.f32 %v596, %v553
        %v620 = vadd.f32 %v597, %v555
        %v621 = vadd.f32 %v617, %v613
        %v622 = vadd.f32 %v618, %v614
        %v623 = vadd.f32 %v619, %v615
        %v624 = vadd.f32 %v620, %v616
        %v625 = vpack.c.bf16 %v621, %v621
        %v626 = vpack.c.bf16 %v622, %v622
        %v627 = vpack.c.bf16 %v623, %v623
        %v628 = vpack.c.bf16 %v624, %v624
        %629 = vst [vmem:[%s282] sm:$0xf] %v625
        %630 = vst [vmem:[%s282 + $0x4] sm:$0xf] %v626
        %631 = vst [vmem:[%s282 + $0x8] sm:$0xf] %v627
        %632 = vst [vmem:[%s282 + $0xc] sm:$0xf] %v628
        %s633 = smul.u32 %s19, 2
        %v634 = vstv %s633
        %v635 = vadd.s32 %v634, 1
        %vm636 = vcmp.lt.s32.totalorder %v634, 4
        %vm637 = vcmp.lt.s32.totalorder %v635, 4
        %v638 = vsel %vm636, 1, 0
        %v639 = vsel %vm637, 1, 0
        %vm640 = vcmp.eq.s32.totalorder %v638, 1
        %vm641 = vcmp.eq.s32.totalorder %v639, 1
        %v642 = vsel %vm640, %v621, 0.0
        %v643 = vsel %vm640, %v622, 0.0
        %v644 = vsel %vm641, %v623, 0.0
        %v645 = vsel %vm641, %v624, 0.0
        %v646 = vadd.f32 %v642, %v643
        %v647 = vadd.f32 %v646, %v644
        %v648 = vadd.f32 %v647, %v645
        %v649 = vrot.slane %v648, 4
        %v650 = vadd.f32 %v648, %v649
        %v651 = vrot.slane %v650, 2
        %v652 = vadd.f32 %v650, %v651
        %v653 = vrot.slane %v652, 1
        %v654 = vadd.f32 %v652, %v653
        %655 = vst [vmem:[%s287] sm:$0x1] %v654
        %v656 = vmul.f32 %v642, %v642
        %v657 = vmul.f32 %v643, %v643
        %v658 = vmul.f32 %v644, %v644
        %v659 = vmul.f32 %v645, %v645
        %v660 = vadd.f32 %v656, %v657
        %v661 = vadd.f32 %v660, %v658
        %v662 = vadd.f32 %v661, %v659
        %v663 = vrot.slane %v662, 4
        %v664 = vadd.f32 %v662, %v663
        %v665 = vrot.slane %v664, 2
        %v666 = vadd.f32 %v664, %v665
        %v667 = vrot.slane %v666, 1
        %v668 = vadd.f32 %v666, %v667
        %669 = vst [vmem:[%s287 + $0x1] sm:$0x1] %v668
        %s670 = smul.u32 2, %s19
        %p671 = scmp.lt.s32.totalorder %s670, 3
        %s672 = scalar_select %p671, %s670, 3
        %s673 = smul.addr %s672, 2
        %s674 = smul.addr %s673, 4
        %s675 = scalar_lea.vmem %s5, %s674
        %p676 = scmp.lt.s32.totalorder %s19, 1
        %s677 = scalar_select %p676, %s19, 1
        %s678 = smul.addr %s677, 2
        %s679 = scalar_lea.vmem %s6, %s678
        // Predicated region
        $region45: #{tcn_part.6} parent=39 // pred_check
          %p680 = pneg %p147
        $region46: #{tcn_part.6} parent=39 // pred_check_branch
          %682 = sbr.rel (%p680) target = $region48
        $region47: #{tcn_part.6} parent=39 // pred_region
          %s683 = smul.u32 2, %s19
        $region48: #{tcn_part.6} parent=39 // pred_fallthru
          _
        // Predicated region
        $region49: #{tcn_part.6} parent=39 // pred_check
          %p684 = pneg %p173
        $region50: #{tcn_part.6} parent=39 // pred_check_branch
          %686 = sbr.rel (%p684) target = $region52
        $region51: #{tcn_part.6} parent=39 // pred_region
          _
        $region52: #{tcn_part.6} parent=39 // pred_fallthru
          _
      $region40: #{tcn_part.6} parent=5 // pred_fallthru
        _
      %p687 = scmp.le.s32.totalorder 2, %s14
      // Predicated region
      $region53: #{tcn_part.6} parent=5 // pred_check
        %p688 = pneg %p687
      $region54: #{tcn_part.6} parent=5 // pred_check_branch
        %690 = sbr.rel (%p688) target = $region56
      $region55: #{tcn_part.6} parent=5 // pred_region
        %s691 = ssub.s32 %s14, 2
        // Predicated region
        $region57: #{tcn_part.6} parent=55 // pred_check
          %p692 = pneg %p153
        $region58: #{tcn_part.6} parent=55 // pred_check_branch
          %694 = sbr.rel (%p692) target = $region60
        $region59: #{tcn_part.6} parent=55 // pred_region
          %s695 = smul.u32 2, %s20
          %p696 = scmp.lt.s32.totalorder %s695, 3
          %s697 = scalar_select %p696, %s695, 3
          %s698 = smul.addr %s697, 2
          %s699 = smul.addr %s698, 4
          %s700 = scalar_lea.vmem %s5, %s699
        $region60: #{tcn_part.6} parent=55 // pred_fallthru
          _
        // Predicated region
        $region61: #{tcn_part.6} parent=55 // pred_check
          %p701 = pneg %p179
        $region62: #{tcn_part.6} parent=55 // pred_check_branch
          %703 = sbr.rel (%p701) target = $region64
        $region63: #{tcn_part.6} parent=55 // pred_region
          %p704 = scmp.lt.s32.totalorder %s20, 1
          %s705 = scalar_select %p704, %s20, 1
          %s706 = smul.addr %s705, 2
          %s707 = scalar_lea.vmem %s6, %s706
        $region64: #{tcn_part.6} parent=55 // pred_fallthru
          _
      $region56: #{tcn_part.6} parent=5 // pred_fallthru
        _
    $region6: #{tcn_part.6} parent=1 // loop_footer
      %s18 = sadd.s32 1, %s14
    $region7: #{tcn_part.6} parent=1 // loop_footer_branch
      %13 = sbr.rel target = $region3
    $region8: #{tcn_part.6} parent=1 // loop_exit
      _
    %708 = vsyncpa [#allocation3], 1
    %s709 = scalar_lea.sflag [#allocation3], 1
    %710 = vsyncpa %s709, 1

// kernel: tcn_part.7
$region0: #{tcn_part.7}
  #allocation0 [shape = 'u32[]', space=smem, size = 0x4, offset = 0x4, fixed_abs, tag = 'smem constant byte address 0x4 - core index']
  #allocation1 [shape = 'u32[72,128]{1,0:T(1,128)}', space=vmem, size = 0x9000, scoped, tag = 'internal scratch']
  %s0 = inlined_call_operand.vmem [shape: bf16[4,16,128], index: 0, kind: input, shape index: {}, may-alias: {0,5}]
  %s1 = inlined_call_operand.vmem [shape: f32[2,128], index: 1, kind: input, shape index: {}]
  %s2 = inlined_call_operand.vmem [shape: f32[1,128], index: 2, kind: input, shape index: {}]
  %s3 = inlined_call_operand.vmem [shape: f32[1,128], index: 3, kind: input, shape index: {}]
  %s4 = inlined_call_operand.hbm [shape: bf16[128,384], index: 4, kind: input, shape index: {}]
  %s5 = inlined_call_operand.vmem [shape: bf16[4,16,128], index: 5, kind: output, shape index: {0}, may-alias: {0,5}]
  %s6 = inlined_call_operand.vmem [shape: f32[2,2,128], index: 6, kind: output, shape index: {1}]
  %7 = xla_tuple %s5, %s6
  %s8 = sld [smem:[#allocation0]]
  $region65: #{tcn_part.7} parent=0
    _
  %s10 = ssub.s32 1, %s8
  %s11 = scalar_select 0, %s10, %s8
  $region1: #{tcn_part.7} parent=0
    #allocation2 [shape = 'u8[98304]{0}', space=vmem, size = 0x18000, scoped, tag = 'input window, operand 4, single buffered']
    #allocation3 [shape = 's32[2]{0}', space=sflag, size = 0x8, scoped, tag = 'scoped memory for tcn_part.7']
    %12 = vsyncpa [#allocation3], 0
    loop: start=0, step=1, limit=4
    $region2: #{tcn_part.7} parent=1 // loop_pre_header
      _
    $region3: #{tcn_part.7} parent=1 // loop_header
      %s14 = sphi 0, %s18
      %p15 = scmp.ge.s32.totalorder %s14, 4
      %s24 = sphi 0, %s26
      %s27 = sphi 0, %s24
      %s28 = sphi 0, %s27
      %s44 = sphi 0, %s28
      %s48 = sphi 0, %s48
      %s50 = sphi 0, %s48
      %s51 = sphi 0, %s50
      %s65 = sphi 0, %s51
      %s69 = sphi 0, %s69
      %s71 = sphi 0, %s69
      %s72 = sphi 0, %s71
      %s86 = sphi 0, %s72
      %s90 = sphi 0, %s90
      %s92 = sphi 0, %s90
      %s93 = sphi 0, %s92
      %s107 = sphi 0, %s93
      %s111 = sphi 0, %s111
      %s113 = sphi 0, %s111
      %s114 = sphi 0, %s113
      %s128 = sphi 0, %s114
      %s134 = sphi 0, %s136
      %s137 = sphi 0, %s134
      %s138 = sphi 0, %s137
      %s154 = sphi 0, %s138
      %s160 = sphi 0, %s162
      %s163 = sphi 0, %s160
      %s164 = sphi 0, %s163
      %s180 = sphi 0, %s164
    $region4: #{tcn_part.7} parent=1 // loop_header_branch
      %17 = sbr.rel (%p15) target = $region8
    $region5: #{tcn_part.7} parent=1 // loop_body
      %s19 = ssub.s32 %s14, 1
      %s20 = ssub.s32 %s14, 2
      %s21 = sadd.s32 %s14, 1
      %s22 = ssub.s32 %s14, %s21
      %p23 = scmp.eq.s32.totalorder %s22, 0
      %s25 = sadd.s32 %s24, 1
      %s26 = scalar_select %p23, %s24, %s25
      %p29 = pneg %p23
      %p30 = scmp.eq.s32.totalorder %s14, 1
      %p31 = por %p29, %p30
      %p32 = scmp.ne.s32.totalorder %s24, %s27
      %p33 = scmp.eq.s32.totalorder %s14, 0
      %p34 = por %p32, %p33
      %p35 = scmp.ne.s32.totalorder %s24, %s27
      %p36 = scmp.eq.s32.totalorder %s19, 1
      %p37 = por %p35, %p36
      %p38 = scmp.ne.s32.totalorder %s27, %s28
      %p39 = scmp.eq.s32.totalorder %s19, 0
      %p40 = por %p38, %p39
      %p41 = scmp.ne.s32.totalorder %s27, %s28
      %p42 = scmp.eq.s32.totalorder %s20, 1
      %p43 = por %p41, %p42
      %p45 = scmp.ne.s32.totalorder %s28, %s44
      %p46 = scmp.eq.s32.totalorder %s20, 0
      %p47 = por %p45, %p46
      %s49 = sadd.s32 %s48, 1
      %p52 = scmp.eq.s32.totalorder %s14, 1
      %p53 = scmp.ne.s32.totalorder %s48, %s50
      %p54 = scmp.eq.s32.totalorder %s14, 0
      %p55 = por %p53, %p54
      %p56 = scmp.ne.s32.totalorder %s48, %s50
      %p57 = scmp.eq.s32.totalorder %s19, 1
      %p58 = por %p56, %p57
      %p59 = scmp.ne.s32.totalorder %s50, %s51
      %p60 = scmp.eq.s32.totalorder %s19, 0
      %p61 = por %p59, %p60
      %p62 = scmp.ne.s32.totalorder %s50, %s51
      %p63 = scmp.eq.s32.totalorder %s20, 1
      %p64 = por %p62, %p63
      %p66 = scmp.ne.s32.totalorder %s51, %s65
      %p67 = scmp.eq.s32.totalorder %s20, 0
      %p68 = por %p66, %p67
      %s70 = sadd.s32 %s69, 1
      %p73 = scmp.eq.s32.totalorder %s14, 1
      %p74 = scmp.ne.s32.totalorder %s69, %s71
      %p75 = scmp.eq.s32.totalorder %s14, 0
      %p76 = por %p74, %p75
      %p77 = scmp.ne.s32.totalorder %s69, %s71
      %p78 = scmp.eq.s32.totalorder %s19, 1
      %p79 = por %p77, %p78
      %p80 = scmp.ne.s32.totalorder %s71, %s72
      %p81 = scmp.eq.s32.totalorder %s19, 0
      %p82 = por %p80, %p81
      %p83 = scmp.ne.s32.totalorder %s71, %s72
      %p84 = scmp.eq.s32.totalorder %s20, 1
      %p85 = por %p83, %p84
      %p87 = scmp.ne.s32.totalorder %s72, %s86
      %p88 = scmp.eq.s32.totalorder %s20, 0
      %p89 = por %p87, %p88
      %s91 = sadd.s32 %s90, 1
      %p94 = scmp.eq.s32.totalorder %s14, 1
      %p95 = scmp.ne.s32.totalorder %s90, %s92
      %p96 = scmp.eq.s32.totalorder %s14, 0
      %p97 = por %p95, %p96
      %p98 = scmp.ne.s32.totalorder %s90, %s92
      %p99 = scmp.eq.s32.totalorder %s19, 1
      %p100 = por %p98, %p99
      %p101 = scmp.ne.s32.totalorder %s92, %s93
      %p102 = scmp.eq.s32.totalorder %s19, 0
      %p103 = por %p101, %p102
      %p104 = scmp.ne.s32.totalorder %s92, %s93
      %p105 = scmp.eq.s32.totalorder %s20, 1
      %p106 = por %p104, %p105
      %p108 = scmp.ne.s32.totalorder %s93, %s107
      %p109 = scmp.eq.s32.totalorder %s20, 0
      %p110 = por %p108, %p109
      %s112 = sadd.s32 %s111, 1
      %p115 = scmp.eq.s32.totalorder %s14, 1
      %p116 = scmp.ne.s32.totalorder %s111, %s113
      %p117 = scmp.eq.s32.totalorder %s14, 0
      %p118 = por %p116, %p117
      %p119 = scmp.ne.s32.totalorder %s111, %s113
      %p120 = scmp.eq.s32.totalorder %s19, 1
      %p121 = por %p119, %p120
      %p122 = scmp.ne.s32.totalorder %s113, %s114
      %p123 = scmp.eq.s32.totalorder %s19, 0
      %p124 = por %p122, %p123
      %p125 = scmp.ne.s32.totalorder %s113, %s114
      %p126 = scmp.eq.s32.totalorder %s20, 1
      %p127 = por %p125, %p126
      %p129 = scmp.ne.s32.totalorder %s114, %s128
      %p130 = scmp.eq.s32.totalorder %s20, 0
      %p131 = por %p129, %p130
      %s132 = ssub.s32 %s14, %s21
      %p133 = scmp.eq.s32.totalorder %s132, 0
      %s135 = sadd.s32 %s134, 1
      %s136 = scalar_select %p133, %s134, %s135
      %p139 = pneg %p133
      %p140 = scmp.eq.s32.totalorder %s14, 1
      %p141 = por %p139, %p140
      %p142 = scmp.ne.s32.totalorder %s134, %s137
      %p143 = scmp.eq.s32.totalorder %s14, 0
      %p144 = por %p142, %p143
      %p145 = scmp.ne.s32.totalorder %s134, %s137
      %p146 = scmp.eq.s32.totalorder %s19, 1
      %p147 = por %p145, %p146
      %p148 = scmp.ne.s32.totalorder %s137, %s138
      %p149 = scmp.eq.s32.totalorder %s19, 0
      %p150 = por %p148, %p149
      %p151 = scmp.ne.s32.totalorder %s137, %s138
      %p152 = scmp.eq.s32.totalorder %s20, 1
      %p153 = por %p151, %p152
      %p155 = scmp.ne.s32.totalorder %s138, %s154
      %p156 = scmp.eq.s32.totalorder %s20, 0
      %p157 = por %p155, %p156
      %s158 = ssub.s32 %s14, %s21
      %p159 = scmp.eq.s32.totalorder %s158, 0
      %s161 = sadd.s32 %s160, 1
      %s162 = scalar_select %p159, %s160, %s161
      %p165 = pneg %p159
      %p166 = scmp.eq.s32.totalorder %s14, 1
      %p167 = por %p165, %p166
      %p168 = scmp.ne.s32.totalorder %s160, %s163
      %p169 = scmp.eq.s32.totalorder %s14, 0
      %p170 = por %p168, %p169
      %p171 = scmp.ne.s32.totalorder %s160, %s163
      %p172 = scmp.eq.s32.totalorder %s19, 1
      %p173 = por %p171, %p172
      %p174 = scmp.ne.s32.totalorder %s163, %s164
      %p175 = scmp.eq.s32.totalorder %s19, 0
      %p176 = por %p174, %p175
      %p177 = scmp.ne.s32.totalorder %s163, %s164
      %p178 = scmp.eq.s32.totalorder %s20, 1
      %p179 = por %p177, %p178
      %p181 = scmp.ne.s32.totalorder %s164, %s180
      %p182 = scmp.eq.s32.totalorder %s20, 0
      %p183 = por %p181, %p182
      %p184 = scmp.le.s32.totalorder 1, %s14
      %p185 = scmp.lt.s32.totalorder %s14, 3
      %p186 = pnand %p184, %p185
      %p187 = pneg %p186
      // Predicated region
      $region9: #{tcn_part.7} parent=5 // pred_check
        _
      $region10: #{tcn_part.7} parent=5 // pred_check_branch
        %189 = sbr.rel (%p186) target = $region12
      $region11: #{tcn_part.7} parent=5 // pred_region
        %s190 = ssub.s32 %s14, 1
        // Predicated region
        $region13: #{tcn_part.7} parent=11 // pred_check
          %p191 = pneg %p61
        $region14: #{tcn_part.7} parent=11 // pred_check_branch
          %193 = sbr.rel (%p191) target = $region16
        $region15: #{tcn_part.7} parent=11 // pred_region
          _
        $region16: #{tcn_part.7} parent=11 // pred_fallthru
          _
        // Predicated region
        $region17: #{tcn_part.7} parent=11 // pred_check
          %p194 = pneg %p82
        $region18: #{tcn_part.7} parent=11 // pred_check_branch
          %196 = sbr.rel (%p194) target = $region20
        $region19: #{tcn_part.7} parent=11 // pred_region
          _
        $region20: #{tcn_part.7} parent=11 // pred_fallthru
          _
        // Predicated region
        $region21: #{tcn_part.7} parent=11 // pred_check
          %p197 = pneg %p103
        $region22: #{tcn_part.7} parent=11 // pred_check_branch
          %199 = sbr.rel (%p197) target = $region24
        $region23: #{tcn_part.7} parent=11 // pred_region
          _
        $region24: #{tcn_part.7} parent=11 // pred_fallthru
          _
        // Predicated region
        $region25: #{tcn_part.7} parent=11 // pred_check
          %p200 = pneg %p124
        $region26: #{tcn_part.7} parent=11 // pred_check_branch
          %202 = sbr.rel (%p200) target = $region28
        $region27: #{tcn_part.7} parent=11 // pred_region
          %204 = vsyncadd [#allocation3], 0
          %s205 = sshll.u32 %s4, 4
          %s206 = int_to_ptr.hbm [resolvable:$true] %s205
          %s207 = sshll.u32 [#allocation2], 4
          %s208 = int_to_ptr.vmem [resolvable:$true] %s207
          %213 = dma.hbm_to_vmem [thread:$0]  %s206, 3072, %s208, [#allocation3], 192, 192, 12
        $region28: #{tcn_part.7} parent=11 // pred_fallthru
          _
      $region12: #{tcn_part.7} parent=5 // pred_fallthru
        _
      %p214 = scmp.lt.s32.totalorder %s14, 2
      // Predicated region
      $region29: #{tcn_part.7} parent=5 // pred_check
        %p215 = pneg %p214
      $region30: #{tcn_part.7} parent=5 // pred_check_branch
        %217 = sbr.rel (%p215) target = $region32
      $region31: #{tcn_part.7} parent=5 // pred_region
        // Predicated region
        $region33: #{tcn_part.7} parent=31 // pred_check
          %p218 = pneg %p34
        $region34: #{tcn_part.7} parent=31 // pred_check_branch
          %220 = sbr.rel (%p218) target = $region36
        $region35: #{tcn_part.7} parent=31 // pred_region
          %s221 = smul.u32 2, %s14
          %p222 = scmp.lt.s32.totalorder %s221, 3
          %s223 = scalar_select %p222, %s221, 3
          %s224 = smul.addr %s223, 2
          %s225 = smul.addr %s224, 4
          %s226 = scalar_lea.vmem %s0, %s225
          %s227 = smul.u32 2, %s14
        $region36: #{tcn_part.7} parent=31 // pred_fallthru
          _
      $region32: #{tcn_part.7} parent=5 // pred_fallthru
        _
      %p228 = scmp.le.s32.totalorder 1, %s14
      %p229 = scmp.lt.s32.totalorder %s14, 3
      %p230 = pnand %p228, %p229
      %p231 = pneg %p230
      // Predicated region
      $region37: #{tcn_part.7} parent=5 // pred_check
        _
      $region38: #{tcn_part.7} parent=5 // pred_check_branch
        %233 = sbr.rel (%p230) target = $region40
      $region39: #{tcn_part.7} parent=5 // pred_region
        %s234 = ssub.s32 %s14, 1
        // Predicated region
        $region41: #{tcn_part.7} parent=39 // pred_check
          %p235 = pneg %p124
        $region42: #{tcn_part.7} parent=39 // pred_check_branch
          %237 = sbr.rel (%p235) target = $region44
        $region43: #{tcn_part.7} parent=39 // pred_region
          %239 = dma.done [#allocation3], 3072
        $region44: #{tcn_part.7} parent=39 // pred_fallthru
          _
        %s240 = smul.u32 2, %s19
        %p241 = scmp.lt.s32.totalorder %s240, 3
        %s242 = scalar_select %p241, %s240, 3
        %s243 = smul.addr %s242, 2
        %s244 = smul.addr %s243, 4
        %s245 = scalar_lea.vmem %s0, %s244
        %p246 = pneg %p40
        %p247 = pneg %p37
        %p248 = pneg %p61
        %p249 = pneg %p58
        %p250 = pneg %p82
        %p251 = pneg %p79
        %p252 = pneg %p103
        %p253 = pneg %p100
        %p254 = pneg %p124
        %p255 = pneg %p121
        %p256 = pneg %p150
        %p257 = pneg %p147
        %s258 = smul.u32 2, %s19
        %p259 = scmp.lt.s32.totalorder %s258, 3
        %s260 = scalar_select %p259, %s258, 3
        %s261 = smul.addr %s260, 2
        %s262 = smul.addr %s261, 4
        %s263 = scalar_lea.vmem %s5, %s262
        %p264 = pneg %p176
        %p265 = pneg %p173
        %p266 = scmp.lt.s32.totalorder %s19, 1
        %s267 = scalar_select %p266, %s19, 1
        %s268 = smul.addr %s267, 2
        %s269 = scalar_lea.vmem %s6, %s268
        %s270 = smul.u32 2, %s19
        %p271 = scmp.lt.s32.totalorder %s270, 3
        %s272 = scalar_select %p271, %s270, 3
        %s273 = smul.addr %s272, 2
        %s274 = smul.addr %s273, 4
        %s275 = scalar_lea.vmem %s0, %s274
        %s276 = smul.u32 2, %s19
        %s277 = smul.u32 2, %s19
        %p278 = scmp.lt.s32.totalorder %s277, 3
        %s279 = scalar_select %p278, %s277, 3
        %s280 = smul.addr %s279, 2
        %s281 = smul.addr %s280, 4
        %s282 = scalar_lea.vmem %s5, %s281
        %s283 = smul.u32 2, %s19
        %p284 = scmp.lt.s32.totalorder %s19, 1
        %s285 = scalar_select %p284, %s19, 1
        %s286 = smul.addr %s285, 2
        %s287 = scalar_lea.vmem %s6, %s286
        %v288 = vld [vmem:[%s1] sm:$0x3]
        %v289 = vmul.f32 %v288, 0.015625
        %v290 = vmul.f32 %v289, %v289
        %v292 = vrot.slane %v290, 7
        %v294 = vsub.f32 %v289, %v292
        %v295 = vmax.f32 %v294, 0.0
        %v296 = vld [vmem:[%s2] sm:$0x1]
        %v297 = vadd.f32 %v295, 1e-05
        %v298 = vrsqrt.pop %v297
        %v299 = vmul.f32 %v298, %v297
        %v300 = vmul.f32 %v299, %v298
        %v301 = vmul.f32 0.5, %v300
        %v302 = vsub.f32 1.5, %v301
        %v303 = vmul.f32 %v298, %v302
        %vm304 = vweird.f32 %v297
        %vm305 = vweird.f32 %v298
        %vm306 = vmor %vm304, %vm305
        %v307 = vsel %vm306, %v298, %v303
        %309 = vst [vmem:[#allocation1] sm:$0xff] %v307
        %s310 = scalar_lea.vmem [#allocation1], 1
        %v311 = vld [vmem:[%s310] ss:$9 sm:$0xff]
        %v313 = vmul.f32 %v296, %v311
        %v314 = vld [vmem:[%s3] sm:$0x1]
        %v315 = vmul.f32 %v289, %v313
        %v316 = vsub.f32 %v314, %v315
        %v317 = vld [vmem:[%s275] sm:$0xf]
        %v318 = vld [vmem:[%s275 + $0x4] sm:$0xf]
        %v319 = vld [vmem:[%s275 + $0x8] sm:$0xf]
        %v320 = vld [vmem:[%s275 + $0xc] sm:$0xf]
        %v321 = vunpack.c.l.bf16 %v317
        %v322 = vunpack.c.l.bf16 %v318
        %v323 = vunpack.c.l.bf16 %v319
        %v324 = vunpack.c.l.bf16 %v320
        %v326 = vperm.slane %v313, 0
        %v328 = vmul.f32 %v321, %v326
        %v329 = vmul.f32 %v322, %v326
        %v330 = vmul.f32 %v323, %v326
        %v331 = vmul.f32 %v324, %v326
        %v333 = vperm.slane %v316, 0
        %v335 = vadd.f32 %v328, %v333
        %v336 = vadd.f32 %v329, %v333
        %v337 = vadd.f32 %v330, %v333
        %v338 = vadd.f32 %v331, %v333
        %v339 = vmax.f32 %v335, 0.0
        %v340 = vmax.f32 %v336, 0.0
        %v341 = vmax.f32 %v337, 0.0
        %v342 = vmax.f32 %v338, 0.0
        %v343 = vld [vmem:[#allocation2] sm:$0xff]
        %v344 = vld [vmem:[#allocation2 + $0x8] sm:$0xf]
        %v345 = vld [vmem:[#allocation2 + $0xc] sm:$0xff]
        %v346 = vld [vmem:[#allocation2 + $0x14] sm:$0xf]
        %v347 = vld [vmem:[#allocation2 + $0x18] sm:$0xff]
        %v348 = vld [vmem:[#allocation2 + $0x20] sm:$0xf]
        %v349 = vld [vmem:[#allocation2 + $0x24] sm:$0xff]
        %v350 = vld [vmem:[#allocation2 + $0x2c] sm:$0xf]
        %v351 = vld [vmem:[#allocation2 + $0x30] sm:$0xff]
        %v352 = vld [vmem:[#allocation2 + $0x38] sm:$0xf]
        %v353 = vld [vmem:[#allocation2 + $0x3c] sm:$0xff]
        %v354 = vld [vmem:[#allocation2 + $0x44] sm:$0xf]
        %v355 = vld [vmem:[#allocation2 + $0x48] sm:$0xff]
        %v356 = vld [vmem:[#allocation2 + $0x50] sm:$0xf]
        %v357 = vld [vmem:[#allocation2 + $0x54] sm:$0xff]
        %v358 = vld [vmem:[#allocation2 + $0x5c] sm:$0xf]
        %v359 = vld [vmem:[#allocation2 + $0x60] sm:$0xff]
        %v360 = vld [vmem:[#allocation2 + $0x68] sm:$0xf]
        %v361 = vld [vmem:[#allocation2 + $0x6c] sm:$0xff]
        %v362 = vld [vmem:[#allocation2 + $0x74] sm:$0xf]
        %v363 = vld [vmem:[#allocation2 + $0x78] sm:$0xff]
        %v364 = vld [vmem:[#allocation2 + $0x80] sm:$0xf]
        %v365 = vld [vmem:[#allocation2 + $0x84] sm:$0xff]
        %v366 = vld [vmem:[#allocation2 + $0x8c] sm:$0xf]
        %v367 = vld [vmem:[#allocation2 + $0x90] sm:$0xff]
        %v368 = vld [vmem:[#allocation2 + $0x98] sm:$0xf]
        %v369 = vld [vmem:[#allocation2 + $0x9c] sm:$0xff]
        %v370 = vld [vmem:[#allocation2 + $0xa4] sm:$0xf]
        %v371 = vld [vmem:[#allocation2 + $0xa8] sm:$0xff]
        %v372 = vld [vmem:[#allocation2 + $0xb0] sm:$0xf]
        %v373 = vld [vmem:[#allocation2 + $0xb4] sm:$0xff]
        %v374 = vld [vmem:[#allocation2 + $0xbc] sm:$0xf]
        %v375 = vpack.c.bf16 %v339, %v339
        %v376 = vpack.c.bf16 %v340, %v340
        %v377 = vpack.c.bf16 %v341, %v341
        %v378 = vpack.c.bf16 %v342, %v342
        %v383 = vunpack.c.l.b16 %v375
        %v384 = vunpack.c.l.b16 %v376
        %v385 = vunpack.c.l.b16 %v377
        %v386 = vunpack.c.l.b16 %v378
        %v387 = vpack.c.b16 %v384, %v383
        %v388 = vpack.c.b16 %v386, %v385
        %v423 = vunpack.c.l.b16 %v343
        %v424 = vunpack.c.h.b16 %v343
        %v425 = vunpack.c.l.b16 %v344
        %v426 = vunpack.c.l.b16 %v345
        %v427 = vunpack.c.h.b16 %v345
        %v428 = vunpack.c.l.b16 %v346
        %v429 = vunpack.c.l.b16 %v347
        %v430 = vunpack.c.h.b16 %v347
        %v431 = vunpack.c.l.b16 %v348
        %v432 = vunpack.c.l.b16 %v349
        %v433 = vunpack.c.h.b16 %v349
        %v434 = vunpack.c.l.b16 %v350
        %v435 = vunpack.c.l.b16 %v351
        %v436 = vunpack.c.h.b16 %v351
        %v437 = vunpack.c.l.b16 %v352
        %v438 = vunpack.c.l.b16 %v353
        %v439 = vunpack.c.h.b16 %v353
        %v440 = vunpack.c.l.b16 %v354
        %v441 = vunpack.c.l.b16 %v355
        %v442 = vunpack.c.h.b16 %v355
        %v443 = vunpack.c.l.b16 %v356
        %v444 = vunpack.c.l.b16 %v357
        %v445 = vunpack.c.h.b16 %v357
        %v446 = vunpack.c.l.b16 %v358
        %v447 = vunpack.c.l.b16 %v359
        %v448 = vunpack.c.h.b16 %v359
        %v449 = vunpack.c.l.b16 %v360
        %v450 = vunpack.c.l.b16 %v361
        %v451 = vunpack.c.h.b16 %v361
        %v452 = vunpack.c.l.b16 %v362
        %v453 = vunpack.c.l.b16 %v363
        %v454 = vunpack.c.h.b16 %v363
        %v455 = vunpack.c.l.b16 %v364
        %v456 = vunpack.c.l.b16 %v365
        %v457 = vunpack.c.h.b16 %v365
        %v458 = vunpack.c.l.b16 %v366
        %v459 = vunpack.c.l.b16 %v367
        %v460 = vunpack.c.h.b16 %v367
        %v461 = vunpack.c.l.b16 %v368
        %v462 = vunpack.c.l.b16 %v369
        %v463 = vunpack.c.h.b16 %v369
        %v464 = vunpack.c.l.b16 %v370
        %v465 = vunpack.c.l.b16 %v371
        %v466 = vunpack.c.h.b16 %v371
        %v467 = vunpack.c.l.b16 %v372
        %v468 = vunpack.c.l.b16 %v373
        %v469 = vunpack.c.h.b16 %v373
        %v470 = vunpack.c.l.b16 %v374
        %v471 = vpack.c.b16 %v426, %v423
        %v472 = vpack.c.b16 %v427, %v424
        %v473 = vpack.c.b16 %v428, %v425
        %v474 = vpack.c.b16 %v432, %v429
        %v475 = vpack.c.b16 %v433, %v430
        %v476 = vpack.c.b16 %v434, %v431
        %v477 = vpack.c.b16 %v438, %v435
        %v478 = vpack.c.b16 %v439, %v436
        %v479 = vpack.c.b16 %v440, %v437
        %v480 = vpack.c.b16 %v444, %v441
        %v481 = vpack.c.b16 %v445, %v442
        %v482 = vpack.c.b16 %v446, %v443
        %v483 = vpack.c.b16 %v450, %v447
        %v484 = vpack.c.b16 %v451, %v448
        %v485 = vpack.c.b16 %v452, %v449
        %v486 = vpack.c.b16 %v456, %v453
        %v487 = vpack.c.b16 %v457, %v454
        %v488 = vpack.c.b16 %v458, %v455
        %v489 = vpack.c.b16 %v462, %v459
        %v490 = vpack.c.b16 %v463, %v460
        %v491 = vpack.c.b16 %v464, %v461
        %v492 = vpack.c.b16 %v468, %v465
        %v493 = vpack.c.b16 %v469, %v466
        %v494 = vpack.c.b16 %v470, %v467
        %519 = vmatpush.bf16.msra.mxu0 %v492
        %520 = vmatpush.bf16.msra.mxu0 %v489
        %521 = vmatpush.bf16.msra.mxu0 %v486
        %522 = vmatpush.bf16.msra.mxu0 %v483
        %523 = vmatpush.bf16.msra.mxu0 %v480
        %524 = vmatpush.bf16.msra.mxu0 %v477
        %525 = vmatpush.bf16.msra.mxu0 %v474
        %526 = vmatpush.bf16.msra.mxu0 %v471
        %527 = vmatmul.bf16.gmra.mxu0 %v387
        %v528 = vpop.f32.mrf.mxu0
        %v529 = vadd.f32 0.0, %v528
        %v530 = vpop.f32.mrf.mxu0
        %v531 = vadd.f32 0.0, %v530
        %532 = vmatmul.bf16.gmra.mxu0 %v388
        %v533 = vpop.f32.mrf.mxu0
        %v534 = vadd.f32 0.0, %v533
        %v535 = vpop.f32.mrf.mxu0
        %v536 = vadd.f32 0.0, %v535
        %537 = vdwg.mxu0
        %538 = vmatpush.bf16.msra.mxu0 %v493
        %539 = vmatpush.bf16.msra.mxu0 %v490
        %540 = vmatpush.bf16.msra.mxu0 %v487
        %541 = vmatpush.bf16.msra.mxu0 %v484
        %542 = vmatpush.bf16.msra.mxu0 %v481
        %543 = vmatpush.bf16.msra.mxu0 %v478
        %544 = vmatpush.bf16.msra.mxu0 %v475
        %545 = vmatpush.bf16.msra.mxu0 %v472
        %546 = vmatmul.bf16.gmra.mxu0 %v387
        %v547 = vpop.f32.mrf.mxu0
        %v548 = vadd.f32 0.0, %v547
        %v549 = vpop.f32.mrf.mxu0
        %v550 = vadd.f32 0.0, %v549
        %551 = vmatmul.bf16.gmra.mxu0 %v388
        %v552 = vpop.f32.mrf.mxu0
        %v553 = vadd.f32 0.0, %v552
        %v554 = vpop.f32.mrf.mxu0
        %v555 = vadd.f32 0.0, %v554
        %556 = vdwg.mxu0
        %557 = vmatpush.bf16.msra.mxu0 %v494
        %558 = vmatpush.bf16.msra.mxu0 %v491
        %559 = vmatpush.bf16.msra.mxu0 %v488
        %560 = vmatpush.bf16.msra.mxu0 %v485
        %561 = vmatpush.bf16.msra.mxu0 %v482
        %562 = vmatpush.bf16.msra.mxu0 %v479
        %563 = vmatpush.bf16.msra.mxu0 %v476
        %564 = vmatpush.bf16.msra.mxu0 %v473
        %565 = vmatmul.bf16.gmra.mxu0 %v387
        %v566 = vpop.f32.mrf.mxu0
        %v567 = vadd.f32 0.0, %v566
        %v568 = vpop.f32.mrf.mxu0
        %v569 = vadd.f32 0.0, %v568
        %570 = vmatmul.bf16.gmra.mxu0 %v388
        %v571 = vpop.f32.mrf.mxu0
        %v572 = vadd.f32 0.0, %v571
        %v573 = vpop.f32.mrf.mxu0
        %v574 = vadd.f32 0.0, %v573
        %575 = vdwg.mxu0
        %v576 = vlaneseq
        %v577 = vshrl.u32 %v576, 7
        %v578 = vadd.s32 %v577, 8
        %v579 = vrot.slane %v529, 4
        %v580 = vrot.slane %v534, 4
        %v581 = vrot.slane %v531, 4
        %v582 = vrot.slane %v536, 4
        %vm583 = vcmp.lt.s32.totalorder %v577, 4
        %v584 = vsel %vm583, %v579, %v581
        %v585 = vsel %vm583, %v580, %v582
        %v586 = vsel %vm583, %v581, %v579
        %v587 = vsel %vm583, %v582, %v580
        %vm588 = vcmp.ge.s32.totalorder %v577, 4
        %vm589 = vcmp.ge.s32.totalorder %v578, 4
        %v590 = vsel %vm588, 1, 0
        %v591 = vsel %vm589, 1, 0
        %vm592 = vcmp.eq.s32.totalorder %v590, 1
        %vm593 = vcmp.eq.s32.totalorder %v591, 1
        %v594 = vsel %vm592, %v586, 0.0
        %v595 = vsel %vm593, %v584, 0.0
        %v596 = vsel %vm592, %v587, 0.0
        %v597 = vsel %vm593, %v585, 0.0
        %v598 = vrot.slane %v567, 4
        %v599 = vrot.slane %v572, 4
        %v600 = vrot.slane %v569, 4
        %v601 = vrot.slane %v574, 4
        %v602 = vsel %vm583, %v598, %v600
        %v603 = vsel %vm583, %v599, %v601
        %v604 = vsel %vm583, %v600, %v598
        %v605 = vsel %vm583, %v601, %v599
        %vm606 = vcmp.lt.s32.totalorder %v577, 12
        %vm607 = vcmp.lt.s32.totalorder %v578, 12
        %v608 = vsel %vm606, 1, 0
        %v609 = vsel %vm607, 1, 0
        %vm610 = vcmp.eq.s32.totalorder %v608, 1
        %vm611 = vcmp.eq.s32.totalorder %v609, 1
        %v612 = vsel %vm610, %v602, 0.0
        %v613 = vsel %vm611, %v604, 0.0
        %v614 = vsel %vm610, %v603, 0.0
        %v615 = vsel %vm611, %v605, 0.0
        %v616 = vadd.f32 %v594, %v548
        %v617 = vadd.f32 %v595, %v550
        %v618 = vadd.f32 %v596, %v553
        %v619 = vadd.f32 %v597, %v555
        %v620 = vadd.f32 %v616, %v612
        %v621 = vadd.f32 %v617, %v613
        %v622 = vadd.f32 %v618, %v614
        %v623 = vadd.f32 %v619, %v615
        %v624 = vpack.c.bf16 %v620, %v620
        %v625 = vpack.c.bf16 %v621, %v621
        %v626 = vpack.c.bf16 %v622, %v622
        %v627 = vpack.c.bf16 %v623, %v623
        %628 = vst [vmem:[%s282] sm:$0xf] %v624
        %629 = vst [vmem:[%s282 + $0x4] sm:$0xf] %v625
        %630 = vst [vmem:[%s282 + $0x8] sm:$0xf] %v626
        %631 = vst [vmem:[%s282 + $0xc] sm:$0xf] %v627
        %s632 = smul.u32 %s19, 2
        %v633 = vstv %s632
        %v634 = vadd.s32 %v633, 1
        %vm635 = vcmp.lt.s32.totalorder %v633, 4
        %vm636 = vcmp.lt.s32.totalorder %v634, 4
        %v637 = vsel %vm635, 1, 0
        %v638 = vsel %vm636, 1, 0
        %vm639 = vcmp.eq.s32.totalorder %v637, 1
        %vm640 = vcmp.eq.s32.totalorder %v638, 1
        %v641 = vsel %vm639, %v620, 0.0
        %v642 = vsel %vm639, %v621, 0.0
        %v643 = vsel %vm640, %v622, 0.0
        %v644 = vsel %vm640, %v623, 0.0
        %v645 = vadd.f32 %v641, %v642
        %v646 = vadd.f32 %v645, %v643
        %v647 = vadd.f32 %v646, %v644
        %v648 = vrot.slane %v647, 4
        %v649 = vadd.f32 %v647, %v648
        %v650 = vrot.slane %v649, 2
        %v651 = vadd.f32 %v649, %v650
        %v652 = vrot.slane %v651, 1
        %v653 = vadd.f32 %v651, %v652
        %654 = vst [vmem:[%s287] sm:$0x1] %v653
        %v655 = vmul.f32 %v641, %v641
        %v656 = vmul.f32 %v642, %v642
        %v657 = vmul.f32 %v643, %v643
        %v658 = vmul.f32 %v644, %v644
        %v659 = vadd.f32 %v655, %v656
        %v660 = vadd.f32 %v659, %v657
        %v661 = vadd.f32 %v660, %v658
        %v662 = vrot.slane %v661, 4
        %v663 = vadd.f32 %v661, %v662
        %v664 = vrot.slane %v663, 2
        %v665 = vadd.f32 %v663, %v664
        %v666 = vrot.slane %v665, 1
        %v667 = vadd.f32 %v665, %v666
        %668 = vst [vmem:[%s287 + $0x1] sm:$0x1] %v667
        %s669 = smul.u32 2, %s19
        %p670 = scmp.lt.s32.totalorder %s669, 3
        %s671 = scalar_select %p670, %s669, 3
        %s672 = smul.addr %s671, 2
        %s673 = smul.addr %s672, 4
        %s674 = scalar_lea.vmem %s5, %s673
        %p675 = scmp.lt.s32.totalorder %s19, 1
        %s676 = scalar_select %p675, %s19, 1
        %s677 = smul.addr %s676, 2
        %s678 = scalar_lea.vmem %s6, %s677
        // Predicated region
        $region45: #{tcn_part.7} parent=39 // pred_check
          %p679 = pneg %p147
        $region46: #{tcn_part.7} parent=39 // pred_check_branch
          %681 = sbr.rel (%p679) target = $region48
        $region47: #{tcn_part.7} parent=39 // pred_region
          %s682 = smul.u32 2, %s19
        $region48: #{tcn_part.7} parent=39 // pred_fallthru
          _
        // Predicated region
        $region49: #{tcn_part.7} parent=39 // pred_check
          %p683 = pneg %p173
        $region50: #{tcn_part.7} parent=39 // pred_check_branch
          %685 = sbr.rel (%p683) target = $region52
        $region51: #{tcn_part.7} parent=39 // pred_region
          _
        $region52: #{tcn_part.7} parent=39 // pred_fallthru
          _
      $region40: #{tcn_part.7} parent=5 // pred_fallthru
        _
      %p686 = scmp.le.s32.totalorder 2, %s14
      // Predicated region
      $region53: #{tcn_part.7} parent=5 // pred_check
        %p687 = pneg %p686
      $region54: #{tcn_part.7} parent=5 // pred_check_branch
        %689 = sbr.rel (%p687) target = $region56
      $region55: #{tcn_part.7} parent=5 // pred_region
        %s690 = ssub.s32 %s14, 2
        // Predicated region
        $region57: #{tcn_part.7} parent=55 // pred_check
          %p691 = pneg %p153
        $region58: #{tcn_part.7} parent=55 // pred_check_branch
          %693 = sbr.rel (%p691) target = $region60
        $region59: #{tcn_part.7} parent=55 // pred_region
          %s694 = smul.u32 2, %s20
          %p695 = scmp.lt.s32.totalorder %s694, 3
          %s696 = scalar_select %p695, %s694, 3
          %s697 = smul.addr %s696, 2
          %s698 = smul.addr %s697, 4
          %s699 = scalar_lea.vmem %s5, %s698
        $region60: #{tcn_part.7} parent=55 // pred_fallthru
          _
        // Predicated region
        $region61: #{tcn_part.7} parent=55 // pred_check
          %p700 = pneg %p179
        $region62: #{tcn_part.7} parent=55 // pred_check_branch
          %702 = sbr.rel (%p700) target = $region64
        $region63: #{tcn_part.7} parent=55 // pred_region
          %p703 = scmp.lt.s32.totalorder %s20, 1
          %s704 = scalar_select %p703, %s20, 1
          %s705 = smul.addr %s704, 2
          %s706 = scalar_lea.vmem %s6, %s705
        $region64: #{tcn_part.7} parent=55 // pred_fallthru
          _
      $region56: #{tcn_part.7} parent=5 // pred_fallthru
        _
    $region6: #{tcn_part.7} parent=1 // loop_footer
      %s18 = sadd.s32 1, %s14
    $region7: #{tcn_part.7} parent=1 // loop_footer_branch
      %13 = sbr.rel target = $region3
    $region8: #{tcn_part.7} parent=1 // loop_exit
      _
    %707 = vsyncpa [#allocation3], 1
    %s708 = scalar_lea.sflag [#allocation3], 1
    %709 = vsyncpa %s708, 1

// kernel: tcn_part.8
$region0: #{tcn_part.8}
  #allocation0 [shape = 'u32[]', space=smem, size = 0x4, offset = 0x4, fixed_abs, tag = 'smem constant byte address 0x4 - core index']
  #allocation1 [shape = 'u32[72,128]{1,0:T(1,128)}', space=vmem, size = 0x9000, scoped, tag = 'internal scratch']
  %s0 = inlined_call_operand.vmem [shape: bf16[4,16,128], index: 0, kind: input, shape index: {}, may-alias: {0,5}]
  %s1 = inlined_call_operand.vmem [shape: f32[2,128], index: 1, kind: input, shape index: {}]
  %s2 = inlined_call_operand.vmem [shape: f32[1,128], index: 2, kind: input, shape index: {}]
  %s3 = inlined_call_operand.vmem [shape: f32[1,128], index: 3, kind: input, shape index: {}]
  %s4 = inlined_call_operand.hbm [shape: bf16[128,384], index: 4, kind: input, shape index: {}]
  %s5 = inlined_call_operand.vmem [shape: bf16[4,16,128], index: 5, kind: output, shape index: {0}, may-alias: {0,5}]
  %s6 = inlined_call_operand.vmem [shape: f32[2,2,128], index: 6, kind: output, shape index: {1}]
  %7 = xla_tuple %s5, %s6
  %s8 = sld [smem:[#allocation0]]
  $region65: #{tcn_part.8} parent=0
    _
  %s10 = ssub.s32 1, %s8
  %s11 = scalar_select 0, %s10, %s8
  $region1: #{tcn_part.8} parent=0
    #allocation2 [shape = 'u8[98304]{0}', space=vmem, size = 0x18000, scoped, tag = 'input window, operand 4, single buffered']
    #allocation3 [shape = 's32[2]{0}', space=sflag, size = 0x8, scoped, tag = 'scoped memory for tcn_part.8']
    %12 = vsyncpa [#allocation3], 0
    loop: start=0, step=1, limit=4
    $region2: #{tcn_part.8} parent=1 // loop_pre_header
      _
    $region3: #{tcn_part.8} parent=1 // loop_header
      %s14 = sphi 0, %s18
      %p15 = scmp.ge.s32.totalorder %s14, 4
      %s24 = sphi 0, %s26
      %s27 = sphi 0, %s24
      %s28 = sphi 0, %s27
      %s44 = sphi 0, %s28
      %s48 = sphi 0, %s48
      %s50 = sphi 0, %s48
      %s51 = sphi 0, %s50
      %s65 = sphi 0, %s51
      %s69 = sphi 0, %s69
      %s71 = sphi 0, %s69
      %s72 = sphi 0, %s71
      %s86 = sphi 0, %s72
      %s90 = sphi 0, %s90
      %s92 = sphi 0, %s90
      %s93 = sphi 0, %s92
      %s107 = sphi 0, %s93
      %s111 = sphi 0, %s111
      %s113 = sphi 0, %s111
      %s114 = sphi 0, %s113
      %s128 = sphi 0, %s114
      %s134 = sphi 0, %s136
      %s137 = sphi 0, %s134
      %s138 = sphi 0, %s137
      %s154 = sphi 0, %s138
      %s160 = sphi 0, %s162
      %s163 = sphi 0, %s160
      %s164 = sphi 0, %s163
      %s180 = sphi 0, %s164
    $region4: #{tcn_part.8} parent=1 // loop_header_branch
      %17 = sbr.rel (%p15) target = $region8
    $region5: #{tcn_part.8} parent=1 // loop_body
      %s19 = ssub.s32 %s14, 1
      %s20 = ssub.s32 %s14, 2
      %s21 = sadd.s32 %s14, 1
      %s22 = ssub.s32 %s14, %s21
      %p23 = scmp.eq.s32.totalorder %s22, 0
      %s25 = sadd.s32 %s24, 1
      %s26 = scalar_select %p23, %s24, %s25
      %p29 = pneg %p23
      %p30 = scmp.eq.s32.totalorder %s14, 1
      %p31 = por %p29, %p30
      %p32 = scmp.ne.s32.totalorder %s24, %s27
      %p33 = scmp.eq.s32.totalorder %s14, 0
      %p34 = por %p32, %p33
      %p35 = scmp.ne.s32.totalorder %s24, %s27
      %p36 = scmp.eq.s32.totalorder %s19, 1
      %p37 = por %p35, %p36
      %p38 = scmp.ne.s32.totalorder %s27, %s28
      %p39 = scmp.eq.s32.totalorder %s19, 0
      %p40 = por %p38, %p39
      %p41 = scmp.ne.s32.totalorder %s27, %s28
      %p42 = scmp.eq.s32.totalorder %s20, 1
      %p43 = por %p41, %p42
      %p45 = scmp.ne.s32.totalorder %s28, %s44
      %p46 = scmp.eq.s32.totalorder %s20, 0
      %p47 = por %p45, %p46
      %s49 = sadd.s32 %s48, 1
      %p52 = scmp.eq.s32.totalorder %s14, 1
      %p53 = scmp.ne.s32.totalorder %s48, %s50
      %p54 = scmp.eq.s32.totalorder %s14, 0
      %p55 = por %p53, %p54
      %p56 = scmp.ne.s32.totalorder %s48, %s50
      %p57 = scmp.eq.s32.totalorder %s19, 1
      %p58 = por %p56, %p57
      %p59 = scmp.ne.s32.totalorder %s50, %s51
      %p60 = scmp.eq.s32.totalorder %s19, 0
      %p61 = por %p59, %p60
      %p62 = scmp.ne.s32.totalorder %s50, %s51
      %p63 = scmp.eq.s32.totalorder %s20, 1
      %p64 = por %p62, %p63
      %p66 = scmp.ne.s32.totalorder %s51, %s65
      %p67 = scmp.eq.s32.totalorder %s20, 0
      %p68 = por %p66, %p67
      %s70 = sadd.s32 %s69, 1
      %p73 = scmp.eq.s32.totalorder %s14, 1
      %p74 = scmp.ne.s32.totalorder %s69, %s71
      %p75 = scmp.eq.s32.totalorder %s14, 0
      %p76 = por %p74, %p75
      %p77 = scmp.ne.s32.totalorder %s69, %s71
      %p78 = scmp.eq.s32.totalorder %s19, 1
      %p79 = por %p77, %p78
      %p80 = scmp.ne.s32.totalorder %s71, %s72
      %p81 = scmp.eq.s32.totalorder %s19, 0
      %p82 = por %p80, %p81
      %p83 = scmp.ne.s32.totalorder %s71, %s72
      %p84 = scmp.eq.s32.totalorder %s20, 1
      %p85 = por %p83, %p84
      %p87 = scmp.ne.s32.totalorder %s72, %s86
      %p88 = scmp.eq.s32.totalorder %s20, 0
      %p89 = por %p87, %p88
      %s91 = sadd.s32 %s90, 1
      %p94 = scmp.eq.s32.totalorder %s14, 1
      %p95 = scmp.ne.s32.totalorder %s90, %s92
      %p96 = scmp.eq.s32.totalorder %s14, 0
      %p97 = por %p95, %p96
      %p98 = scmp.ne.s32.totalorder %s90, %s92
      %p99 = scmp.eq.s32.totalorder %s19, 1
      %p100 = por %p98, %p99
      %p101 = scmp.ne.s32.totalorder %s92, %s93
      %p102 = scmp.eq.s32.totalorder %s19, 0
      %p103 = por %p101, %p102
      %p104 = scmp.ne.s32.totalorder %s92, %s93
      %p105 = scmp.eq.s32.totalorder %s20, 1
      %p106 = por %p104, %p105
      %p108 = scmp.ne.s32.totalorder %s93, %s107
      %p109 = scmp.eq.s32.totalorder %s20, 0
      %p110 = por %p108, %p109
      %s112 = sadd.s32 %s111, 1
      %p115 = scmp.eq.s32.totalorder %s14, 1
      %p116 = scmp.ne.s32.totalorder %s111, %s113
      %p117 = scmp.eq.s32.totalorder %s14, 0
      %p118 = por %p116, %p117
      %p119 = scmp.ne.s32.totalorder %s111, %s113
      %p120 = scmp.eq.s32.totalorder %s19, 1
      %p121 = por %p119, %p120
      %p122 = scmp.ne.s32.totalorder %s113, %s114
      %p123 = scmp.eq.s32.totalorder %s19, 0
      %p124 = por %p122, %p123
      %p125 = scmp.ne.s32.totalorder %s113, %s114
      %p126 = scmp.eq.s32.totalorder %s20, 1
      %p127 = por %p125, %p126
      %p129 = scmp.ne.s32.totalorder %s114, %s128
      %p130 = scmp.eq.s32.totalorder %s20, 0
      %p131 = por %p129, %p130
      %s132 = ssub.s32 %s14, %s21
      %p133 = scmp.eq.s32.totalorder %s132, 0
      %s135 = sadd.s32 %s134, 1
      %s136 = scalar_select %p133, %s134, %s135
      %p139 = pneg %p133
      %p140 = scmp.eq.s32.totalorder %s14, 1
      %p141 = por %p139, %p140
      %p142 = scmp.ne.s32.totalorder %s134, %s137
      %p143 = scmp.eq.s32.totalorder %s14, 0
      %p144 = por %p142, %p143
      %p145 = scmp.ne.s32.totalorder %s134, %s137
      %p146 = scmp.eq.s32.totalorder %s19, 1
      %p147 = por %p145, %p146
      %p148 = scmp.ne.s32.totalorder %s137, %s138
      %p149 = scmp.eq.s32.totalorder %s19, 0
      %p150 = por %p148, %p149
      %p151 = scmp.ne.s32.totalorder %s137, %s138
      %p152 = scmp.eq.s32.totalorder %s20, 1
      %p153 = por %p151, %p152
      %p155 = scmp.ne.s32.totalorder %s138, %s154
      %p156 = scmp.eq.s32.totalorder %s20, 0
      %p157 = por %p155, %p156
      %s158 = ssub.s32 %s14, %s21
      %p159 = scmp.eq.s32.totalorder %s158, 0
      %s161 = sadd.s32 %s160, 1
      %s162 = scalar_select %p159, %s160, %s161
      %p165 = pneg %p159
      %p166 = scmp.eq.s32.totalorder %s14, 1
      %p167 = por %p165, %p166
      %p168 = scmp.ne.s32.totalorder %s160, %s163
      %p169 = scmp.eq.s32.totalorder %s14, 0
      %p170 = por %p168, %p169
      %p171 = scmp.ne.s32.totalorder %s160, %s163
      %p172 = scmp.eq.s32.totalorder %s19, 1
      %p173 = por %p171, %p172
      %p174 = scmp.ne.s32.totalorder %s163, %s164
      %p175 = scmp.eq.s32.totalorder %s19, 0
      %p176 = por %p174, %p175
      %p177 = scmp.ne.s32.totalorder %s163, %s164
      %p178 = scmp.eq.s32.totalorder %s20, 1
      %p179 = por %p177, %p178
      %p181 = scmp.ne.s32.totalorder %s164, %s180
      %p182 = scmp.eq.s32.totalorder %s20, 0
      %p183 = por %p181, %p182
      %p184 = scmp.le.s32.totalorder 1, %s14
      %p185 = scmp.lt.s32.totalorder %s14, 3
      %p186 = pnand %p184, %p185
      %p187 = pneg %p186
      // Predicated region
      $region9: #{tcn_part.8} parent=5 // pred_check
        _
      $region10: #{tcn_part.8} parent=5 // pred_check_branch
        %189 = sbr.rel (%p186) target = $region12
      $region11: #{tcn_part.8} parent=5 // pred_region
        %s190 = ssub.s32 %s14, 1
        // Predicated region
        $region13: #{tcn_part.8} parent=11 // pred_check
          %p191 = pneg %p61
        $region14: #{tcn_part.8} parent=11 // pred_check_branch
          %193 = sbr.rel (%p191) target = $region16
        $region15: #{tcn_part.8} parent=11 // pred_region
          _
        $region16: #{tcn_part.8} parent=11 // pred_fallthru
          _
        // Predicated region
        $region17: #{tcn_part.8} parent=11 // pred_check
          %p194 = pneg %p82
        $region18: #{tcn_part.8} parent=11 // pred_check_branch
          %196 = sbr.rel (%p194) target = $region20
        $region19: #{tcn_part.8} parent=11 // pred_region
          _
        $region20: #{tcn_part.8} parent=11 // pred_fallthru
          _
        // Predicated region
        $region21: #{tcn_part.8} parent=11 // pred_check
          %p197 = pneg %p103
        $region22: #{tcn_part.8} parent=11 // pred_check_branch
          %199 = sbr.rel (%p197) target = $region24
        $region23: #{tcn_part.8} parent=11 // pred_region
          _
        $region24: #{tcn_part.8} parent=11 // pred_fallthru
          _
        // Predicated region
        $region25: #{tcn_part.8} parent=11 // pred_check
          %p200 = pneg %p124
        $region26: #{tcn_part.8} parent=11 // pred_check_branch
          %202 = sbr.rel (%p200) target = $region28
        $region27: #{tcn_part.8} parent=11 // pred_region
          %204 = vsyncadd [#allocation3], 0
          %s205 = sshll.u32 %s4, 4
          %s206 = int_to_ptr.hbm [resolvable:$true] %s205
          %s207 = sshll.u32 [#allocation2], 4
          %s208 = int_to_ptr.vmem [resolvable:$true] %s207
          %213 = dma.hbm_to_vmem [thread:$0]  %s206, 3072, %s208, [#allocation3], 192, 192, 12
        $region28: #{tcn_part.8} parent=11 // pred_fallthru
          _
      $region12: #{tcn_part.8} parent=5 // pred_fallthru
        _
      %p214 = scmp.lt.s32.totalorder %s14, 2
      // Predicated region
      $region29: #{tcn_part.8} parent=5 // pred_check
        %p215 = pneg %p214
      $region30: #{tcn_part.8} parent=5 // pred_check_branch
        %217 = sbr.rel (%p215) target = $region32
      $region31: #{tcn_part.8} parent=5 // pred_region
        // Predicated region
        $region33: #{tcn_part.8} parent=31 // pred_check
          %p218 = pneg %p34
        $region34: #{tcn_part.8} parent=31 // pred_check_branch
          %220 = sbr.rel (%p218) target = $region36
        $region35: #{tcn_part.8} parent=31 // pred_region
          %s221 = smul.u32 2, %s14
          %p222 = scmp.lt.s32.totalorder %s221, 3
          %s223 = scalar_select %p222, %s221, 3
          %s224 = smul.addr %s223, 2
          %s225 = smul.addr %s224, 4
          %s226 = scalar_lea.vmem %s0, %s225
          %s227 = smul.u32 2, %s14
        $region36: #{tcn_part.8} parent=31 // pred_fallthru
          _
      $region32: #{tcn_part.8} parent=5 // pred_fallthru
        _
      %p228 = scmp.le.s32.totalorder 1, %s14
      %p229 = scmp.lt.s32.totalorder %s14, 3
      %p230 = pnand %p228, %p229
      %p231 = pneg %p230
      // Predicated region
      $region37: #{tcn_part.8} parent=5 // pred_check
        _
      $region38: #{tcn_part.8} parent=5 // pred_check_branch
        %233 = sbr.rel (%p230) target = $region40
      $region39: #{tcn_part.8} parent=5 // pred_region
        %s234 = ssub.s32 %s14, 1
        // Predicated region
        $region41: #{tcn_part.8} parent=39 // pred_check
          %p235 = pneg %p124
        $region42: #{tcn_part.8} parent=39 // pred_check_branch
          %237 = sbr.rel (%p235) target = $region44
        $region43: #{tcn_part.8} parent=39 // pred_region
          %239 = dma.done [#allocation3], 3072
        $region44: #{tcn_part.8} parent=39 // pred_fallthru
          _
        %s240 = smul.u32 2, %s19
        %p241 = scmp.lt.s32.totalorder %s240, 3
        %s242 = scalar_select %p241, %s240, 3
        %s243 = smul.addr %s242, 2
        %s244 = smul.addr %s243, 4
        %s245 = scalar_lea.vmem %s0, %s244
        %p246 = pneg %p40
        %p247 = pneg %p37
        %p248 = pneg %p61
        %p249 = pneg %p58
        %p250 = pneg %p82
        %p251 = pneg %p79
        %p252 = pneg %p103
        %p253 = pneg %p100
        %p254 = pneg %p124
        %p255 = pneg %p121
        %p256 = pneg %p150
        %p257 = pneg %p147
        %s258 = smul.u32 2, %s19
        %p259 = scmp.lt.s32.totalorder %s258, 3
        %s260 = scalar_select %p259, %s258, 3
        %s261 = smul.addr %s260, 2
        %s262 = smul.addr %s261, 4
        %s263 = scalar_lea.vmem %s5, %s262
        %p264 = pneg %p176
        %p265 = pneg %p173
        %p266 = scmp.lt.s32.totalorder %s19, 1
        %s267 = scalar_select %p266, %s19, 1
        %s268 = smul.addr %s267, 2
        %s269 = scalar_lea.vmem %s6, %s268
        %s270 = smul.u32 2, %s19
        %p271 = scmp.lt.s32.totalorder %s270, 3
        %s272 = scalar_select %p271, %s270, 3
        %s273 = smul.addr %s272, 2
        %s274 = smul.addr %s273, 4
        %s275 = scalar_lea.vmem %s0, %s274
        %s276 = smul.u32 2, %s19
        %s277 = smul.u32 2, %s19
        %p278 = scmp.lt.s32.totalorder %s277, 3
        %s279 = scalar_select %p278, %s277, 3
        %s280 = smul.addr %s279, 2
        %s281 = smul.addr %s280, 4
        %s282 = scalar_lea.vmem %s5, %s281
        %s283 = smul.u32 2, %s19
        %p284 = scmp.lt.s32.totalorder %s19, 1
        %s285 = scalar_select %p284, %s19, 1
        %s286 = smul.addr %s285, 2
        %s287 = scalar_lea.vmem %s6, %s286
        %v288 = vld [vmem:[%s1] sm:$0x3]
        %v289 = vmul.f32 %v288, 0.015625
        %v290 = vmul.f32 %v289, %v289
        %v292 = vrot.slane %v290, 7
        %v294 = vsub.f32 %v289, %v292
        %v295 = vmax.f32 %v294, 0.0
        %v296 = vld [vmem:[%s2] sm:$0x1]
        %v297 = vadd.f32 %v295, 1e-05
        %v298 = vrsqrt.pop %v297
        %v299 = vmul.f32 %v298, %v297
        %v300 = vmul.f32 %v299, %v298
        %v301 = vmul.f32 0.5, %v300
        %v302 = vsub.f32 1.5, %v301
        %v303 = vmul.f32 %v298, %v302
        %vm304 = vweird.f32 %v297
        %vm305 = vweird.f32 %v298
        %vm306 = vmor %vm304, %vm305
        %v307 = vsel %vm306, %v298, %v303
        %309 = vst [vmem:[#allocation1] sm:$0xff] %v307
        %s310 = scalar_lea.vmem [#allocation1], 1
        %v311 = vld [vmem:[%s310] ss:$9 sm:$0xff]
        %v313 = vmul.f32 %v296, %v311
        %v314 = vld [vmem:[%s3] sm:$0x1]
        %v315 = vmul.f32 %v289, %v313
        %v316 = vsub.f32 %v314, %v315
        %v317 = vld [vmem:[%s275] sm:$0xf]
        %v318 = vld [vmem:[%s275 + $0x4] sm:$0xf]
        %v319 = vld [vmem:[%s275 + $0x8] sm:$0xf]
        %v320 = vld [vmem:[%s275 + $0xc] sm:$0xf]
        %v321 = vunpack.c.l.bf16 %v317
        %v322 = vunpack.c.l.bf16 %v318
        %v323 = vunpack.c.l.bf16 %v319
        %v324 = vunpack.c.l.bf16 %v320
        %v326 = vperm.slane %v313, 0
        %v328 = vmul.f32 %v321, %v326
        %v329 = vmul.f32 %v322, %v326
        %v330 = vmul.f32 %v323, %v326
        %v331 = vmul.f32 %v324, %v326
        %v333 = vperm.slane %v316, 0
        %v335 = vadd.f32 %v328, %v333
        %v336 = vadd.f32 %v329, %v333
        %v337 = vadd.f32 %v330, %v333
        %v338 = vadd.f32 %v331, %v333
        %v339 = vmax.f32 %v335, 0.0
        %v340 = vmax.f32 %v336, 0.0
        %v341 = vmax.f32 %v337, 0.0
        %v342 = vmax.f32 %v338, 0.0
        %v343 = vld [vmem:[#allocation2] sm:$0xff]
        %v344 = vld [vmem:[#allocation2 + $0x8] sm:$0xf]
        %v345 = vld [vmem:[#allocation2 + $0xc] sm:$0xff]
        %v346 = vld [vmem:[#allocation2 + $0x14] sm:$0xf]
        %v347 = vld [vmem:[#allocation2 + $0x18] sm:$0xff]
        %v348 = vld [vmem:[#allocation2 + $0x20] sm:$0xf]
        %v349 = vld [vmem:[#allocation2 + $0x24] sm:$0xff]
        %v350 = vld [vmem:[#allocation2 + $0x2c] sm:$0xf]
        %v351 = vld [vmem:[#allocation2 + $0x30] sm:$0xff]
        %v352 = vld [vmem:[#allocation2 + $0x38] sm:$0xf]
        %v353 = vld [vmem:[#allocation2 + $0x3c] sm:$0xff]
        %v354 = vld [vmem:[#allocation2 + $0x44] sm:$0xf]
        %v355 = vld [vmem:[#allocation2 + $0x48] sm:$0xff]
        %v356 = vld [vmem:[#allocation2 + $0x50] sm:$0xf]
        %v357 = vld [vmem:[#allocation2 + $0x54] sm:$0xff]
        %v358 = vld [vmem:[#allocation2 + $0x5c] sm:$0xf]
        %v359 = vld [vmem:[#allocation2 + $0x60] sm:$0xff]
        %v360 = vld [vmem:[#allocation2 + $0x68] sm:$0xf]
        %v361 = vld [vmem:[#allocation2 + $0x6c] sm:$0xff]
        %v362 = vld [vmem:[#allocation2 + $0x74] sm:$0xf]
        %v363 = vld [vmem:[#allocation2 + $0x78] sm:$0xff]
        %v364 = vld [vmem:[#allocation2 + $0x80] sm:$0xf]
        %v365 = vld [vmem:[#allocation2 + $0x84] sm:$0xff]
        %v366 = vld [vmem:[#allocation2 + $0x8c] sm:$0xf]
        %v367 = vld [vmem:[#allocation2 + $0x90] sm:$0xff]
        %v368 = vld [vmem:[#allocation2 + $0x98] sm:$0xf]
        %v369 = vld [vmem:[#allocation2 + $0x9c] sm:$0xff]
        %v370 = vld [vmem:[#allocation2 + $0xa4] sm:$0xf]
        %v371 = vld [vmem:[#allocation2 + $0xa8] sm:$0xff]
        %v372 = vld [vmem:[#allocation2 + $0xb0] sm:$0xf]
        %v373 = vld [vmem:[#allocation2 + $0xb4] sm:$0xff]
        %v374 = vld [vmem:[#allocation2 + $0xbc] sm:$0xf]
        %v375 = vpack.c.bf16 %v339, %v339
        %v376 = vpack.c.bf16 %v340, %v340
        %v377 = vpack.c.bf16 %v341, %v341
        %v378 = vpack.c.bf16 %v342, %v342
        %v383 = vunpack.c.l.b16 %v375
        %v384 = vunpack.c.l.b16 %v376
        %v385 = vunpack.c.l.b16 %v377
        %v386 = vunpack.c.l.b16 %v378
        %v387 = vpack.c.b16 %v384, %v383
        %v388 = vpack.c.b16 %v386, %v385
        %v423 = vunpack.c.l.b16 %v343
        %v424 = vunpack.c.h.b16 %v343
        %v425 = vunpack.c.l.b16 %v344
        %v426 = vunpack.c.l.b16 %v345
        %v427 = vunpack.c.h.b16 %v345
        %v428 = vunpack.c.l.b16 %v346
        %v429 = vunpack.c.l.b16 %v347
        %v430 = vunpack.c.h.b16 %v347
        %v431 = vunpack.c.l.b16 %v348
        %v432 = vunpack.c.l.b16 %v349
        %v433 = vunpack.c.h.b16 %v349
        %v434 = vunpack.c.l.b16 %v350
        %v435 = vunpack.c.l.b16 %v351
        %v436 = vunpack.c.h.b16 %v351
        %v437 = vunpack.c.l.b16 %v352
        %v438 = vunpack.c.l.b16 %v353
        %v439 = vunpack.c.h.b16 %v353
        %v440 = vunpack.c.l.b16 %v354
        %v441 = vunpack.c.l.b16 %v355
        %v442 = vunpack.c.h.b16 %v355
        %v443 = vunpack.c.l.b16 %v356
        %v444 = vunpack.c.l.b16 %v357
        %v445 = vunpack.c.h.b16 %v357
        %v446 = vunpack.c.l.b16 %v358
        %v447 = vunpack.c.l.b16 %v359
        %v448 = vunpack.c.h.b16 %v359
        %v449 = vunpack.c.l.b16 %v360
        %v450 = vunpack.c.l.b16 %v361
        %v451 = vunpack.c.h.b16 %v361
        %v452 = vunpack.c.l.b16 %v362
        %v453 = vunpack.c.l.b16 %v363
        %v454 = vunpack.c.h.b16 %v363
        %v455 = vunpack.c.l.b16 %v364
        %v456 = vunpack.c.l.b16 %v365
        %v457 = vunpack.c.h.b16 %v365
        %v458 = vunpack.c.l.b16 %v366
        %v459 = vunpack.c.l.b16 %v367
        %v460 = vunpack.c.h.b16 %v367
        %v461 = vunpack.c.l.b16 %v368
        %v462 = vunpack.c.l.b16 %v369
        %v463 = vunpack.c.h.b16 %v369
        %v464 = vunpack.c.l.b16 %v370
        %v465 = vunpack.c.l.b16 %v371
        %v466 = vunpack.c.h.b16 %v371
        %v467 = vunpack.c.l.b16 %v372
        %v468 = vunpack.c.l.b16 %v373
        %v469 = vunpack.c.h.b16 %v373
        %v470 = vunpack.c.l.b16 %v374
        %v471 = vpack.c.b16 %v426, %v423
        %v472 = vpack.c.b16 %v427, %v424
        %v473 = vpack.c.b16 %v428, %v425
        %v474 = vpack.c.b16 %v432, %v429
        %v475 = vpack.c.b16 %v433, %v430
        %v476 = vpack.c.b16 %v434, %v431
        %v477 = vpack.c.b16 %v438, %v435
        %v478 = vpack.c.b16 %v439, %v436
        %v479 = vpack.c.b16 %v440, %v437
        %v480 = vpack.c.b16 %v444, %v441
        %v481 = vpack.c.b16 %v445, %v442
        %v482 = vpack.c.b16 %v446, %v443
        %v483 = vpack.c.b16 %v450, %v447
        %v484 = vpack.c.b16 %v451, %v448
        %v485 = vpack.c.b16 %v452, %v449
        %v486 = vpack.c.b16 %v456, %v453
        %v487 = vpack.c.b16 %v457, %v454
        %v488 = vpack.c.b16 %v458, %v455
        %v489 = vpack.c.b16 %v462, %v459
        %v490 = vpack.c.b16 %v463, %v460
        %v491 = vpack.c.b16 %v464, %v461
        %v492 = vpack.c.b16 %v468, %v465
        %v493 = vpack.c.b16 %v469, %v466
        %v494 = vpack.c.b16 %v470, %v467
        %519 = vmatpush.bf16.msra.mxu0 %v492
        %520 = vmatpush.bf16.msra.mxu0 %v489
        %521 = vmatpush.bf16.msra.mxu0 %v486
        %522 = vmatpush.bf16.msra.mxu0 %v483
        %523 = vmatpush.bf16.msra.mxu0 %v480
        %524 = vmatpush.bf16.msra.mxu0 %v477
        %525 = vmatpush.bf16.msra.mxu0 %v474
        %526 = vmatpush.bf16.msra.mxu0 %v471
        %527 = vmatmul.bf16.gmra.mxu0 %v387
        %v528 = vpop.f32.mrf.mxu0
        %v529 = vadd.f32 0.0, %v528
        %v530 = vpop.f32.mrf.mxu0
        %v531 = vadd.f32 0.0, %v530
        %532 = vmatmul.bf16.gmra.mxu0 %v388
        %v533 = vpop.f32.mrf.mxu0
        %v534 = vadd.f32 0.0, %v533
        %v535 = vpop.f32.mrf.mxu0
        %v536 = vadd.f32 0.0, %v535
        %537 = vdwg.mxu0
        %538 = vmatpush.bf16.msra.mxu0 %v493
        %539 = vmatpush.bf16.msra.mxu0 %v490
        %540 = vmatpush.bf16.msra.mxu0 %v487
        %541 = vmatpush.bf16.msra.mxu0 %v484
        %542 = vmatpush.bf16.msra.mxu0 %v481
        %543 = vmatpush.bf16.msra.mxu0 %v478
        %544 = vmatpush.bf16.msra.mxu0 %v475
        %545 = vmatpush.bf16.msra.mxu0 %v472
        %546 = vmatmul.bf16.gmra.mxu0 %v387
        %v547 = vpop.f32.mrf.mxu0
        %v548 = vadd.f32 0.0, %v547
        %v549 = vpop.f32.mrf.mxu0
        %v550 = vadd.f32 0.0, %v549
        %551 = vmatmul.bf16.gmra.mxu0 %v388
        %v552 = vpop.f32.mrf.mxu0
        %v553 = vadd.f32 0.0, %v552
        %v554 = vpop.f32.mrf.mxu0
        %v555 = vadd.f32 0.0, %v554
        %556 = vdwg.mxu0
        %557 = vmatpush.bf16.msra.mxu0 %v494
        %558 = vmatpush.bf16.msra.mxu0 %v491
        %559 = vmatpush.bf16.msra.mxu0 %v488
        %560 = vmatpush.bf16.msra.mxu0 %v485
        %561 = vmatpush.bf16.msra.mxu0 %v482
        %562 = vmatpush.bf16.msra.mxu0 %v479
        %563 = vmatpush.bf16.msra.mxu0 %v476
        %564 = vmatpush.bf16.msra.mxu0 %v473
        %565 = vmatmul.bf16.gmra.mxu0 %v387
        %v566 = vpop.f32.mrf.mxu0
        %v567 = vadd.f32 0.0, %v566
        %v568 = vpop.f32.mrf.mxu0
        %v569 = vadd.f32 0.0, %v568
        %570 = vmatmul.bf16.gmra.mxu0 %v388
        %v571 = vpop.f32.mrf.mxu0
        %v572 = vadd.f32 0.0, %v571
        %v573 = vpop.f32.mrf.mxu0
        %v574 = vadd.f32 0.0, %v573
        %575 = vdwg.mxu0
        %v576 = vlaneseq
        %v577 = vshrl.u32 %v576, 7
        %v578 = vadd.s32 %v577, 8
        %vm579 = vcmp.ge.s32.totalorder %v577, 8
        %vm580 = vcmp.ge.s32.totalorder %v578, 8
        %v581 = vsel %vm579, 1, 0
        %v582 = vsel %vm580, 1, 0
        %vm583 = vcmp.eq.s32.totalorder %v581, 1
        %vm584 = vcmp.eq.s32.totalorder %v582, 1
        %v585 = vsel %vm583, %v531, 0.0
        %v586 = vsel %vm584, %v529, 0.0
        %v587 = vsel %vm583, %v536, 0.0
        %v588 = vsel %vm584, %v534, 0.0
        %vm589 = vcmp.lt.s32.totalorder %v577, 8
        %vm590 = vcmp.lt.s32.totalorder %v578, 8
        %v591 = vsel %vm589, 1, 0
        %v592 = vsel %vm590, 1, 0
        %vm593 = vcmp.eq.s32.totalorder %v591, 1
        %vm594 = vcmp.eq.s32.totalorder %v592, 1
        %v595 = vsel %vm593, %v569, 0.0
        %v596 = vsel %vm594, %v567, 0.0
        %v597 = vsel %vm593, %v574, 0.0
        %v598 = vsel %vm594, %v572, 0.0
        %v599 = vadd.f32 %v585, %v548
        %v600 = vadd.f32 %v586, %v550
        %v601 = vadd.f32 %v587, %v553
        %v602 = vadd.f32 %v588, %v555
        %v603 = vadd.f32 %v599, %v595
        %v604 = vadd.f32 %v600, %v596
        %v605 = vadd.f32 %v601, %v597
        %v606 = vadd.f32 %v602, %v598
        %v607 = vpack.c.bf16 %v603, %v603
        %v608 = vpack.c.bf16 %v604, %v604
        %v609 = vpack.c.bf16 %v605, %v605
        %v610 = vpack.c.bf16 %v606, %v606
        %611 = vst [vmem:[%s282] sm:$0xf] %v607
        %612 = vst [vmem:[%s282 + $0x4] sm:$0xf] %v608
        %613 = vst [vmem:[%s282 + $0x8] sm:$0xf] %v609
        %614 = vst [vmem:[%s282 + $0xc] sm:$0xf] %v610
        %s615 = smul.u32 %s19, 2
        %v616 = vstv %s615
        %v617 = vadd.s32 %v616, 1
        %vm618 = vcmp.lt.s32.totalorder %v616, 4
        %vm619 = vcmp.lt.s32.totalorder %v617, 4
        %v620 = vsel %vm618, 1, 0
        %v621 = vsel %vm619, 1, 0
        %vm622 = vcmp.eq.s32.totalorder %v620, 1
        %vm623 = vcmp.eq.s32.totalorder %v621, 1
        %v624 = vsel %vm622, %v603, 0.0
        %v625 = vsel %vm622, %v604, 0.0
        %v626 = vsel %vm623, %v605, 0.0
        %v627 = vsel %vm623, %v606, 0.0
        %v628 = vadd.f32 %v624, %v625
        %v629 = vadd.f32 %v628, %v626
        %v630 = vadd.f32 %v629, %v627
        %v631 = vrot.slane %v630, 4
        %v632 = vadd.f32 %v630, %v631
        %v633 = vrot.slane %v632, 2
        %v634 = vadd.f32 %v632, %v633
        %v635 = vrot.slane %v634, 1
        %v636 = vadd.f32 %v634, %v635
        %637 = vst [vmem:[%s287] sm:$0x1] %v636
        %v638 = vmul.f32 %v624, %v624
        %v639 = vmul.f32 %v625, %v625
        %v640 = vmul.f32 %v626, %v626
        %v641 = vmul.f32 %v627, %v627
        %v642 = vadd.f32 %v638, %v639
        %v643 = vadd.f32 %v642, %v640
        %v644 = vadd.f32 %v643, %v641
        %v645 = vrot.slane %v644, 4
        %v646 = vadd.f32 %v644, %v645
        %v647 = vrot.slane %v646, 2
        %v648 = vadd.f32 %v646, %v647
        %v649 = vrot.slane %v648, 1
        %v650 = vadd.f32 %v648, %v649
        %651 = vst [vmem:[%s287 + $0x1] sm:$0x1] %v650
        %s652 = smul.u32 2, %s19
        %p653 = scmp.lt.s32.totalorder %s652, 3
        %s654 = scalar_select %p653, %s652, 3
        %s655 = smul.addr %s654, 2
        %s656 = smul.addr %s655, 4
        %s657 = scalar_lea.vmem %s5, %s656
        %p658 = scmp.lt.s32.totalorder %s19, 1
        %s659 = scalar_select %p658, %s19, 1
        %s660 = smul.addr %s659, 2
        %s661 = scalar_lea.vmem %s6, %s660
        // Predicated region
        $region45: #{tcn_part.8} parent=39 // pred_check
          %p662 = pneg %p147
        $region46: #{tcn_part.8} parent=39 // pred_check_branch
          %664 = sbr.rel (%p662) target = $region48
        $region47: #{tcn_part.8} parent=39 // pred_region
          %s665 = smul.u32 2, %s19
        $region48: #{tcn_part.8} parent=39 // pred_fallthru
          _
        // Predicated region
        $region49: #{tcn_part.8} parent=39 // pred_check
          %p666 = pneg %p173
        $region50: #{tcn_part.8} parent=39 // pred_check_branch
          %668 = sbr.rel (%p666) target = $region52
        $region51: #{tcn_part.8} parent=39 // pred_region
          _
        $region52: #{tcn_part.8} parent=39 // pred_fallthru
          _
      $region40: #{tcn_part.8} parent=5 // pred_fallthru
        _
      %p669 = scmp.le.s32.totalorder 2, %s14
      // Predicated region
      $region53: #{tcn_part.8} parent=5 // pred_check
        %p670 = pneg %p669
      $region54: #{tcn_part.8} parent=5 // pred_check_branch
        %672 = sbr.rel (%p670) target = $region56
      $region55: #{tcn_part.8} parent=5 // pred_region
        %s673 = ssub.s32 %s14, 2
        // Predicated region
        $region57: #{tcn_part.8} parent=55 // pred_check
          %p674 = pneg %p153
        $region58: #{tcn_part.8} parent=55 // pred_check_branch
          %676 = sbr.rel (%p674) target = $region60
        $region59: #{tcn_part.8} parent=55 // pred_region
          %s677 = smul.u32 2, %s20
          %p678 = scmp.lt.s32.totalorder %s677, 3
          %s679 = scalar_select %p678, %s677, 3
          %s680 = smul.addr %s679, 2
          %s681 = smul.addr %s680, 4
          %s682 = scalar_lea.vmem %s5, %s681
        $region60: #{tcn_part.8} parent=55 // pred_fallthru
          _
        // Predicated region
        $region61: #{tcn_part.8} parent=55 // pred_check
          %p683 = pneg %p179
        $region62: #{tcn_part.8} parent=55 // pred_check_branch
          %685 = sbr.rel (%p683) target = $region64
        $region63: #{tcn_part.8} parent=55 // pred_region
          %p686 = scmp.lt.s32.totalorder %s20, 1
          %s687 = scalar_select %p686, %s20, 1
          %s688 = smul.addr %s687, 2
          %s689 = scalar_lea.vmem %s6, %s688
        $region64: #{tcn_part.8} parent=55 // pred_fallthru
          _
      $region56: #{tcn_part.8} parent=5 // pred_fallthru
        _
    $region6: #{tcn_part.8} parent=1 // loop_footer
      %s18 = sadd.s32 1, %s14
    $region7: #{tcn_part.8} parent=1 // loop_footer_branch
      %13 = sbr.rel target = $region3
    $region8: #{tcn_part.8} parent=1 // loop_exit
      _
    %690 = vsyncpa [#allocation3], 1
    %s691 = scalar_lea.sflag [#allocation3], 1
    %692 = vsyncpa %s691, 1

// kernel: tcn_part.9
$region0: #{tcn_part.9}
  #allocation0 [shape = 'u32[]', space=smem, size = 0x4, offset = 0x4, fixed_abs, tag = 'smem constant byte address 0x4 - core index']
  #allocation1 [shape = 'u32[72,128]{1,0:T(1,128)}', space=vmem, size = 0x9000, scoped, tag = 'internal scratch']
  %s0 = inlined_call_operand.vmem [shape: bf16[4,16,128], index: 0, kind: input, shape index: {}]
  %s1 = inlined_call_operand.vmem [shape: f32[2,128], index: 1, kind: input, shape index: {}]
  %s2 = inlined_call_operand.vmem [shape: f32[1,128], index: 2, kind: input, shape index: {}]
  %s3 = inlined_call_operand.vmem [shape: f32[1,128], index: 3, kind: input, shape index: {}]
  %s4 = inlined_call_operand.hbm [shape: f32[4,16,128], index: 4, kind: output, shape index: {}]
  %s5 = sld [smem:[#allocation0]]
  $region49: #{tcn_part.9} parent=0
    _
  %s7 = ssub.s32 1, %s5
  %s8 = scalar_select 0, %s7, %s5
  $region1: #{tcn_part.9} parent=0
    #allocation2 [shape = 'u8[32768]{0}', space=vmem, size = 0x8000, scoped, tag = 'output window, operand 0']
    #allocation3 [shape = 's32[2]{0}', space=sflag, size = 0x8, scoped, tag = 'scoped memory for tcn_part.9']
    %9 = vsyncpa [#allocation3], 0
    %s10 = scalar_lea.sflag [#allocation3], 1
    %11 = vsyncpa %s10, 0
    loop: start=0, step=1, limit=4
    $region2: #{tcn_part.9} parent=1 // loop_pre_header
      _
    $region3: #{tcn_part.9} parent=1 // loop_header
      %s13 = sphi 0, %s17
      %p14 = scmp.ge.s32.totalorder %s13, 4
      %s23 = sphi 0, %s25
      %s26 = sphi 0, %s23
      %s27 = sphi 0, %s26
      %s43 = sphi 0, %s27
      %s47 = sphi 0, %s47
      %s49 = sphi 0, %s47
      %s50 = sphi 0, %s49
      %s64 = sphi 0, %s50
      %s68 = sphi 0, %s68
      %s70 = sphi 0, %s68
      %s71 = sphi 0, %s70
      %s85 = sphi 0, %s71
      %s89 = sphi 0, %s89
      %s91 = sphi 0, %s89
      %s92 = sphi 0, %s91
      %s106 = sphi 0, %s92
      %s112 = sphi 0, %s114
      %s115 = sphi 0, %s112
      %s116 = sphi 0, %s115
      %s132 = sphi 0, %s116
    $region4: #{tcn_part.9} parent=1 // loop_header_branch
      %16 = sbr.rel (%p14) target = $region8
    $region5: #{tcn_part.9} parent=1 // loop_body
      %s18 = ssub.s32 %s13, 1
      %s19 = ssub.s32 %s13, 2
      %s20 = sadd.s32 %s13, 1
      %s21 = ssub.s32 %s13, %s20
      %p22 = scmp.eq.s32.totalorder %s21, 0
      %s24 = sadd.s32 %s23, 1
      %s25 = scalar_select %p22, %s23, %s24
      %p28 = pneg %p22
      %p29 = scmp.eq.s32.totalorder %s13, 1
      %p30 = por %p28, %p29
      %p31 = scmp.ne.s32.totalorder %s23, %s26
      %p32 = scmp.eq.s32.totalorder %s13, 0
      %p33 = por %p31, %p32
      %p34 = scmp.ne.s32.totalorder %s23, %s26
      %p35 = scmp.eq.s32.totalorder %s18, 1
      %p36 = por %p34, %p35
      %p37 = scmp.ne.s32.totalorder %s26, %s27
      %p38 = scmp.eq.s32.totalorder %s18, 0
      %p39 = por %p37, %p38
      %p40 = scmp.ne.s32.totalorder %s26, %s27
      %p41 = scmp.eq.s32.totalorder %s19, 1
      %p42 = por %p40, %p41
      %p44 = scmp.ne.s32.totalorder %s27, %s43
      %p45 = scmp.eq.s32.totalorder %s19, 0
      %p46 = por %p44, %p45
      %s48 = sadd.s32 %s47, 1
      %p51 = scmp.eq.s32.totalorder %s13, 1
      %p52 = scmp.ne.s32.totalorder %s47, %s49
      %p53 = scmp.eq.s32.totalorder %s13, 0
      %p54 = por %p52, %p53
      %p55 = scmp.ne.s32.totalorder %s47, %s49
      %p56 = scmp.eq.s32.totalorder %s18, 1
      %p57 = por %p55, %p56
      %p58 = scmp.ne.s32.totalorder %s49, %s50
      %p59 = scmp.eq.s32.totalorder %s18, 0
      %p60 = por %p58, %p59
      %p61 = scmp.ne.s32.totalorder %s49, %s50
      %p62 = scmp.eq.s32.totalorder %s19, 1
      %p63 = por %p61, %p62
      %p65 = scmp.ne.s32.totalorder %s50, %s64
      %p66 = scmp.eq.s32.totalorder %s19, 0
      %p67 = por %p65, %p66
      %s69 = sadd.s32 %s68, 1
      %p72 = scmp.eq.s32.totalorder %s13, 1
      %p73 = scmp.ne.s32.totalorder %s68, %s70
      %p74 = scmp.eq.s32.totalorder %s13, 0
      %p75 = por %p73, %p74
      %p76 = scmp.ne.s32.totalorder %s68, %s70
      %p77 = scmp.eq.s32.totalorder %s18, 1
      %p78 = por %p76, %p77
      %p79 = scmp.ne.s32.totalorder %s70, %s71
      %p80 = scmp.eq.s32.totalorder %s18, 0
      %p81 = por %p79, %p80
      %p82 = scmp.ne.s32.totalorder %s70, %s71
      %p83 = scmp.eq.s32.totalorder %s19, 1
      %p84 = por %p82, %p83
      %p86 = scmp.ne.s32.totalorder %s71, %s85
      %p87 = scmp.eq.s32.totalorder %s19, 0
      %p88 = por %p86, %p87
      %s90 = sadd.s32 %s89, 1
      %p93 = scmp.eq.s32.totalorder %s13, 1
      %p94 = scmp.ne.s32.totalorder %s89, %s91
      %p95 = scmp.eq.s32.totalorder %s13, 0
      %p96 = por %p94, %p95
      %p97 = scmp.ne.s32.totalorder %s89, %s91
      %p98 = scmp.eq.s32.totalorder %s18, 1
      %p99 = por %p97, %p98
      %p100 = scmp.ne.s32.totalorder %s91, %s92
      %p101 = scmp.eq.s32.totalorder %s18, 0
      %p102 = por %p100, %p101
      %p103 = scmp.ne.s32.totalorder %s91, %s92
      %p104 = scmp.eq.s32.totalorder %s19, 1
      %p105 = por %p103, %p104
      %p107 = scmp.ne.s32.totalorder %s92, %s106
      %p108 = scmp.eq.s32.totalorder %s19, 0
      %p109 = por %p107, %p108
      %s110 = ssub.s32 %s13, %s20
      %p111 = scmp.eq.s32.totalorder %s110, 0
      %s113 = sadd.s32 %s112, 1
      %s114 = scalar_select %p111, %s112, %s113
      %p117 = pneg %p111
      %p118 = scmp.eq.s32.totalorder %s13, 1
      %p119 = por %p117, %p118
      %p120 = scmp.ne.s32.totalorder %s112, %s115
      %p121 = scmp.eq.s32.totalorder %s13, 0
      %p122 = por %p120, %p121
      %p123 = scmp.ne.s32.totalorder %s112, %s115
      %p124 = scmp.eq.s32.totalorder %s18, 1
      %p125 = por %p123, %p124
      %p126 = scmp.ne.s32.totalorder %s115, %s116
      %p127 = scmp.eq.s32.totalorder %s18, 0
      %p128 = por %p126, %p127
      %p129 = scmp.ne.s32.totalorder %s115, %s116
      %p130 = scmp.eq.s32.totalorder %s19, 1
      %p131 = por %p129, %p130
      %p133 = scmp.ne.s32.totalorder %s116, %s132
      %p134 = scmp.eq.s32.totalorder %s19, 0
      %p135 = por %p133, %p134
      %p136 = scmp.le.s32.totalorder 1, %s13
      %p137 = scmp.lt.s32.totalorder %s13, 3
      %p138 = pnand %p136, %p137
      %p139 = pneg %p138
      // Predicated region
      $region9: #{tcn_part.9} parent=5 // pred_check
        _
      $region10: #{tcn_part.9} parent=5 // pred_check_branch
        %141 = sbr.rel (%p138) target = $region12
      $region11: #{tcn_part.9} parent=5 // pred_region
        %s142 = ssub.s32 %s13, 1
        // Predicated region
        $region13: #{tcn_part.9} parent=11 // pred_check
          %p143 = pneg %p60
        $region14: #{tcn_part.9} parent=11 // pred_check_branch
          %145 = sbr.rel (%p143) target = $region16
        $region15: #{tcn_part.9} parent=11 // pred_region
          _
        $region16: #{tcn_part.9} parent=11 // pred_fallthru
          _
        // Predicated region
        $region17: #{tcn_part.9} parent=11 // pred_check
          %p146 = pneg %p81
        $region18: #{tcn_part.9} parent=11 // pred_check_branch
          %148 = sbr.rel (%p146) target = $region20
        $region19: #{tcn_part.9} parent=11 // pred_region
          _
        $region20: #{tcn_part.9} parent=11 // pred_fallthru
          _
        // Predicated region
        $region21: #{tcn_part.9} parent=11 // pred_check
          %p149 = pneg %p102
        $region22: #{tcn_part.9} parent=11 // pred_check_branch
          %151 = sbr.rel (%p149) target = $region24
        $region23: #{tcn_part.9} parent=11 // pred_region
          _
        $region24: #{tcn_part.9} parent=11 // pred_fallthru
          _
      $region12: #{tcn_part.9} parent=5 // pred_fallthru
        _
      %p152 = scmp.lt.s32.totalorder %s13, 2
      // Predicated region
      $region25: #{tcn_part.9} parent=5 // pred_check
        %p153 = pneg %p152
      $region26: #{tcn_part.9} parent=5 // pred_check_branch
        %155 = sbr.rel (%p153) target = $region28
      $region27: #{tcn_part.9} parent=5 // pred_region
        // Predicated region
        $region29: #{tcn_part.9} parent=27 // pred_check
          %p156 = pneg %p33
        $region30: #{tcn_part.9} parent=27 // pred_check_branch
          %158 = sbr.rel (%p156) target = $region32
        $region31: #{tcn_part.9} parent=27 // pred_region
          %s159 = smul.u32 2, %s13
          %p160 = scmp.lt.s32.totalorder %s159, 3
          %s161 = scalar_select %p160, %s159, 3
          %s162 = smul.addr %s161, 2
          %s163 = smul.addr %s162, 4
          %s164 = scalar_lea.vmem %s0, %s163
          %s165 = smul.u32 2, %s13
        $region32: #{tcn_part.9} parent=27 // pred_fallthru
          _
      $region28: #{tcn_part.9} parent=5 // pred_fallthru
        _
      %p166 = scmp.le.s32.totalorder 1, %s13
      %p167 = scmp.lt.s32.totalorder %s13, 3
      %p168 = pnand %p166, %p167
      %p169 = pneg %p168
      // Predicated region
      $region33: #{tcn_part.9} parent=5 // pred_check
        _
      $region34: #{tcn_part.9} parent=5 // pred_check_branch
        %171 = sbr.rel (%p168) target = $region36
      $region35: #{tcn_part.9} parent=5 // pred_region
        %s172 = ssub.s32 %s13, 1
        %s173 = smul.u32 2, %s18
        %p174 = scmp.lt.s32.totalorder %s173, 3
        %s175 = scalar_select %p174, %s173, 3
        %s176 = smul.addr %s175, 2
        %s177 = smul.addr %s176, 4
        %s178 = scalar_lea.vmem %s0, %s177
        %p179 = pneg %p39
        %p180 = pneg %p36
        %p181 = pneg %p60
        %p182 = pneg %p57
        %p183 = pneg %p81
        %p184 = pneg %p78
        %p185 = pneg %p102
        %p186 = pneg %p99
        %p187 = pneg %p128
        %p188 = pneg %p125
        %s189 = sand.u32 %s115, 1
        %s190 = scalar_lea.sflag [#allocation3], %s189
        %s191 = sand.u32 %s115, 1
        %s192 = smul.addr %s191, 32
        %s193 = scalar_lea.vmem [#allocation2], %s192
        %s194 = smul.u32 2, %s18
        %p195 = scmp.lt.s32.totalorder %s194, 3
        %s196 = scalar_select %p195, %s194, 3
        %s197 = smul.addr %s196, 2
        %s198 = smul.addr %s197, 4
        %s199 = scalar_lea.vmem %s0, %s198
        %s200 = smul.u32 2, %s18
        %s201 = smul.u32 2, %s18
        %v202 = vld [vmem:[%s1] sm:$0x3]
        %v203 = vmul.f32 %v202, 0.015625
        %v204 = vmul.f32 %v203, %v203
        %v206 = vrot.slane %v204, 7
        %v208 = vsub.f32 %v203, %v206
        %v209 = vmax.f32 %v208, 0.0
        %v210 = vld [vmem:[%s2] sm:$0x1]
        %v211 = vadd.f32 %v209, 1e-05
        %v212 = vrsqrt.pop %v211
        %v213 = vmul.f32 %v212, %v211
        %v214 = vmul.f32 %v213, %v212
        %v215 = vmul.f32 0.5, %v214
        %v216 = vsub.f32 1.5, %v215
        %v217 = vmul.f32 %v212, %v216
        %vm218 = vweird.f32 %v211
        %vm219 = vweird.f32 %v212
        %vm220 = vmor %vm218, %vm219
        %v221 = vsel %vm220, %v212, %v217
        %223 = vst [vmem:[#allocation1] sm:$0xff] %v221
        %s224 = scalar_lea.vmem [#allocation1], 1
        %v225 = vld [vmem:[%s224] ss:$9 sm:$0xff]
        %v227 = vmul.f32 %v210, %v225
        %v228 = vld [vmem:[%s3] sm:$0x1]
        %v229 = vmul.f32 %v203, %v227
        %v230 = vsub.f32 %v228, %v229
        %v231 = vld [vmem:[%s199] sm:$0xf]
        %v232 = vld [vmem:[%s199 + $0x4] sm:$0xf]
        %v233 = vld [vmem:[%s199 + $0x8] sm:$0xf]
        %v234 = vld [vmem:[%s199 + $0xc] sm:$0xf]
        %v235 = vunpack.c.l.bf16 %v231
        %v236 = vunpack.c.l.bf16 %v232
        %v237 = vunpack.c.l.bf16 %v233
        %v238 = vunpack.c.l.bf16 %v234
        %v240 = vperm.slane %v227, 0
        %v242 = vmul.f32 %v235, %v240
        %v243 = vmul.f32 %v236, %v240
        %v244 = vmul.f32 %v237, %v240
        %v245 = vmul.f32 %v238, %v240
        %v247 = vperm.slane %v230, 0
        %v249 = vadd.f32 %v242, %v247
        %v250 = vadd.f32 %v243, %v247
        %v251 = vadd.f32 %v244, %v247
        %v252 = vadd.f32 %v245, %v247
        %v253 = vmax.f32 %v249, 0.0
        %v254 = vmax.f32 %v250, 0.0
        %v255 = vmax.f32 %v251, 0.0
        %v256 = vmax.f32 %v252, 0.0
        %257 = vst [vmem:[%s193] sm:$0xff] %v253
        %258 = vst [vmem:[%s193 + $0x8] sm:$0xff] %v254
        %259 = vst [vmem:[%s193 + $0x10] sm:$0xff] %v255
        %260 = vst [vmem:[%s193 + $0x18] sm:$0xff] %v256
        %s261 = sand.u32 %s115, 1
        %s262 = scalar_lea.sflag [#allocation3], %s261
        %s263 = sand.u32 %s115, 1
        %s264 = smul.addr %s263, 32
        %s265 = scalar_lea.vmem [#allocation2], %s264
        // Predicated region
        $region37: #{tcn_part.9} parent=35 // pred_check
          %p266 = pneg %p125
        $region38: #{tcn_part.9} parent=35 // pred_check_branch
          %268 = sbr.rel (%p266) target = $region40
        $region39: #{tcn_part.9} parent=35 // pred_region
          %s269 = smul.u32 2, %s18
          %271 = vsyncadd %s262, 0
          %s272 = smul.addr %s269, 2
          %s273 = smul.addr %s272, 8
          %s274 = scalar_lea.hbm %s4, %s273
          %s275 = sshll.u32 %s265, 4
          %s276 = int_to_ptr.vmem [resolvable:$true] %s275
          %s277 = sshll.u32 %s274, 4
          %s278 = int_to_ptr.hbm [resolvable:$true] %s277
          %283 = dma.vmem_to_hbm [thread:$0]  %s276, 512, %s278, %s262, 128, 128, 8
        $region40: #{tcn_part.9} parent=35 // pred_fallthru
          _
      $region36: #{tcn_part.9} parent=5 // pred_fallthru
        _
      %p284 = scmp.le.s32.totalorder 2, %s13
      // Predicated region
      $region41: #{tcn_part.9} parent=5 // pred_check
        %p285 = pneg %p284
      $region42: #{tcn_part.9} parent=5 // pred_check_branch
        %287 = sbr.rel (%p285) target = $region44
      $region43: #{tcn_part.9} parent=5 // pred_region
        %s288 = ssub.s32 %s13, 2
        // Predicated region
        $region45: #{tcn_part.9} parent=43 // pred_check
          %p289 = pneg %p131
        $region46: #{tcn_part.9} parent=43 // pred_check_branch
          %291 = sbr.rel (%p289) target = $region48
        $region47: #{tcn_part.9} parent=43 // pred_region
          %s292 = sand.u32 %s116, 1
          %s293 = scalar_lea.sflag [#allocation3], %s292
          %s294 = sand.u32 %s116, 1
          %s295 = smul.addr %s294, 32
          %s296 = scalar_lea.vmem [#allocation2], %s295
          %298 = dma.done %s293, 512
        $region48: #{tcn_part.9} parent=43 // pred_fallthru
          _
      $region44: #{tcn_part.9} parent=5 // pred_fallthru
        _
    $region6: #{tcn_part.9} parent=1 // loop_footer
      %s17 = sadd.s32 1, %s13
    $region7: #{tcn_part.9} parent=1 // loop_footer_branch
      %12 = sbr.rel target = $region3
    $region8: #{tcn_part.9} parent=1 // loop_exit
      _
    %299 = vsyncpa [#allocation3], 1
    %s300 = scalar_lea.sflag [#allocation3], 1
    %301 = vsyncpa %s300, 1

</llo_original>
